<compile_context>
chip_gen: v7x
topology: tpu7x:2x2x1
jax: 0.10.0
libtpu: 0.0.40
codegen_flags: <defaults>
</compile_context>

<pallas_src>
import numpy as np
import jax
import jax.numpy as jnp
from jax.experimental import pallas as pl
from jax.experimental.pallas import tpu as pltpu

EPS = 1e-5          # nn.BatchNorm1d default
LEAKY_SLOPE = 0.01  # nn.LeakyReLU default
PACK_WIDTH = 128    # lane width of the packed constant buffer (one lane tile)


# ---------------------------------------------------------------- static plan

def _conv_out_len(L_in, K, stride, pad):
    return (L_in + 2 * pad - K) // stride + 1


def _selection_matrix(N, L_in, L_out, K, stride, pad):
    """Stacked 0/1 gather matrices, tap k in rows [k*N*L_in, (k+1)*N*L_in).
    Output column n*L_out+l of tap k selects input position stride*l + k - pad
    of batch element n (all-zero column where that index is in the padding)."""
    S = np.zeros((K * N * L_in, N * L_out), np.float32)
    for k in range(K):
        for n in range(N):
            for l in range(L_out):
                m = stride * l + k - pad
                if 0 <= m < L_in:
                    S[k * N * L_in + n * L_in + m, n * L_out + l] = 1.0
    return S


class _Packer:
    """Packs many small 2-D f32 tensors into one (R, 128) buffer.  Each tensor
    starts on a multiple-of-8 row so static in-kernel slices are tile-aligned."""

    def __init__(self, width=PACK_WIDTH):
        self.width = width
        self.rows = 0
        self._chunks = []           # (row_offset, np.ndarray)

    def add(self, arr):
        a = np.asarray(arr, np.float32)
        assert a.ndim == 2 and a.shape[1] <= self.width, a.shape
        off = self.rows
        self._chunks.append((off, a))
        self.rows += -(-a.shape[0] // 8) * 8     # round rows up to sublane (8)
        return off

    def build(self):
        buf = np.zeros((max(self.rows, 8), self.width), np.float32)
        for off, a in self._chunks:
            buf[off:off + a.shape[0], :a.shape[1]] = a
        return jnp.asarray(buf)


def build_model(key, channels, N, L):
    """Fresh-module random weights, BN gamma=1/beta=0, selection tables.
    Returns (packed_buffer, plan, L_final); `plan` holds only Python ints."""
    pk = _Packer()
    sel_cache = {}

    def sel_entry(K, stride, pad, L_in):
        ck = (K, stride, pad, L_in)
        if ck not in sel_cache:
            L_out = _conv_out_len(L_in, K, stride, pad)
            off = pk.add(_selection_matrix(N, L_in, L_out, K, stride, pad))
            sel_cache[ck] = dict(off=off, M_in=N * L_in, M_out=N * L_out,
                                 L_out=L_out)
        return sel_cache[ck]

    keys = iter(jax.random.split(key, 32))

    def conv_entry(K, c_in, c_out, sel):
        # W_cat[k*c_out + co, ci]  <->  nn.Conv1d weight[co, ci, k]
        w = (jax.random.normal(next(keys), (K * c_out, c_in), jnp.float32)
             / np.sqrt(float(c_in * K)))
        return dict(w_off=pk.add(np.asarray(w)), K=K, C_in=c_in, C_out=c_out,
                    sel=sel)

    def bn_entry(c):
        return dict(g_off=pk.add(np.ones((c, 1), np.float32)),
                    b_off=pk.add(np.zeros((c, 1), np.float32)), C=c)

    plan = {}
    s = sel_entry(3, 1, 1, L)                               # stem conv3 s1 p1
    plan["stem"] = conv_entry(3, 1, channels[0], s)
    plan["stem_bn"] = bn_entry(channels[0])
    L_cur = s["L_out"]

    in_planes = channels[0]
    plan["levels"] = []
    for i, planes in enumerate(channels):
        level_stride = 1 if i == 0 else 2
        blocks = []
        for b in range(2):                                  # num_blocks = 2
            stride = level_stride if b == 0 else 1
            ip = in_planes if b == 0 else planes
            s1 = sel_entry(3, stride, 1, L_cur)
            blk = dict(conv1=conv_entry(3, ip, planes, s1), bn1=bn_entry(planes))
            L1 = s1["L_out"]
            s2 = sel_entry(3, 1, 1, L1)
            blk["conv2"] = conv_entry(3, planes, planes, s2)
            blk["bn2"] = bn_entry(planes)
            if stride != 1 or ip != planes:                 # projection shortcut
                ssc = sel_entry(1, stride, 0, L_cur)
                blk["conv_sc"] = conv_entry(1, ip, planes, ssc)
                blk["bn_sc"] = bn_entry(planes)
            blocks.append(blk)
            L_cur = L1
        plan["levels"].append(blocks)
        in_planes = planes

    sh = sel_entry(1, 1, 1, L_cur)                          # head conv1x1 pad=1
    plan["head"] = conv_entry(1, channels[-1], 1, sh)       # bias=False in spec
    return pk.build(), plan, sh["L_out"]


# ----------------------------------------- forward math (shared by the Pallas
#                                            kernel and the XLA reference)

def _leaky(x):
    return jnp.where(x >= 0, x, LEAKY_SLOPE * x)


def _relu(x):
    return jnp.maximum(x, 0.0)


def _conv(get, h, cv):
    """h: (C_in, M_in) channel-major.  y = sum_k (W_cat @ h)[k-block] @ S_k."""
    K, C_out, C_in = cv["K"], cv["C_out"], cv["C_in"]
    sel = cv["sel"]
    M_in, M_out = sel["M_in"], sel["M_out"]
    assert h.shape == (C_in, M_in)
    w = get(cv["w_off"], K * C_out, C_in)                       # (K*C_out, C_in)
    if C_in == 1:
        z = w * h                              # stem tap: VPU broadcast product
    else:
        z = jnp.dot(w.astype(jnp.bfloat16), h.astype(jnp.bfloat16),
                    preferred_element_type=jnp.float32)         # one MXU matmul
    acc = None
    for k in range(K):                         # K independent selection matmuls
        zk = (z if K == 1 else z[k * C_out:(k + 1) * C_out, :]).astype(jnp.bfloat16)
        sk = get(sel["off"] + k * M_in, M_in, M_out).astype(jnp.bfloat16)
        t = jnp.dot(zk, sk, preferred_element_type=jnp.float32)
        acc = t if acc is None else acc + t
    return acc


def _bn(get, y, bn):
    """BatchNorm1d with train-mode batch stats (biased var), folded scale/shift.
    # TODO(synk): eval-mode (running-stats) BatchNorm is not implemented."""
    g = get(bn["g_off"], bn["C"], 1)
    b = get(bn["b_off"], bn["C"], 1)
    m = jnp.mean(y, axis=1, keepdims=True)
    d = y - m
    v = jnp.mean(d * d, axis=1, keepdims=True)
    return d * (g * jax.lax.rsqrt(v + EPS)) + b


def _forward(get, x2, plan):
    """x2: (1, N*L) channel-major input.  Returns (1, N*L_final)."""
    # preprocess_level: conv3(s=1,p=1) -> BN -> LeakyReLU
    h = _leaky(_bn(get, _conv(get, x2, plan["stem"]), plan["stem_bn"]))
    # resolution levels: 2 BasicBlocks each
    for level in plan["levels"]:
        for blk in level:
            a1 = _relu(_bn(get, _conv(get, h, blk["conv1"]), blk["bn1"]))
            o2 = _bn(get, _conv(get, a1, blk["conv2"]), blk["bn2"])
            if "conv_sc" in blk:               # projection shortcut conv1x1+BN
                sc = _bn(get, _conv(get, h, blk["conv_sc"]), blk["bn_sc"])
            else:                              # identity shortcut
                sc = h
            h = _relu(o2 + sc)
    # output_level: conv1x1 (padding=1, bias=False) -> LeakyReLU
    return _leaky(_conv(get, h, plan["head"]))


# --------------------------------------------------------- fused pallas kernel

def resnet_1d_forward(x_ncl, packed, plan, L_final):
    """x_ncl: (N, 1, L) -> (N, 1, L_final).  One fused pallas_call, 2 DMAs in."""
    N, c_in, L = x_ncl.shape
    assert c_in == 1
    x2 = x_ncl.astype(jnp.float32).reshape(1, N * L)     # channel-major (1, N*L)
    M_out = N * L_final

    def kernel(packed_ref, x_ref, o_ref):
        # Static slices into the single packed VMEM buffer (zero-cost views).
        get = lambda off, r, c: packed_ref[off:off + r, 0:c]
        o_ref[...] = _forward(get, x_ref[...], plan)

    out2 = pl.pallas_call(
        kernel,
        grid=(1,),
        out_shape=jax.ShapeDtypeStruct((1, M_out), jnp.float32),
        in_specs=[pl.BlockSpec(packed.shape, lambda i: (0, 0)),
                  pl.BlockSpec((1, N * L), lambda i: (0, 0))],
        out_specs=pl.BlockSpec((1, M_out), lambda i: (0, 0)),
        compiler_params=pltpu.CompilerParams(
            dimension_semantics=("arbitrary",)),
    )(packed, x2)
    return out2.reshape(N, 1, L_final)


# ------------------------------------------------------------------------ main

if __name__ == "__main__":
    channels = [8, 16, 16]        # 3 resolution levels, 2 BasicBlocks each
    N, L = 2, 16
    kx, kp = jax.random.split(jax.random.PRNGKey(0))
    x = jax.random.normal(kx, (N, 1, L), jnp.float32)
    packed, plan, L_final = build_model(kp, channels, N, L)

    fwd = jax.jit(lambda p, xx: resnet_1d_forward(xx, p, plan, L_final))
    out = fwd(packed, x)
    jax.block_until_ready(out)

    # Cross-check the Pallas lowering against identical math traced by XLA.
    x2 = x.astype(jnp.float32).reshape(1, N * L)
    ref_fn = jax.jit(
        lambda p, xx: _forward(lambda o, r, c: p[o:o + r, 0:c], xx, plan))
    ref = ref_fn(packed, x2).reshape(N, 1, L_final)

    # L: 16 -stem-> 16 -layer0-> 16 -layer1-> 8 -layer2-> 4 -conv1x1(pad=1)-> 6
    assert out.shape == (N, 1, 6), out.shape
    assert bool(jnp.all(jnp.isfinite(out)))
    err = float(jnp.max(jnp.abs(out - ref)))
    assert err < 1e-3, err
    print("KERNEL_OK")
</pallas_src>

<mosaic_0001>
module attributes {stable_mosaic.version = 11 : i64} {
  func.func @kernel(%arg0: i32, %arg1: memref<1312x128xf32, #tpu.memory_space<vmem>>, %arg2: memref<1x32xf32, #tpu.memory_space<vmem>>, %arg3: memref<1x12xf32, #tpu.memory_space<vmem>>) attributes {dimension_semantics = [#tpu.dimension_semantics<arbitrary>], iteration_bounds = array<i64: 1>, scalar_prefetch = 0 : i64, scratch_operands = 0 : i64, tpu.core_type = #tpu.core_type<tc>, window_params = [{pipeline_mode = #tpu.pipeline_mode<synchronous>, transform_indices = @transform_0, window_bounds = array<i64: 1312, 128>}, {pipeline_mode = #tpu.pipeline_mode<synchronous>, transform_indices = @transform_1, window_bounds = array<i64: 1, 32>}, {pipeline_mode = #tpu.pipeline_mode<synchronous>, transform_indices = @transform_2, window_bounds = array<i64: 1, 12>}]} {
    %c0 = arith.constant 0 : index
    %c0_0 = arith.constant 0 : index
    %0 = vector.load %arg2[%c0, %c0_0] : memref<1x32xf32, #tpu.memory_space<vmem>>, vector<1x32xf32>
    %c96 = arith.constant 96 : index
    %c0_1 = arith.constant 0 : index
    %1 = vector.load %arg1[%c96, %c0_1] : memref<1312x128xf32, #tpu.memory_space<vmem>>, vector<24x1xf32>
    %2 = vector.broadcast %1 : vector<24x1xf32> to vector<24x32xf32>
    %3 = vector.broadcast %0 : vector<1x32xf32> to vector<24x32xf32>
    %4 = arith.mulf %2, %3 : vector<24x32xf32>
    %5 = vector.extract_strided_slice %4 {offsets = [0, 0], sizes = [8, 32], strides = [1, 1]} : vector<24x32xf32> to vector<8x32xf32>
    %6 = arith.truncf %5 : vector<8x32xf32> to vector<8x32xbf16>
    %c0_2 = arith.constant 0 : index
    %c0_3 = arith.constant 0 : index
    %7 = vector.load %arg1[%c0_2, %c0_3] : memref<1312x128xf32, #tpu.memory_space<vmem>>, vector<32x32xf32>
    %8 = arith.truncf %7 : vector<32x32xf32> to vector<32x32xbf16>
    %cst = arith.constant dense<0.000000e+00> : vector<8x32xf32>
    %9 = tpu.matmul %6, %8, %cst {dimension_numbers = #tpu.dot_dimension_numbers<[1], [0], [0], [1], [0, 0, 1, 1], [], []>} : vector<8x32xbf16>, vector<32x32xbf16>, vector<8x32xf32> -> vector<8x32xf32>
    %10 = vector.extract_strided_slice %4 {offsets = [8, 0], sizes = [8, 32], strides = [1, 1]} : vector<24x32xf32> to vector<8x32xf32>
    %11 = arith.truncf %10 : vector<8x32xf32> to vector<8x32xbf16>
    %c32 = arith.constant 32 : index
    %c0_4 = arith.constant 0 : index
    %12 = vector.load %arg1[%c32, %c0_4] : memref<1312x128xf32, #tpu.memory_space<vmem>>, vector<32x32xf32>
    %13 = arith.truncf %12 : vector<32x32xf32> to vector<32x32xbf16>
    %cst_5 = arith.constant dense<0.000000e+00> : vector<8x32xf32>
    %14 = tpu.matmul %11, %13, %cst_5 {dimension_numbers = #tpu.dot_dimension_numbers<[1], [0], [0], [1], [0, 0, 1, 1], [], []>} : vector<8x32xbf16>, vector<32x32xbf16>, vector<8x32xf32> -> vector<8x32xf32>
    %15 = arith.addf %9, %14 : vector<8x32xf32>
    %16 = vector.extract_strided_slice %4 {offsets = [16, 0], sizes = [8, 32], strides = [1, 1]} : vector<24x32xf32> to vector<8x32xf32>
    %17 = arith.truncf %16 : vector<8x32xf32> to vector<8x32xbf16>
    %c64 = arith.constant 64 : index
    %c0_6 = arith.constant 0 : index
    %18 = vector.load %arg1[%c64, %c0_6] : memref<1312x128xf32, #tpu.memory_space<vmem>>, vector<32x32xf32>
    %19 = arith.truncf %18 : vector<32x32xf32> to vector<32x32xbf16>
    %cst_7 = arith.constant dense<0.000000e+00> : vector<8x32xf32>
    %20 = tpu.matmul %17, %19, %cst_7 {dimension_numbers = #tpu.dot_dimension_numbers<[1], [0], [0], [1], [0, 0, 1, 1], [], []>} : vector<8x32xbf16>, vector<32x32xbf16>, vector<8x32xf32> -> vector<8x32xf32>
    %21 = arith.addf %15, %20 : vector<8x32xf32>
    %c120 = arith.constant 120 : index
    %c0_8 = arith.constant 0 : index
    %22 = vector.load %arg1[%c120, %c0_8] : memref<1312x128xf32, #tpu.memory_space<vmem>>, vector<8x1xf32>
    %c128 = arith.constant 128 : index
    %c0_9 = arith.constant 0 : index
    %23 = vector.load %arg1[%c128, %c0_9] : memref<1312x128xf32, #tpu.memory_space<vmem>>, vector<8x1xf32>
    %cst_10 = arith.constant dense<0.000000e+00> : vector<8xf32>
    %24 = vector.multi_reduction <add>, %21, %cst_10 [1] : vector<8x32xf32> to vector<8xf32>
    %25 = vector.shape_cast %24 : vector<8xf32> to vector<8x1xf32>
    %cst_11 = arith.constant 3.200000e+01 : f32
    %26 = vector.broadcast %cst_11 : f32 to vector<8x1xf32>
    %27 = arith.divf %25, %26 : vector<8x1xf32>
    %28 = vector.broadcast %27 : vector<8x1xf32> to vector<8x32xf32>
    %29 = arith.subf %21, %28 : vector<8x32xf32>
    %30 = arith.mulf %29, %29 : vector<8x32xf32>
    %cst_12 = arith.constant dense<0.000000e+00> : vector<8xf32>
    %31 = vector.multi_reduction <add>, %30, %cst_12 [1] : vector<8x32xf32> to vector<8xf32>
    %32 = vector.shape_cast %31 : vector<8xf32> to vector<8x1xf32>
    %cst_13 = arith.constant 3.200000e+01 : f32
    %33 = vector.broadcast %cst_13 : f32 to vector<8x1xf32>
    %34 = arith.divf %32, %33 : vector<8x1xf32>
    %cst_14 = arith.constant 9.99999974E-6 : f32
    %35 = vector.broadcast %cst_14 : f32 to vector<8x1xf32>
    %36 = arith.addf %34, %35 : vector<8x1xf32>
    %37 = math.rsqrt %36 : vector<8x1xf32>
    %38 = arith.mulf %22, %37 : vector<8x1xf32>
    %39 = vector.broadcast %38 : vector<8x1xf32> to vector<8x32xf32>
    %40 = arith.mulf %29, %39 : vector<8x32xf32>
    %41 = vector.broadcast %23 : vector<8x1xf32> to vector<8x32xf32>
    %42 = arith.addf %40, %41 : vector<8x32xf32>
    %cst_15 = arith.constant 0.000000e+00 : f32
    %43 = vector.broadcast %cst_15 : f32 to vector<8x32xf32>
    %44 = arith.cmpf oge, %42, %43 : vector<8x32xf32>
    %cst_16 = arith.constant 0.00999999977 : f32
    %45 = vector.broadcast %cst_16 : f32 to vector<8x32xf32>
    %46 = arith.mulf %45, %42 : vector<8x32xf32>
    %47 = arith.select %44, %42, %46 : vector<8x32xi1>, vector<8x32xf32>
    %c136 = arith.constant 136 : index
    %c0_17 = arith.constant 0 : index
    %48 = vector.load %arg1[%c136, %c0_17] : memref<1312x128xf32, #tpu.memory_space<vmem>>, vector<24x8xf32>
    %49 = arith.truncf %48 : vector<24x8xf32> to vector<24x8xbf16>
    %50 = arith.truncf %47 : vector<8x32xf32> to vector<8x32xbf16>
    %cst_18 = arith.constant dense<0.000000e+00> : vector<24x32xf32>
    %51 = tpu.matmul %49, %50, %cst_18 {dimension_numbers = #tpu.dot_dimension_numbers<[1], [0], [0], [1], [0, 0, 1, 1], [], []>} : vector<24x8xbf16>, vector<8x32xbf16>, vector<24x32xf32> -> vector<24x32xf32>
    %52 = vector.extract_strided_slice %51 {offsets = [0, 0], sizes = [8, 32], strides = [1, 1]} : vector<24x32xf32> to vector<8x32xf32>
    %53 = arith.truncf %52 : vector<8x32xf32> to vector<8x32xbf16>
    %c0_19 = arith.constant 0 : index
    %c0_20 = arith.constant 0 : index
    %54 = vector.load %arg1[%c0_19, %c0_20] : memref<1312x128xf32, #tpu.memory_space<vmem>>, vector<32x32xf32>
    %55 = arith.truncf %54 : vector<32x32xf32> to vector<32x32xbf16>
    %cst_21 = arith.constant dense<0.000000e+00> : vector<8x32xf32>
    %56 = tpu.matmul %53, %55, %cst_21 {dimension_numbers = #tpu.dot_dimension_numbers<[1], [0], [0], [1], [0, 0, 1, 1], [], []>} : vector<8x32xbf16>, vector<32x32xbf16>, vector<8x32xf32> -> vector<8x32xf32>
    %57 = vector.extract_strided_slice %51 {offsets = [8, 0], sizes = [8, 32], strides = [1, 1]} : vector<24x32xf32> to vector<8x32xf32>
    %58 = arith.truncf %57 : vector<8x32xf32> to vector<8x32xbf16>
    %c32_22 = arith.constant 32 : index
    %c0_23 = arith.constant 0 : index
    %59 = vector.load %arg1[%c32_22, %c0_23] : memref<1312x128xf32, #tpu.memory_space<vmem>>, vector<32x32xf32>
    %60 = arith.truncf %59 : vector<32x32xf32> to vector<32x32xbf16>
    %cst_24 = arith.constant dense<0.000000e+00> : vector<8x32xf32>
    %61 = tpu.matmul %58, %60, %cst_24 {dimension_numbers = #tpu.dot_dimension_numbers<[1], [0], [0], [1], [0, 0, 1, 1], [], []>} : vector<8x32xbf16>, vector<32x32xbf16>, vector<8x32xf32> -> vector<8x32xf32>
    %62 = arith.addf %56, %61 : vector<8x32xf32>
    %63 = vector.extract_strided_slice %51 {offsets = [16, 0], sizes = [8, 32], strides = [1, 1]} : vector<24x32xf32> to vector<8x32xf32>
    %64 = arith.truncf %63 : vector<8x32xf32> to vector<8x32xbf16>
    %c64_25 = arith.constant 64 : index
    %c0_26 = arith.constant 0 : index
    %65 = vector.load %arg1[%c64_25, %c0_26] : memref<1312x128xf32, #tpu.memory_space<vmem>>, vector<32x32xf32>
    %66 = arith.truncf %65 : vector<32x32xf32> to vector<32x32xbf16>
    %cst_27 = arith.constant dense<0.000000e+00> : vector<8x32xf32>
    %67 = tpu.matmul %64, %66, %cst_27 {dimension_numbers = #tpu.dot_dimension_numbers<[1], [0], [0], [1], [0, 0, 1, 1], [], []>} : vector<8x32xbf16>, vector<32x32xbf16>, vector<8x32xf32> -> vector<8x32xf32>
    %68 = arith.addf %62, %67 : vector<8x32xf32>
    %c160 = arith.constant 160 : index
    %c0_28 = arith.constant 0 : index
    %69 = vector.load %arg1[%c160, %c0_28] : memref<1312x128xf32, #tpu.memory_space<vmem>>, vector<8x1xf32>
    %c168 = arith.constant 168 : index
    %c0_29 = arith.constant 0 : index
    %70 = vector.load %arg1[%c168, %c0_29] : memref<1312x128xf32, #tpu.memory_space<vmem>>, vector<8x1xf32>
    %cst_30 = arith.constant dense<0.000000e+00> : vector<8xf32>
    %71 = vector.multi_reduction <add>, %68, %cst_30 [1] : vector<8x32xf32> to vector<8xf32>
    %72 = vector.shape_cast %71 : vector<8xf32> to vector<8x1xf32>
    %cst_31 = arith.constant 3.200000e+01 : f32
    %73 = vector.broadcast %cst_31 : f32 to vector<8x1xf32>
    %74 = arith.divf %72, %73 : vector<8x1xf32>
    %75 = vector.broadcast %74 : vector<8x1xf32> to vector<8x32xf32>
    %76 = arith.subf %68, %75 : vector<8x32xf32>
    %77 = arith.mulf %76, %76 : vector<8x32xf32>
    %cst_32 = arith.constant dense<0.000000e+00> : vector<8xf32>
    %78 = vector.multi_reduction <add>, %77, %cst_32 [1] : vector<8x32xf32> to vector<8xf32>
    %79 = vector.shape_cast %78 : vector<8xf32> to vector<8x1xf32>
    %cst_33 = arith.constant 3.200000e+01 : f32
    %80 = vector.broadcast %cst_33 : f32 to vector<8x1xf32>
    %81 = arith.divf %79, %80 : vector<8x1xf32>
    %cst_34 = arith.constant 9.99999974E-6 : f32
    %82 = vector.broadcast %cst_34 : f32 to vector<8x1xf32>
    %83 = arith.addf %81, %82 : vector<8x1xf32>
    %84 = math.rsqrt %83 : vector<8x1xf32>
    %85 = arith.mulf %69, %84 : vector<8x1xf32>
    %86 = vector.broadcast %85 : vector<8x1xf32> to vector<8x32xf32>
    %87 = arith.mulf %76, %86 : vector<8x32xf32>
    %88 = vector.broadcast %70 : vector<8x1xf32> to vector<8x32xf32>
    %89 = arith.addf %87, %88 : vector<8x32xf32>
    %cst_35 = arith.constant 0.000000e+00 : f32
    %90 = vector.broadcast %cst_35 : f32 to vector<8x32xf32>
    %91 = arith.maximumf %89, %90 : vector<8x32xf32>
    %c176 = arith.constant 176 : index
    %c0_36 = arith.constant 0 : index
    %92 = vector.load %arg1[%c176, %c0_36] : memref<1312x128xf32, #tpu.memory_space<vmem>>, vector<24x8xf32>
    %93 = arith.truncf %92 : vector<24x8xf32> to vector<24x8xbf16>
    %94 = arith.truncf %91 : vector<8x32xf32> to vector<8x32xbf16>
    %cst_37 = arith.constant dense<0.000000e+00> : vector<24x32xf32>
    %95 = tpu.matmul %93, %94, %cst_37 {dimension_numbers = #tpu.dot_dimension_numbers<[1], [0], [0], [1], [0, 0, 1, 1], [], []>} : vector<24x8xbf16>, vector<8x32xbf16>, vector<24x32xf32> -> vector<24x32xf32>
    %96 = vector.extract_strided_slice %95 {offsets = [0, 0], sizes = [8, 32], strides = [1, 1]} : vector<24x32xf32> to vector<8x32xf32>
    %97 = arith.truncf %96 : vector<8x32xf32> to vector<8x32xbf16>
    %c0_38 = arith.constant 0 : index
    %c0_39 = arith.constant 0 : index
    %98 = vector.load %arg1[%c0_38, %c0_39] : memref<1312x128xf32, #tpu.memory_space<vmem>>, vector<32x32xf32>
    %99 = arith.truncf %98 : vector<32x32xf32> to vector<32x32xbf16>
    %cst_40 = arith.constant dense<0.000000e+00> : vector<8x32xf32>
    %100 = tpu.matmul %97, %99, %cst_40 {dimension_numbers = #tpu.dot_dimension_numbers<[1], [0], [0], [1], [0, 0, 1, 1], [], []>} : vector<8x32xbf16>, vector<32x32xbf16>, vector<8x32xf32> -> vector<8x32xf32>
    %101 = vector.extract_strided_slice %95 {offsets = [8, 0], sizes = [8, 32], strides = [1, 1]} : vector<24x32xf32> to vector<8x32xf32>
    %102 = arith.truncf %101 : vector<8x32xf32> to vector<8x32xbf16>
    %c32_41 = arith.constant 32 : index
    %c0_42 = arith.constant 0 : index
    %103 = vector.load %arg1[%c32_41, %c0_42] : memref<1312x128xf32, #tpu.memory_space<vmem>>, vector<32x32xf32>
    %104 = arith.truncf %103 : vector<32x32xf32> to vector<32x32xbf16>
    %cst_43 = arith.constant dense<0.000000e+00> : vector<8x32xf32>
    %105 = tpu.matmul %102, %104, %cst_43 {dimension_numbers = #tpu.dot_dimension_numbers<[1], [0], [0], [1], [0, 0, 1, 1], [], []>} : vector<8x32xbf16>, vector<32x32xbf16>, vector<8x32xf32> -> vector<8x32xf32>
    %106 = arith.addf %100, %105 : vector<8x32xf32>
    %107 = vector.extract_strided_slice %95 {offsets = [16, 0], sizes = [8, 32], strides = [1, 1]} : vector<24x32xf32> to vector<8x32xf32>
    %108 = arith.truncf %107 : vector<8x32xf32> to vector<8x32xbf16>
    %c64_44 = arith.constant 64 : index
    %c0_45 = arith.constant 0 : index
    %109 = vector.load %arg1[%c64_44, %c0_45] : memref<1312x128xf32, #tpu.memory_space<vmem>>, vector<32x32xf32>
    %110 = arith.truncf %109 : vector<32x32xf32> to vector<32x32xbf16>
    %cst_46 = arith.constant dense<0.000000e+00> : vector<8x32xf32>
    %111 = tpu.matmul %108, %110, %cst_46 {dimension_numbers = #tpu.dot_dimension_numbers<[1], [0], [0], [1], [0, 0, 1, 1], [], []>} : vector<8x32xbf16>, vector<32x32xbf16>, vector<8x32xf32> -> vector<8x32xf32>
    %112 = arith.addf %106, %111 : vector<8x32xf32>
    %c200 = arith.constant 200 : index
    %c0_47 = arith.constant 0 : index
    %113 = vector.load %arg1[%c200, %c0_47] : memref<1312x128xf32, #tpu.memory_space<vmem>>, vector<8x1xf32>
    %c208 = arith.constant 208 : index
    %c0_48 = arith.constant 0 : index
    %114 = vector.load %arg1[%c208, %c0_48] : memref<1312x128xf32, #tpu.memory_space<vmem>>, vector<8x1xf32>
    %cst_49 = arith.constant dense<0.000000e+00> : vector<8xf32>
    %115 = vector.multi_reduction <add>, %112, %cst_49 [1] : vector<8x32xf32> to vector<8xf32>
    %116 = vector.shape_cast %115 : vector<8xf32> to vector<8x1xf32>
    %cst_50 = arith.constant 3.200000e+01 : f32
    %117 = vector.broadcast %cst_50 : f32 to vector<8x1xf32>
    %118 = arith.divf %116, %117 : vector<8x1xf32>
    %119 = vector.broadcast %118 : vector<8x1xf32> to vector<8x32xf32>
    %120 = arith.subf %112, %119 : vector<8x32xf32>
    %121 = arith.mulf %120, %120 : vector<8x32xf32>
    %cst_51 = arith.constant dense<0.000000e+00> : vector<8xf32>
    %122 = vector.multi_reduction <add>, %121, %cst_51 [1] : vector<8x32xf32> to vector<8xf32>
    %123 = vector.shape_cast %122 : vector<8xf32> to vector<8x1xf32>
    %cst_52 = arith.constant 3.200000e+01 : f32
    %124 = vector.broadcast %cst_52 : f32 to vector<8x1xf32>
    %125 = arith.divf %123, %124 : vector<8x1xf32>
    %cst_53 = arith.constant 9.99999974E-6 : f32
    %126 = vector.broadcast %cst_53 : f32 to vector<8x1xf32>
    %127 = arith.addf %125, %126 : vector<8x1xf32>
    %128 = math.rsqrt %127 : vector<8x1xf32>
    %129 = arith.mulf %113, %128 : vector<8x1xf32>
    %130 = vector.broadcast %129 : vector<8x1xf32> to vector<8x32xf32>
    %131 = arith.mulf %120, %130 : vector<8x32xf32>
    %132 = vector.broadcast %114 : vector<8x1xf32> to vector<8x32xf32>
    %133 = arith.addf %131, %132 : vector<8x32xf32>
    %134 = arith.addf %133, %47 : vector<8x32xf32>
    %cst_54 = arith.constant 0.000000e+00 : f32
    %135 = vector.broadcast %cst_54 : f32 to vector<8x32xf32>
    %136 = arith.maximumf %134, %135 : vector<8x32xf32>
    %c216 = arith.constant 216 : index
    %c0_55 = arith.constant 0 : index
    %137 = vector.load %arg1[%c216, %c0_55] : memref<1312x128xf32, #tpu.memory_space<vmem>>, vector<24x8xf32>
    %138 = arith.truncf %137 : vector<24x8xf32> to vector<24x8xbf16>
    %139 = arith.truncf %136 : vector<8x32xf32> to vector<8x32xbf16>
    %cst_56 = arith.constant dense<0.000000e+00> : vector<24x32xf32>
    %140 = tpu.matmul %138, %139, %cst_56 {dimension_numbers = #tpu.dot_dimension_numbers<[1], [0], [0], [1], [0, 0, 1, 1], [], []>} : vector<24x8xbf16>, vector<8x32xbf16>, vector<24x32xf32> -> vector<24x32xf32>
    %141 = vector.extract_strided_slice %140 {offsets = [0, 0], sizes = [8, 32], strides = [1, 1]} : vector<24x32xf32> to vector<8x32xf32>
    %142 = arith.truncf %141 : vector<8x32xf32> to vector<8x32xbf16>
    %c0_57 = arith.constant 0 : index
    %c0_58 = arith.constant 0 : index
    %143 = vector.load %arg1[%c0_57, %c0_58] : memref<1312x128xf32, #tpu.memory_space<vmem>>, vector<32x32xf32>
    %144 = arith.truncf %143 : vector<32x32xf32> to vector<32x32xbf16>
    %cst_59 = arith.constant dense<0.000000e+00> : vector<8x32xf32>
    %145 = tpu.matmul %142, %144, %cst_59 {dimension_numbers = #tpu.dot_dimension_numbers<[1], [0], [0], [1], [0, 0, 1, 1], [], []>} : vector<8x32xbf16>, vector<32x32xbf16>, vector<8x32xf32> -> vector<8x32xf32>
    %146 = vector.extract_strided_slice %140 {offsets = [8, 0], sizes = [8, 32], strides = [1, 1]} : vector<24x32xf32> to vector<8x32xf32>
    %147 = arith.truncf %146 : vector<8x32xf32> to vector<8x32xbf16>
    %c32_60 = arith.constant 32 : index
    %c0_61 = arith.constant 0 : index
    %148 = vector.load %arg1[%c32_60, %c0_61] : memref<1312x128xf32, #tpu.memory_space<vmem>>, vector<32x32xf32>
    %149 = arith.truncf %148 : vector<32x32xf32> to vector<32x32xbf16>
    %cst_62 = arith.constant dense<0.000000e+00> : vector<8x32xf32>
    %150 = tpu.matmul %147, %149, %cst_62 {dimension_numbers = #tpu.dot_dimension_numbers<[1], [0], [0], [1], [0, 0, 1, 1], [], []>} : vector<8x32xbf16>, vector<32x32xbf16>, vector<8x32xf32> -> vector<8x32xf32>
    %151 = arith.addf %145, %150 : vector<8x32xf32>
    %152 = vector.extract_strided_slice %140 {offsets = [16, 0], sizes = [8, 32], strides = [1, 1]} : vector<24x32xf32> to vector<8x32xf32>
    %153 = arith.truncf %152 : vector<8x32xf32> to vector<8x32xbf16>
    %c64_63 = arith.constant 64 : index
    %c0_64 = arith.constant 0 : index
    %154 = vector.load %arg1[%c64_63, %c0_64] : memref<1312x128xf32, #tpu.memory_space<vmem>>, vector<32x32xf32>
    %155 = arith.truncf %154 : vector<32x32xf32> to vector<32x32xbf16>
    %cst_65 = arith.constant dense<0.000000e+00> : vector<8x32xf32>
    %156 = tpu.matmul %153, %155, %cst_65 {dimension_numbers = #tpu.dot_dimension_numbers<[1], [0], [0], [1], [0, 0, 1, 1], [], []>} : vector<8x32xbf16>, vector<32x32xbf16>, vector<8x32xf32> -> vector<8x32xf32>
    %157 = arith.addf %151, %156 : vector<8x32xf32>
    %c240 = arith.constant 240 : index
    %c0_66 = arith.constant 0 : index
    %158 = vector.load %arg1[%c240, %c0_66] : memref<1312x128xf32, #tpu.memory_space<vmem>>, vector<8x1xf32>
    %c248 = arith.constant 248 : index
    %c0_67 = arith.constant 0 : index
    %159 = vector.load %arg1[%c248, %c0_67] : memref<1312x128xf32, #tpu.memory_space<vmem>>, vector<8x1xf32>
    %cst_68 = arith.constant dense<0.000000e+00> : vector<8xf32>
    %160 = vector.multi_reduction <add>, %157, %cst_68 [1] : vector<8x32xf32> to vector<8xf32>
    %161 = vector.shape_cast %160 : vector<8xf32> to vector<8x1xf32>
    %cst_69 = arith.constant 3.200000e+01 : f32
    %162 = vector.broadcast %cst_69 : f32 to vector<8x1xf32>
    %163 = arith.divf %161, %162 : vector<8x1xf32>
    %164 = vector.broadcast %163 : vector<8x1xf32> to vector<8x32xf32>
    %165 = arith.subf %157, %164 : vector<8x32xf32>
    %166 = arith.mulf %165, %165 : vector<8x32xf32>
    %cst_70 = arith.constant dense<0.000000e+00> : vector<8xf32>
    %167 = vector.multi_reduction <add>, %166, %cst_70 [1] : vector<8x32xf32> to vector<8xf32>
    %168 = vector.shape_cast %167 : vector<8xf32> to vector<8x1xf32>
    %cst_71 = arith.constant 3.200000e+01 : f32
    %169 = vector.broadcast %cst_71 : f32 to vector<8x1xf32>
    %170 = arith.divf %168, %169 : vector<8x1xf32>
    %cst_72 = arith.constant 9.99999974E-6 : f32
    %171 = vector.broadcast %cst_72 : f32 to vector<8x1xf32>
    %172 = arith.addf %170, %171 : vector<8x1xf32>
    %173 = math.rsqrt %172 : vector<8x1xf32>
    %174 = arith.mulf %158, %173 : vector<8x1xf32>
    %175 = vector.broadcast %174 : vector<8x1xf32> to vector<8x32xf32>
    %176 = arith.mulf %165, %175 : vector<8x32xf32>
    %177 = vector.broadcast %159 : vector<8x1xf32> to vector<8x32xf32>
    %178 = arith.addf %176, %177 : vector<8x32xf32>
    %cst_73 = arith.constant 0.000000e+00 : f32
    %179 = vector.broadcast %cst_73 : f32 to vector<8x32xf32>
    %180 = arith.maximumf %178, %179 : vector<8x32xf32>
    %c256 = arith.constant 256 : index
    %c0_74 = arith.constant 0 : index
    %181 = vector.load %arg1[%c256, %c0_74] : memref<1312x128xf32, #tpu.memory_space<vmem>>, vector<24x8xf32>
    %182 = arith.truncf %181 : vector<24x8xf32> to vector<24x8xbf16>
    %183 = arith.truncf %180 : vector<8x32xf32> to vector<8x32xbf16>
    %cst_75 = arith.constant dense<0.000000e+00> : vector<24x32xf32>
    %184 = tpu.matmul %182, %183, %cst_75 {dimension_numbers = #tpu.dot_dimension_numbers<[1], [0], [0], [1], [0, 0, 1, 1], [], []>} : vector<24x8xbf16>, vector<8x32xbf16>, vector<24x32xf32> -> vector<24x32xf32>
    %185 = vector.extract_strided_slice %184 {offsets = [0, 0], sizes = [8, 32], strides = [1, 1]} : vector<24x32xf32> to vector<8x32xf32>
    %186 = arith.truncf %185 : vector<8x32xf32> to vector<8x32xbf16>
    %c0_76 = arith.constant 0 : index
    %c0_77 = arith.constant 0 : index
    %187 = vector.load %arg1[%c0_76, %c0_77] : memref<1312x128xf32, #tpu.memory_space<vmem>>, vector<32x32xf32>
    %188 = arith.truncf %187 : vector<32x32xf32> to vector<32x32xbf16>
    %cst_78 = arith.constant dense<0.000000e+00> : vector<8x32xf32>
    %189 = tpu.matmul %186, %188, %cst_78 {dimension_numbers = #tpu.dot_dimension_numbers<[1], [0], [0], [1], [0, 0, 1, 1], [], []>} : vector<8x32xbf16>, vector<32x32xbf16>, vector<8x32xf32> -> vector<8x32xf32>
    %190 = vector.extract_strided_slice %184 {offsets = [8, 0], sizes = [8, 32], strides = [1, 1]} : vector<24x32xf32> to vector<8x32xf32>
    %191 = arith.truncf %190 : vector<8x32xf32> to vector<8x32xbf16>
    %c32_79 = arith.constant 32 : index
    %c0_80 = arith.constant 0 : index
    %192 = vector.load %arg1[%c32_79, %c0_80] : memref<1312x128xf32, #tpu.memory_space<vmem>>, vector<32x32xf32>
    %193 = arith.truncf %192 : vector<32x32xf32> to vector<32x32xbf16>
    %cst_81 = arith.constant dense<0.000000e+00> : vector<8x32xf32>
    %194 = tpu.matmul %191, %193, %cst_81 {dimension_numbers = #tpu.dot_dimension_numbers<[1], [0], [0], [1], [0, 0, 1, 1], [], []>} : vector<8x32xbf16>, vector<32x32xbf16>, vector<8x32xf32> -> vector<8x32xf32>
    %195 = arith.addf %189, %194 : vector<8x32xf32>
    %196 = vector.extract_strided_slice %184 {offsets = [16, 0], sizes = [8, 32], strides = [1, 1]} : vector<24x32xf32> to vector<8x32xf32>
    %197 = arith.truncf %196 : vector<8x32xf32> to vector<8x32xbf16>
    %c64_82 = arith.constant 64 : index
    %c0_83 = arith.constant 0 : index
    %198 = vector.load %arg1[%c64_82, %c0_83] : memref<1312x128xf32, #tpu.memory_space<vmem>>, vector<32x32xf32>
    %199 = arith.truncf %198 : vector<32x32xf32> to vector<32x32xbf16>
    %cst_84 = arith.constant dense<0.000000e+00> : vector<8x32xf32>
    %200 = tpu.matmul %197, %199, %cst_84 {dimension_numbers = #tpu.dot_dimension_numbers<[1], [0], [0], [1], [0, 0, 1, 1], [], []>} : vector<8x32xbf16>, vector<32x32xbf16>, vector<8x32xf32> -> vector<8x32xf32>
    %201 = arith.addf %195, %200 : vector<8x32xf32>
    %c280 = arith.constant 280 : index
    %c0_85 = arith.constant 0 : index
    %202 = vector.load %arg1[%c280, %c0_85] : memref<1312x128xf32, #tpu.memory_space<vmem>>, vector<8x1xf32>
    %c288 = arith.constant 288 : index
    %c0_86 = arith.constant 0 : index
    %203 = vector.load %arg1[%c288, %c0_86] : memref<1312x128xf32, #tpu.memory_space<vmem>>, vector<8x1xf32>
    %cst_87 = arith.constant dense<0.000000e+00> : vector<8xf32>
    %204 = vector.multi_reduction <add>, %201, %cst_87 [1] : vector<8x32xf32> to vector<8xf32>
    %205 = vector.shape_cast %204 : vector<8xf32> to vector<8x1xf32>
    %cst_88 = arith.constant 3.200000e+01 : f32
    %206 = vector.broadcast %cst_88 : f32 to vector<8x1xf32>
    %207 = arith.divf %205, %206 : vector<8x1xf32>
    %208 = vector.broadcast %207 : vector<8x1xf32> to vector<8x32xf32>
    %209 = arith.subf %201, %208 : vector<8x32xf32>
    %210 = arith.mulf %209, %209 : vector<8x32xf32>
    %cst_89 = arith.constant dense<0.000000e+00> : vector<8xf32>
    %211 = vector.multi_reduction <add>, %210, %cst_89 [1] : vector<8x32xf32> to vector<8xf32>
    %212 = vector.shape_cast %211 : vector<8xf32> to vector<8x1xf32>
    %cst_90 = arith.constant 3.200000e+01 : f32
    %213 = vector.broadcast %cst_90 : f32 to vector<8x1xf32>
    %214 = arith.divf %212, %213 : vector<8x1xf32>
    %cst_91 = arith.constant 9.99999974E-6 : f32
    %215 = vector.broadcast %cst_91 : f32 to vector<8x1xf32>
    %216 = arith.addf %214, %215 : vector<8x1xf32>
    %217 = math.rsqrt %216 : vector<8x1xf32>
    %218 = arith.mulf %202, %217 : vector<8x1xf32>
    %219 = vector.broadcast %218 : vector<8x1xf32> to vector<8x32xf32>
    %220 = arith.mulf %209, %219 : vector<8x32xf32>
    %221 = vector.broadcast %203 : vector<8x1xf32> to vector<8x32xf32>
    %222 = arith.addf %220, %221 : vector<8x32xf32>
    %223 = arith.addf %222, %136 : vector<8x32xf32>
    %cst_92 = arith.constant 0.000000e+00 : f32
    %224 = vector.broadcast %cst_92 : f32 to vector<8x32xf32>
    %225 = arith.maximumf %223, %224 : vector<8x32xf32>
    %c392 = arith.constant 392 : index
    %c0_93 = arith.constant 0 : index
    %226 = vector.load %arg1[%c392, %c0_93] : memref<1312x128xf32, #tpu.memory_space<vmem>>, vector<48x8xf32>
    %227 = arith.truncf %226 : vector<48x8xf32> to vector<48x8xbf16>
    %228 = arith.truncf %225 : vector<8x32xf32> to vector<8x32xbf16>
    %cst_94 = arith.constant dense<0.000000e+00> : vector<48x32xf32>
    %229 = tpu.matmul %227, %228, %cst_94 {dimension_numbers = #tpu.dot_dimension_numbers<[1], [0], [0], [1], [0, 0, 1, 1], [], []>} : vector<48x8xbf16>, vector<8x32xbf16>, vector<48x32xf32> -> vector<48x32xf32>
    %230 = vector.extract_strided_slice %229 {offsets = [0, 0], sizes = [16, 32], strides = [1, 1]} : vector<48x32xf32> to vector<16x32xf32>
    %231 = arith.truncf %230 : vector<16x32xf32> to vector<16x32xbf16>
    %c296 = arith.constant 296 : index
    %c0_95 = arith.constant 0 : index
    %232 = vector.load %arg1[%c296, %c0_95] : memref<1312x128xf32, #tpu.memory_space<vmem>>, vector<32x16xf32>
    %233 = arith.truncf %232 : vector<32x16xf32> to vector<32x16xbf16>
    %cst_96 = arith.constant dense<0.000000e+00> : vector<16x16xf32>
    %234 = tpu.matmul %231, %233, %cst_96 {dimension_numbers = #tpu.dot_dimension_numbers<[1], [0], [0], [1], [0, 0, 1, 1], [], []>} : vector<16x32xbf16>, vector<32x16xbf16>, vector<16x16xf32> -> vector<16x16xf32>
    %235 = vector.extract_strided_slice %229 {offsets = [16, 0], sizes = [16, 32], strides = [1, 1]} : vector<48x32xf32> to vector<16x32xf32>
    %236 = arith.truncf %235 : vector<16x32xf32> to vector<16x32xbf16>
    %c328 = arith.constant 328 : index
    %c0_97 = arith.constant 0 : index
    %237 = vector.load %arg1[%c328, %c0_97] : memref<1312x128xf32, #tpu.memory_space<vmem>>, vector<32x16xf32>
    %238 = arith.truncf %237 : vector<32x16xf32> to vector<32x16xbf16>
    %cst_98 = arith.constant dense<0.000000e+00> : vector<16x16xf32>
    %239 = tpu.matmul %236, %238, %cst_98 {dimension_numbers = #tpu.dot_dimension_numbers<[1], [0], [0], [1], [0, 0, 1, 1], [], []>} : vector<16x32xbf16>, vector<32x16xbf16>, vector<16x16xf32> -> vector<16x16xf32>
    %240 = arith.addf %234, %239 : vector<16x16xf32>
    %241 = vector.extract_strided_slice %229 {offsets = [32, 0], sizes = [16, 32], strides = [1, 1]} : vector<48x32xf32> to vector<16x32xf32>
    %242 = arith.truncf %241 : vector<16x32xf32> to vector<16x32xbf16>
    %c360 = arith.constant 360 : index
    %c0_99 = arith.constant 0 : index
    %243 = vector.load %arg1[%c360, %c0_99] : memref<1312x128xf32, #tpu.memory_space<vmem>>, vector<32x16xf32>
    %244 = arith.truncf %243 : vector<32x16xf32> to vector<32x16xbf16>
    %cst_100 = arith.constant dense<0.000000e+00> : vector<16x16xf32>
    %245 = tpu.matmul %242, %244, %cst_100 {dimension_numbers = #tpu.dot_dimension_numbers<[1], [0], [0], [1], [0, 0, 1, 1], [], []>} : vector<16x32xbf16>, vector<32x16xbf16>, vector<16x16xf32> -> vector<16x16xf32>
    %246 = arith.addf %240, %245 : vector<16x16xf32>
    %c440 = arith.constant 440 : index
    %c0_101 = arith.constant 0 : index
    %247 = vector.load %arg1[%c440, %c0_101] : memref<1312x128xf32, #tpu.memory_space<vmem>>, vector<16x1xf32>
    %c456 = arith.constant 456 : index
    %c0_102 = arith.constant 0 : index
    %248 = vector.load %arg1[%c456, %c0_102] : memref<1312x128xf32, #tpu.memory_space<vmem>>, vector<16x1xf32>
    %cst_103 = arith.constant dense<0.000000e+00> : vector<16xf32>
    %249 = vector.multi_reduction <add>, %246, %cst_103 [1] : vector<16x16xf32> to vector<16xf32>
    %250 = vector.shape_cast %249 : vector<16xf32> to vector<16x1xf32>
    %cst_104 = arith.constant 1.600000e+01 : f32
    %251 = vector.broadcast %cst_104 : f32 to vector<16x1xf32>
    %252 = arith.divf %250, %251 : vector<16x1xf32>
    %253 = vector.broadcast %252 : vector<16x1xf32> to vector<16x16xf32>
    %254 = arith.subf %246, %253 : vector<16x16xf32>
    %255 = arith.mulf %254, %254 : vector<16x16xf32>
    %cst_105 = arith.constant dense<0.000000e+00> : vector<16xf32>
    %256 = vector.multi_reduction <add>, %255, %cst_105 [1] : vector<16x16xf32> to vector<16xf32>
    %257 = vector.shape_cast %256 : vector<16xf32> to vector<16x1xf32>
    %cst_106 = arith.constant 1.600000e+01 : f32
    %258 = vector.broadcast %cst_106 : f32 to vector<16x1xf32>
    %259 = arith.divf %257, %258 : vector<16x1xf32>
    %cst_107 = arith.constant 9.99999974E-6 : f32
    %260 = vector.broadcast %cst_107 : f32 to vector<16x1xf32>
    %261 = arith.addf %259, %260 : vector<16x1xf32>
    %262 = math.rsqrt %261 : vector<16x1xf32>
    %263 = arith.mulf %247, %262 : vector<16x1xf32>
    %264 = vector.broadcast %263 : vector<16x1xf32> to vector<16x16xf32>
    %265 = arith.mulf %254, %264 : vector<16x16xf32>
    %266 = vector.broadcast %248 : vector<16x1xf32> to vector<16x16xf32>
    %267 = arith.addf %265, %266 : vector<16x16xf32>
    %cst_108 = arith.constant 0.000000e+00 : f32
    %268 = vector.broadcast %cst_108 : f32 to vector<16x16xf32>
    %269 = arith.maximumf %267, %268 : vector<16x16xf32>
    %c520 = arith.constant 520 : index
    %c0_109 = arith.constant 0 : index
    %270 = vector.load %arg1[%c520, %c0_109] : memref<1312x128xf32, #tpu.memory_space<vmem>>, vector<48x16xf32>
    %271 = arith.truncf %270 : vector<48x16xf32> to vector<48x16xbf16>
    %272 = arith.truncf %269 : vector<16x16xf32> to vector<16x16xbf16>
    %cst_110 = arith.constant dense<0.000000e+00> : vector<48x16xf32>
    %273 = tpu.matmul %271, %272, %cst_110 {dimension_numbers = #tpu.dot_dimension_numbers<[1], [0], [0], [1], [0, 0, 1, 1], [], []>} : vector<48x16xbf16>, vector<16x16xbf16>, vector<48x16xf32> -> vector<48x16xf32>
    %274 = vector.extract_strided_slice %273 {offsets = [0, 0], sizes = [16, 16], strides = [1, 1]} : vector<48x16xf32> to vector<16x16xf32>
    %275 = arith.truncf %274 : vector<16x16xf32> to vector<16x16xbf16>
    %c472 = arith.constant 472 : index
    %c0_111 = arith.constant 0 : index
    %276 = vector.load %arg1[%c472, %c0_111] : memref<1312x128xf32, #tpu.memory_space<vmem>>, vector<16x16xf32>
    %277 = arith.truncf %276 : vector<16x16xf32> to vector<16x16xbf16>
    %cst_112 = arith.constant dense<0.000000e+00> : vector<16x16xf32>
    %278 = tpu.matmul %275, %277, %cst_112 {dimension_numbers = #tpu.dot_dimension_numbers<[1], [0], [0], [1], [0, 0, 1, 1], [], []>} : vector<16x16xbf16>, vector<16x16xbf16>, vector<16x16xf32> -> vector<16x16xf32>
    %279 = vector.extract_strided_slice %273 {offsets = [16, 0], sizes = [16, 16], strides = [1, 1]} : vector<48x16xf32> to vector<16x16xf32>
    %280 = arith.truncf %279 : vector<16x16xf32> to vector<16x16xbf16>
    %c488 = arith.constant 488 : index
    %c0_113 = arith.constant 0 : index
    %281 = vector.load %arg1[%c488, %c0_113] : memref<1312x128xf32, #tpu.memory_space<vmem>>, vector<16x16xf32>
    %282 = arith.truncf %281 : vector<16x16xf32> to vector<16x16xbf16>
    %cst_114 = arith.constant dense<0.000000e+00> : vector<16x16xf32>
    %283 = tpu.matmul %280, %282, %cst_114 {dimension_numbers = #tpu.dot_dimension_numbers<[1], [0], [0], [1], [0, 0, 1, 1], [], []>} : vector<16x16xbf16>, vector<16x16xbf16>, vector<16x16xf32> -> vector<16x16xf32>
    %284 = arith.addf %278, %283 : vector<16x16xf32>
    %285 = vector.extract_strided_slice %273 {offsets = [32, 0], sizes = [16, 16], strides = [1, 1]} : vector<48x16xf32> to vector<16x16xf32>
    %286 = arith.truncf %285 : vector<16x16xf32> to vector<16x16xbf16>
    %c504 = arith.constant 504 : index
    %c0_115 = arith.constant 0 : index
    %287 = vector.load %arg1[%c504, %c0_115] : memref<1312x128xf32, #tpu.memory_space<vmem>>, vector<16x16xf32>
    %288 = arith.truncf %287 : vector<16x16xf32> to vector<16x16xbf16>
    %cst_116 = arith.constant dense<0.000000e+00> : vector<16x16xf32>
    %289 = tpu.matmul %286, %288, %cst_116 {dimension_numbers = #tpu.dot_dimension_numbers<[1], [0], [0], [1], [0, 0, 1, 1], [], []>} : vector<16x16xbf16>, vector<16x16xbf16>, vector<16x16xf32> -> vector<16x16xf32>
    %290 = arith.addf %284, %289 : vector<16x16xf32>
    %c568 = arith.constant 568 : index
    %c0_117 = arith.constant 0 : index
    %291 = vector.load %arg1[%c568, %c0_117] : memref<1312x128xf32, #tpu.memory_space<vmem>>, vector<16x1xf32>
    %c584 = arith.constant 584 : index
    %c0_118 = arith.constant 0 : index
    %292 = vector.load %arg1[%c584, %c0_118] : memref<1312x128xf32, #tpu.memory_space<vmem>>, vector<16x1xf32>
    %cst_119 = arith.constant dense<0.000000e+00> : vector<16xf32>
    %293 = vector.multi_reduction <add>, %290, %cst_119 [1] : vector<16x16xf32> to vector<16xf32>
    %294 = vector.shape_cast %293 : vector<16xf32> to vector<16x1xf32>
    %cst_120 = arith.constant 1.600000e+01 : f32
    %295 = vector.broadcast %cst_120 : f32 to vector<16x1xf32>
    %296 = arith.divf %294, %295 : vector<16x1xf32>
    %297 = vector.broadcast %296 : vector<16x1xf32> to vector<16x16xf32>
    %298 = arith.subf %290, %297 : vector<16x16xf32>
    %299 = arith.mulf %298, %298 : vector<16x16xf32>
    %cst_121 = arith.constant dense<0.000000e+00> : vector<16xf32>
    %300 = vector.multi_reduction <add>, %299, %cst_121 [1] : vector<16x16xf32> to vector<16xf32>
    %301 = vector.shape_cast %300 : vector<16xf32> to vector<16x1xf32>
    %cst_122 = arith.constant 1.600000e+01 : f32
    %302 = vector.broadcast %cst_122 : f32 to vector<16x1xf32>
    %303 = arith.divf %301, %302 : vector<16x1xf32>
    %cst_123 = arith.constant 9.99999974E-6 : f32
    %304 = vector.broadcast %cst_123 : f32 to vector<16x1xf32>
    %305 = arith.addf %303, %304 : vector<16x1xf32>
    %306 = math.rsqrt %305 : vector<16x1xf32>
    %307 = arith.mulf %291, %306 : vector<16x1xf32>
    %308 = vector.broadcast %307 : vector<16x1xf32> to vector<16x16xf32>
    %309 = arith.mulf %298, %308 : vector<16x16xf32>
    %310 = vector.broadcast %292 : vector<16x1xf32> to vector<16x16xf32>
    %311 = arith.addf %309, %310 : vector<16x16xf32>
    %c632 = arith.constant 632 : index
    %c0_124 = arith.constant 0 : index
    %312 = vector.load %arg1[%c632, %c0_124] : memref<1312x128xf32, #tpu.memory_space<vmem>>, vector<16x8xf32>
    %313 = arith.truncf %312 : vector<16x8xf32> to vector<16x8xbf16>
    %314 = arith.truncf %225 : vector<8x32xf32> to vector<8x32xbf16>
    %cst_125 = arith.constant dense<0.000000e+00> : vector<16x32xf32>
    %315 = tpu.matmul %313, %314, %cst_125 {dimension_numbers = #tpu.dot_dimension_numbers<[1], [0], [0], [1], [0, 0, 1, 1], [], []>} : vector<16x8xbf16>, vector<8x32xbf16>, vector<16x32xf32> -> vector<16x32xf32>
    %316 = arith.truncf %315 : vector<16x32xf32> to vector<16x32xbf16>
    %c600 = arith.constant 600 : index
    %c0_126 = arith.constant 0 : index
    %317 = vector.load %arg1[%c600, %c0_126] : memref<1312x128xf32, #tpu.memory_space<vmem>>, vector<32x16xf32>
    %318 = arith.truncf %317 : vector<32x16xf32> to vector<32x16xbf16>
    %cst_127 = arith.constant dense<0.000000e+00> : vector<16x16xf32>
    %319 = tpu.matmul %316, %318, %cst_127 {dimension_numbers = #tpu.dot_dimension_numbers<[1], [0], [0], [1], [0, 0, 1, 1], [], []>} : vector<16x32xbf16>, vector<32x16xbf16>, vector<16x16xf32> -> vector<16x16xf32>
    %c648 = arith.constant 648 : index
    %c0_128 = arith.constant 0 : index
    %320 = vector.load %arg1[%c648, %c0_128] : memref<1312x128xf32, #tpu.memory_space<vmem>>, vector<16x1xf32>
    %c664 = arith.constant 664 : index
    %c0_129 = arith.constant 0 : index
    %321 = vector.load %arg1[%c664, %c0_129] : memref<1312x128xf32, #tpu.memory_space<vmem>>, vector<16x1xf32>
    %cst_130 = arith.constant dense<0.000000e+00> : vector<16xf32>
    %322 = vector.multi_reduction <add>, %319, %cst_130 [1] : vector<16x16xf32> to vector<16xf32>
    %323 = vector.shape_cast %322 : vector<16xf32> to vector<16x1xf32>
    %cst_131 = arith.constant 1.600000e+01 : f32
    %324 = vector.broadcast %cst_131 : f32 to vector<16x1xf32>
    %325 = arith.divf %323, %324 : vector<16x1xf32>
    %326 = vector.broadcast %325 : vector<16x1xf32> to vector<16x16xf32>
    %327 = arith.subf %319, %326 : vector<16x16xf32>
    %328 = arith.mulf %327, %327 : vector<16x16xf32>
    %cst_132 = arith.constant dense<0.000000e+00> : vector<16xf32>
    %329 = vector.multi_reduction <add>, %328, %cst_132 [1] : vector<16x16xf32> to vector<16xf32>
    %330 = vector.shape_cast %329 : vector<16xf32> to vector<16x1xf32>
    %cst_133 = arith.constant 1.600000e+01 : f32
    %331 = vector.broadcast %cst_133 : f32 to vector<16x1xf32>
    %332 = arith.divf %330, %331 : vector<16x1xf32>
    %cst_134 = arith.constant 9.99999974E-6 : f32
    %333 = vector.broadcast %cst_134 : f32 to vector<16x1xf32>
    %334 = arith.addf %332, %333 : vector<16x1xf32>
    %335 = math.rsqrt %334 : vector<16x1xf32>
    %336 = arith.mulf %320, %335 : vector<16x1xf32>
    %337 = vector.broadcast %336 : vector<16x1xf32> to vector<16x16xf32>
    %338 = arith.mulf %327, %337 : vector<16x16xf32>
    %339 = vector.broadcast %321 : vector<16x1xf32> to vector<16x16xf32>
    %340 = arith.addf %338, %339 : vector<16x16xf32>
    %341 = arith.addf %311, %340 : vector<16x16xf32>
    %cst_135 = arith.constant 0.000000e+00 : f32
    %342 = vector.broadcast %cst_135 : f32 to vector<16x16xf32>
    %343 = arith.maximumf %341, %342 : vector<16x16xf32>
    %c680 = arith.constant 680 : index
    %c0_136 = arith.constant 0 : index
    %344 = vector.load %arg1[%c680, %c0_136] : memref<1312x128xf32, #tpu.memory_space<vmem>>, vector<48x16xf32>
    %345 = arith.truncf %344 : vector<48x16xf32> to vector<48x16xbf16>
    %346 = arith.truncf %343 : vector<16x16xf32> to vector<16x16xbf16>
    %cst_137 = arith.constant dense<0.000000e+00> : vector<48x16xf32>
    %347 = tpu.matmul %345, %346, %cst_137 {dimension_numbers = #tpu.dot_dimension_numbers<[1], [0], [0], [1], [0, 0, 1, 1], [], []>} : vector<48x16xbf16>, vector<16x16xbf16>, vector<48x16xf32> -> vector<48x16xf32>
    %348 = vector.extract_strided_slice %347 {offsets = [0, 0], sizes = [16, 16], strides = [1, 1]} : vector<48x16xf32> to vector<16x16xf32>
    %349 = arith.truncf %348 : vector<16x16xf32> to vector<16x16xbf16>
    %c472_138 = arith.constant 472 : index
    %c0_139 = arith.constant 0 : index
    %350 = vector.load %arg1[%c472_138, %c0_139] : memref<1312x128xf32, #tpu.memory_space<vmem>>, vector<16x16xf32>
    %351 = arith.truncf %350 : vector<16x16xf32> to vector<16x16xbf16>
    %cst_140 = arith.constant dense<0.000000e+00> : vector<16x16xf32>
    %352 = tpu.matmul %349, %351, %cst_140 {dimension_numbers = #tpu.dot_dimension_numbers<[1], [0], [0], [1], [0, 0, 1, 1], [], []>} : vector<16x16xbf16>, vector<16x16xbf16>, vector<16x16xf32> -> vector<16x16xf32>
    %353 = vector.extract_strided_slice %347 {offsets = [16, 0], sizes = [16, 16], strides = [1, 1]} : vector<48x16xf32> to vector<16x16xf32>
    %354 = arith.truncf %353 : vector<16x16xf32> to vector<16x16xbf16>
    %c488_141 = arith.constant 488 : index
    %c0_142 = arith.constant 0 : index
    %355 = vector.load %arg1[%c488_141, %c0_142] : memref<1312x128xf32, #tpu.memory_space<vmem>>, vector<16x16xf32>
    %356 = arith.truncf %355 : vector<16x16xf32> to vector<16x16xbf16>
    %cst_143 = arith.constant dense<0.000000e+00> : vector<16x16xf32>
    %357 = tpu.matmul %354, %356, %cst_143 {dimension_numbers = #tpu.dot_dimension_numbers<[1], [0], [0], [1], [0, 0, 1, 1], [], []>} : vector<16x16xbf16>, vector<16x16xbf16>, vector<16x16xf32> -> vector<16x16xf32>
    %358 = arith.addf %352, %357 : vector<16x16xf32>
    %359 = vector.extract_strided_slice %347 {offsets = [32, 0], sizes = [16, 16], strides = [1, 1]} : vector<48x16xf32> to vector<16x16xf32>
    %360 = arith.truncf %359 : vector<16x16xf32> to vector<16x16xbf16>
    %c504_144 = arith.constant 504 : index
    %c0_145 = arith.constant 0 : index
    %361 = vector.load %arg1[%c504_144, %c0_145] : memref<1312x128xf32, #tpu.memory_space<vmem>>, vector<16x16xf32>
    %362 = arith.truncf %361 : vector<16x16xf32> to vector<16x16xbf16>
    %cst_146 = arith.constant dense<0.000000e+00> : vector<16x16xf32>
    %363 = tpu.matmul %360, %362, %cst_146 {dimension_numbers = #tpu.dot_dimension_numbers<[1], [0], [0], [1], [0, 0, 1, 1], [], []>} : vector<16x16xbf16>, vector<16x16xbf16>, vector<16x16xf32> -> vector<16x16xf32>
    %364 = arith.addf %358, %363 : vector<16x16xf32>
    %c728 = arith.constant 728 : index
    %c0_147 = arith.constant 0 : index
    %365 = vector.load %arg1[%c728, %c0_147] : memref<1312x128xf32, #tpu.memory_space<vmem>>, vector<16x1xf32>
    %c744 = arith.constant 744 : index
    %c0_148 = arith.constant 0 : index
    %366 = vector.load %arg1[%c744, %c0_148] : memref<1312x128xf32, #tpu.memory_space<vmem>>, vector<16x1xf32>
    %cst_149 = arith.constant dense<0.000000e+00> : vector<16xf32>
    %367 = vector.multi_reduction <add>, %364, %cst_149 [1] : vector<16x16xf32> to vector<16xf32>
    %368 = vector.shape_cast %367 : vector<16xf32> to vector<16x1xf32>
    %cst_150 = arith.constant 1.600000e+01 : f32
    %369 = vector.broadcast %cst_150 : f32 to vector<16x1xf32>
    %370 = arith.divf %368, %369 : vector<16x1xf32>
    %371 = vector.broadcast %370 : vector<16x1xf32> to vector<16x16xf32>
    %372 = arith.subf %364, %371 : vector<16x16xf32>
    %373 = arith.mulf %372, %372 : vector<16x16xf32>
    %cst_151 = arith.constant dense<0.000000e+00> : vector<16xf32>
    %374 = vector.multi_reduction <add>, %373, %cst_151 [1] : vector<16x16xf32> to vector<16xf32>
    %375 = vector.shape_cast %374 : vector<16xf32> to vector<16x1xf32>
    %cst_152 = arith.constant 1.600000e+01 : f32
    %376 = vector.broadcast %cst_152 : f32 to vector<16x1xf32>
    %377 = arith.divf %375, %376 : vector<16x1xf32>
    %cst_153 = arith.constant 9.99999974E-6 : f32
    %378 = vector.broadcast %cst_153 : f32 to vector<16x1xf32>
    %379 = arith.addf %377, %378 : vector<16x1xf32>
    %380 = math.rsqrt %379 : vector<16x1xf32>
    %381 = arith.mulf %365, %380 : vector<16x1xf32>
    %382 = vector.broadcast %381 : vector<16x1xf32> to vector<16x16xf32>
    %383 = arith.mulf %372, %382 : vector<16x16xf32>
    %384 = vector.broadcast %366 : vector<16x1xf32> to vector<16x16xf32>
    %385 = arith.addf %383, %384 : vector<16x16xf32>
    %cst_154 = arith.constant 0.000000e+00 : f32
    %386 = vector.broadcast %cst_154 : f32 to vector<16x16xf32>
    %387 = arith.maximumf %385, %386 : vector<16x16xf32>
    %c760 = arith.constant 760 : index
    %c0_155 = arith.constant 0 : index
    %388 = vector.load %arg1[%c760, %c0_155] : memref<1312x128xf32, #tpu.memory_space<vmem>>, vector<48x16xf32>
    %389 = arith.truncf %388 : vector<48x16xf32> to vector<48x16xbf16>
    %390 = arith.truncf %387 : vector<16x16xf32> to vector<16x16xbf16>
    %cst_156 = arith.constant dense<0.000000e+00> : vector<48x16xf32>
    %391 = tpu.matmul %389, %390, %cst_156 {dimension_numbers = #tpu.dot_dimension_numbers<[1], [0], [0], [1], [0, 0, 1, 1], [], []>} : vector<48x16xbf16>, vector<16x16xbf16>, vector<48x16xf32> -> vector<48x16xf32>
    %392 = vector.extract_strided_slice %391 {offsets = [0, 0], sizes = [16, 16], strides = [1, 1]} : vector<48x16xf32> to vector<16x16xf32>
    %393 = arith.truncf %392 : vector<16x16xf32> to vector<16x16xbf16>
    %c472_157 = arith.constant 472 : index
    %c0_158 = arith.constant 0 : index
    %394 = vector.load %arg1[%c472_157, %c0_158] : memref<1312x128xf32, #tpu.memory_space<vmem>>, vector<16x16xf32>
    %395 = arith.truncf %394 : vector<16x16xf32> to vector<16x16xbf16>
    %cst_159 = arith.constant dense<0.000000e+00> : vector<16x16xf32>
    %396 = tpu.matmul %393, %395, %cst_159 {dimension_numbers = #tpu.dot_dimension_numbers<[1], [0], [0], [1], [0, 0, 1, 1], [], []>} : vector<16x16xbf16>, vector<16x16xbf16>, vector<16x16xf32> -> vector<16x16xf32>
    %397 = vector.extract_strided_slice %391 {offsets = [16, 0], sizes = [16, 16], strides = [1, 1]} : vector<48x16xf32> to vector<16x16xf32>
    %398 = arith.truncf %397 : vector<16x16xf32> to vector<16x16xbf16>
    %c488_160 = arith.constant 488 : index
    %c0_161 = arith.constant 0 : index
    %399 = vector.load %arg1[%c488_160, %c0_161] : memref<1312x128xf32, #tpu.memory_space<vmem>>, vector<16x16xf32>
    %400 = arith.truncf %399 : vector<16x16xf32> to vector<16x16xbf16>
    %cst_162 = arith.constant dense<0.000000e+00> : vector<16x16xf32>
    %401 = tpu.matmul %398, %400, %cst_162 {dimension_numbers = #tpu.dot_dimension_numbers<[1], [0], [0], [1], [0, 0, 1, 1], [], []>} : vector<16x16xbf16>, vector<16x16xbf16>, vector<16x16xf32> -> vector<16x16xf32>
    %402 = arith.addf %396, %401 : vector<16x16xf32>
    %403 = vector.extract_strided_slice %391 {offsets = [32, 0], sizes = [16, 16], strides = [1, 1]} : vector<48x16xf32> to vector<16x16xf32>
    %404 = arith.truncf %403 : vector<16x16xf32> to vector<16x16xbf16>
    %c504_163 = arith.constant 504 : index
    %c0_164 = arith.constant 0 : index
    %405 = vector.load %arg1[%c504_163, %c0_164] : memref<1312x128xf32, #tpu.memory_space<vmem>>, vector<16x16xf32>
    %406 = arith.truncf %405 : vector<16x16xf32> to vector<16x16xbf16>
    %cst_165 = arith.constant dense<0.000000e+00> : vector<16x16xf32>
    %407 = tpu.matmul %404, %406, %cst_165 {dimension_numbers = #tpu.dot_dimension_numbers<[1], [0], [0], [1], [0, 0, 1, 1], [], []>} : vector<16x16xbf16>, vector<16x16xbf16>, vector<16x16xf32> -> vector<16x16xf32>
    %408 = arith.addf %402, %407 : vector<16x16xf32>
    %c808 = arith.constant 808 : index
    %c0_166 = arith.constant 0 : index
    %409 = vector.load %arg1[%c808, %c0_166] : memref<1312x128xf32, #tpu.memory_space<vmem>>, vector<16x1xf32>
    %c824 = arith.constant 824 : index
    %c0_167 = arith.constant 0 : index
    %410 = vector.load %arg1[%c824, %c0_167] : memref<1312x128xf32, #tpu.memory_space<vmem>>, vector<16x1xf32>
    %cst_168 = arith.constant dense<0.000000e+00> : vector<16xf32>
    %411 = vector.multi_reduction <add>, %408, %cst_168 [1] : vector<16x16xf32> to vector<16xf32>
    %412 = vector.shape_cast %411 : vector<16xf32> to vector<16x1xf32>
    %cst_169 = arith.constant 1.600000e+01 : f32
    %413 = vector.broadcast %cst_169 : f32 to vector<16x1xf32>
    %414 = arith.divf %412, %413 : vector<16x1xf32>
    %415 = vector.broadcast %414 : vector<16x1xf32> to vector<16x16xf32>
    %416 = arith.subf %408, %415 : vector<16x16xf32>
    %417 = arith.mulf %416, %416 : vector<16x16xf32>
    %cst_170 = arith.constant dense<0.000000e+00> : vector<16xf32>
    %418 = vector.multi_reduction <add>, %417, %cst_170 [1] : vector<16x16xf32> to vector<16xf32>
    %419 = vector.shape_cast %418 : vector<16xf32> to vector<16x1xf32>
    %cst_171 = arith.constant 1.600000e+01 : f32
    %420 = vector.broadcast %cst_171 : f32 to vector<16x1xf32>
    %421 = arith.divf %419, %420 : vector<16x1xf32>
    %cst_172 = arith.constant 9.99999974E-6 : f32
    %422 = vector.broadcast %cst_172 : f32 to vector<16x1xf32>
    %423 = arith.addf %421, %422 : vector<16x1xf32>
    %424 = math.rsqrt %423 : vector<16x1xf32>
    %425 = arith.mulf %409, %424 : vector<16x1xf32>
    %426 = vector.broadcast %425 : vector<16x1xf32> to vector<16x16xf32>
    %427 = arith.mulf %416, %426 : vector<16x16xf32>
    %428 = vector.broadcast %410 : vector<16x1xf32> to vector<16x16xf32>
    %429 = arith.addf %427, %428 : vector<16x16xf32>
    %430 = arith.addf %429, %343 : vector<16x16xf32>
    %cst_173 = arith.constant 0.000000e+00 : f32
    %431 = vector.broadcast %cst_173 : f32 to vector<16x16xf32>
    %432 = arith.maximumf %430, %431 : vector<16x16xf32>
    %c888 = arith.constant 888 : index
    %c0_174 = arith.constant 0 : index
    %433 = vector.load %arg1[%c888, %c0_174] : memref<1312x128xf32, #tpu.memory_space<vmem>>, vector<48x16xf32>
    %434 = arith.truncf %433 : vector<48x16xf32> to vector<48x16xbf16>
    %435 = arith.truncf %432 : vector<16x16xf32> to vector<16x16xbf16>
    %cst_175 = arith.constant dense<0.000000e+00> : vector<48x16xf32>
    %436 = tpu.matmul %434, %435, %cst_175 {dimension_numbers = #tpu.dot_dimension_numbers<[1], [0], [0], [1], [0, 0, 1, 1], [], []>} : vector<48x16xbf16>, vector<16x16xbf16>, vector<48x16xf32> -> vector<48x16xf32>
    %437 = vector.extract_strided_slice %436 {offsets = [0, 0], sizes = [16, 16], strides = [1, 1]} : vector<48x16xf32> to vector<16x16xf32>
    %438 = arith.truncf %437 : vector<16x16xf32> to vector<16x16xbf16>
    %c840 = arith.constant 840 : index
    %c0_176 = arith.constant 0 : index
    %439 = vector.load %arg1[%c840, %c0_176] : memref<1312x128xf32, #tpu.memory_space<vmem>>, vector<16x8xf32>
    %440 = arith.truncf %439 : vector<16x8xf32> to vector<16x8xbf16>
    %cst_177 = arith.constant dense<0.000000e+00> : vector<16x8xf32>
    %441 = tpu.matmul %438, %440, %cst_177 {dimension_numbers = #tpu.dot_dimension_numbers<[1], [0], [0], [1], [0, 0, 1, 1], [], []>} : vector<16x16xbf16>, vector<16x8xbf16>, vector<16x8xf32> -> vector<16x8xf32>
    %442 = vector.extract_strided_slice %436 {offsets = [16, 0], sizes = [16, 16], strides = [1, 1]} : vector<48x16xf32> to vector<16x16xf32>
    %443 = arith.truncf %442 : vector<16x16xf32> to vector<16x16xbf16>
    %c856 = arith.constant 856 : index
    %c0_178 = arith.constant 0 : index
    %444 = vector.load %arg1[%c856, %c0_178] : memref<1312x128xf32, #tpu.memory_space<vmem>>, vector<16x8xf32>
    %445 = arith.truncf %444 : vector<16x8xf32> to vector<16x8xbf16>
    %cst_179 = arith.constant dense<0.000000e+00> : vector<16x8xf32>
    %446 = tpu.matmul %443, %445, %cst_179 {dimension_numbers = #tpu.dot_dimension_numbers<[1], [0], [0], [1], [0, 0, 1, 1], [], []>} : vector<16x16xbf16>, vector<16x8xbf16>, vector<16x8xf32> -> vector<16x8xf32>
    %447 = arith.addf %441, %446 : vector<16x8xf32>
    %448 = vector.extract_strided_slice %436 {offsets = [32, 0], sizes = [16, 16], strides = [1, 1]} : vector<48x16xf32> to vector<16x16xf32>
    %449 = arith.truncf %448 : vector<16x16xf32> to vector<16x16xbf16>
    %c872 = arith.constant 872 : index
    %c0_180 = arith.constant 0 : index
    %450 = vector.load %arg1[%c872, %c0_180] : memref<1312x128xf32, #tpu.memory_space<vmem>>, vector<16x8xf32>
    %451 = arith.truncf %450 : vector<16x8xf32> to vector<16x8xbf16>
    %cst_181 = arith.constant dense<0.000000e+00> : vector<16x8xf32>
    %452 = tpu.matmul %449, %451, %cst_181 {dimension_numbers = #tpu.dot_dimension_numbers<[1], [0], [0], [1], [0, 0, 1, 1], [], []>} : vector<16x16xbf16>, vector<16x8xbf16>, vector<16x8xf32> -> vector<16x8xf32>
    %453 = arith.addf %447, %452 : vector<16x8xf32>
    %c936 = arith.constant 936 : index
    %c0_182 = arith.constant 0 : index
    %454 = vector.load %arg1[%c936, %c0_182] : memref<1312x128xf32, #tpu.memory_space<vmem>>, vector<16x1xf32>
    %c952 = arith.constant 952 : index
    %c0_183 = arith.constant 0 : index
    %455 = vector.load %arg1[%c952, %c0_183] : memref<1312x128xf32, #tpu.memory_space<vmem>>, vector<16x1xf32>
    %cst_184 = arith.constant dense<0.000000e+00> : vector<16xf32>
    %456 = vector.multi_reduction <add>, %453, %cst_184 [1] : vector<16x8xf32> to vector<16xf32>
    %457 = vector.shape_cast %456 : vector<16xf32> to vector<16x1xf32>
    %cst_185 = arith.constant 8.000000e+00 : f32
    %458 = vector.broadcast %cst_185 : f32 to vector<16x1xf32>
    %459 = arith.divf %457, %458 : vector<16x1xf32>
    %460 = vector.broadcast %459 : vector<16x1xf32> to vector<16x8xf32>
    %461 = arith.subf %453, %460 : vector<16x8xf32>
    %462 = arith.mulf %461, %461 : vector<16x8xf32>
    %cst_186 = arith.constant dense<0.000000e+00> : vector<16xf32>
    %463 = vector.multi_reduction <add>, %462, %cst_186 [1] : vector<16x8xf32> to vector<16xf32>
    %464 = vector.shape_cast %463 : vector<16xf32> to vector<16x1xf32>
    %cst_187 = arith.constant 8.000000e+00 : f32
    %465 = vector.broadcast %cst_187 : f32 to vector<16x1xf32>
    %466 = arith.divf %464, %465 : vector<16x1xf32>
    %cst_188 = arith.constant 9.99999974E-6 : f32
    %467 = vector.broadcast %cst_188 : f32 to vector<16x1xf32>
    %468 = arith.addf %466, %467 : vector<16x1xf32>
    %469 = math.rsqrt %468 : vector<16x1xf32>
    %470 = arith.mulf %454, %469 : vector<16x1xf32>
    %471 = vector.broadcast %470 : vector<16x1xf32> to vector<16x8xf32>
    %472 = arith.mulf %461, %471 : vector<16x8xf32>
    %473 = vector.broadcast %455 : vector<16x1xf32> to vector<16x8xf32>
    %474 = arith.addf %472, %473 : vector<16x8xf32>
    %cst_189 = arith.constant 0.000000e+00 : f32
    %475 = vector.broadcast %cst_189 : f32 to vector<16x8xf32>
    %476 = arith.maximumf %474, %475 : vector<16x8xf32>
    %c992 = arith.constant 992 : index
    %c0_190 = arith.constant 0 : index
    %477 = vector.load %arg1[%c992, %c0_190] : memref<1312x128xf32, #tpu.memory_space<vmem>>, vector<48x16xf32>
    %478 = arith.truncf %477 : vector<48x16xf32> to vector<48x16xbf16>
    %479 = arith.truncf %476 : vector<16x8xf32> to vector<16x8xbf16>
    %cst_191 = arith.constant dense<0.000000e+00> : vector<48x8xf32>
    %480 = tpu.matmul %478, %479, %cst_191 {dimension_numbers = #tpu.dot_dimension_numbers<[1], [0], [0], [1], [0, 0, 1, 1], [], []>} : vector<48x16xbf16>, vector<16x8xbf16>, vector<48x8xf32> -> vector<48x8xf32>
    %481 = vector.extract_strided_slice %480 {offsets = [0, 0], sizes = [16, 8], strides = [1, 1]} : vector<48x8xf32> to vector<16x8xf32>
    %482 = arith.truncf %481 : vector<16x8xf32> to vector<16x8xbf16>
    %c968 = arith.constant 968 : index
    %c0_192 = arith.constant 0 : index
    %483 = vector.load %arg1[%c968, %c0_192] : memref<1312x128xf32, #tpu.memory_space<vmem>>, vector<8x8xf32>
    %484 = arith.truncf %483 : vector<8x8xf32> to vector<8x8xbf16>
    %cst_193 = arith.constant dense<0.000000e+00> : vector<16x8xf32>
    %485 = tpu.matmul %482, %484, %cst_193 {dimension_numbers = #tpu.dot_dimension_numbers<[1], [0], [0], [1], [0, 0, 1, 1], [], []>} : vector<16x8xbf16>, vector<8x8xbf16>, vector<16x8xf32> -> vector<16x8xf32>
    %486 = vector.extract_strided_slice %480 {offsets = [16, 0], sizes = [16, 8], strides = [1, 1]} : vector<48x8xf32> to vector<16x8xf32>
    %487 = arith.truncf %486 : vector<16x8xf32> to vector<16x8xbf16>
    %c976 = arith.constant 976 : index
    %c0_194 = arith.constant 0 : index
    %488 = vector.load %arg1[%c976, %c0_194] : memref<1312x128xf32, #tpu.memory_space<vmem>>, vector<8x8xf32>
    %489 = arith.truncf %488 : vector<8x8xf32> to vector<8x8xbf16>
    %cst_195 = arith.constant dense<0.000000e+00> : vector<16x8xf32>
    %490 = tpu.matmul %487, %489, %cst_195 {dimension_numbers = #tpu.dot_dimension_numbers<[1], [0], [0], [1], [0, 0, 1, 1], [], []>} : vector<16x8xbf16>, vector<8x8xbf16>, vector<16x8xf32> -> vector<16x8xf32>
    %491 = arith.addf %485, %490 : vector<16x8xf32>
    %492 = vector.extract_strided_slice %480 {offsets = [32, 0], sizes = [16, 8], strides = [1, 1]} : vector<48x8xf32> to vector<16x8xf32>
    %493 = arith.truncf %492 : vector<16x8xf32> to vector<16x8xbf16>
    %c984 = arith.constant 984 : index
    %c0_196 = arith.constant 0 : index
    %494 = vector.load %arg1[%c984, %c0_196] : memref<1312x128xf32, #tpu.memory_space<vmem>>, vector<8x8xf32>
    %495 = arith.truncf %494 : vector<8x8xf32> to vector<8x8xbf16>
    %cst_197 = arith.constant dense<0.000000e+00> : vector<16x8xf32>
    %496 = tpu.matmul %493, %495, %cst_197 {dimension_numbers = #tpu.dot_dimension_numbers<[1], [0], [0], [1], [0, 0, 1, 1], [], []>} : vector<16x8xbf16>, vector<8x8xbf16>, vector<16x8xf32> -> vector<16x8xf32>
    %497 = arith.addf %491, %496 : vector<16x8xf32>
    %c1040 = arith.constant 1040 : index
    %c0_198 = arith.constant 0 : index
    %498 = vector.load %arg1[%c1040, %c0_198] : memref<1312x128xf32, #tpu.memory_space<vmem>>, vector<16x1xf32>
    %c1056 = arith.constant 1056 : index
    %c0_199 = arith.constant 0 : index
    %499 = vector.load %arg1[%c1056, %c0_199] : memref<1312x128xf32, #tpu.memory_space<vmem>>, vector<16x1xf32>
    %cst_200 = arith.constant dense<0.000000e+00> : vector<16xf32>
    %500 = vector.multi_reduction <add>, %497, %cst_200 [1] : vector<16x8xf32> to vector<16xf32>
    %501 = vector.shape_cast %500 : vector<16xf32> to vector<16x1xf32>
    %cst_201 = arith.constant 8.000000e+00 : f32
    %502 = vector.broadcast %cst_201 : f32 to vector<16x1xf32>
    %503 = arith.divf %501, %502 : vector<16x1xf32>
    %504 = vector.broadcast %503 : vector<16x1xf32> to vector<16x8xf32>
    %505 = arith.subf %497, %504 : vector<16x8xf32>
    %506 = arith.mulf %505, %505 : vector<16x8xf32>
    %cst_202 = arith.constant dense<0.000000e+00> : vector<16xf32>
    %507 = vector.multi_reduction <add>, %506, %cst_202 [1] : vector<16x8xf32> to vector<16xf32>
    %508 = vector.shape_cast %507 : vector<16xf32> to vector<16x1xf32>
    %cst_203 = arith.constant 8.000000e+00 : f32
    %509 = vector.broadcast %cst_203 : f32 to vector<16x1xf32>
    %510 = arith.divf %508, %509 : vector<16x1xf32>
    %cst_204 = arith.constant 9.99999974E-6 : f32
    %511 = vector.broadcast %cst_204 : f32 to vector<16x1xf32>
    %512 = arith.addf %510, %511 : vector<16x1xf32>
    %513 = math.rsqrt %512 : vector<16x1xf32>
    %514 = arith.mulf %498, %513 : vector<16x1xf32>
    %515 = vector.broadcast %514 : vector<16x1xf32> to vector<16x8xf32>
    %516 = arith.mulf %505, %515 : vector<16x8xf32>
    %517 = vector.broadcast %499 : vector<16x1xf32> to vector<16x8xf32>
    %518 = arith.addf %516, %517 : vector<16x8xf32>
    %c1088 = arith.constant 1088 : index
    %c0_205 = arith.constant 0 : index
    %519 = vector.load %arg1[%c1088, %c0_205] : memref<1312x128xf32, #tpu.memory_space<vmem>>, vector<16x16xf32>
    %520 = arith.truncf %519 : vector<16x16xf32> to vector<16x16xbf16>
    %521 = arith.truncf %432 : vector<16x16xf32> to vector<16x16xbf16>
    %cst_206 = arith.constant dense<0.000000e+00> : vector<16x16xf32>
    %522 = tpu.matmul %520, %521, %cst_206 {dimension_numbers = #tpu.dot_dimension_numbers<[1], [0], [0], [1], [0, 0, 1, 1], [], []>} : vector<16x16xbf16>, vector<16x16xbf16>, vector<16x16xf32> -> vector<16x16xf32>
    %523 = arith.truncf %522 : vector<16x16xf32> to vector<16x16xbf16>
    %c1072 = arith.constant 1072 : index
    %c0_207 = arith.constant 0 : index
    %524 = vector.load %arg1[%c1072, %c0_207] : memref<1312x128xf32, #tpu.memory_space<vmem>>, vector<16x8xf32>
    %525 = arith.truncf %524 : vector<16x8xf32> to vector<16x8xbf16>
    %cst_208 = arith.constant dense<0.000000e+00> : vector<16x8xf32>
    %526 = tpu.matmul %523, %525, %cst_208 {dimension_numbers = #tpu.dot_dimension_numbers<[1], [0], [0], [1], [0, 0, 1, 1], [], []>} : vector<16x16xbf16>, vector<16x8xbf16>, vector<16x8xf32> -> vector<16x8xf32>
    %c1104 = arith.constant 1104 : index
    %c0_209 = arith.constant 0 : index
    %527 = vector.load %arg1[%c1104, %c0_209] : memref<1312x128xf32, #tpu.memory_space<vmem>>, vector<16x1xf32>
    %c1120 = arith.constant 1120 : index
    %c0_210 = arith.constant 0 : index
    %528 = vector.load %arg1[%c1120, %c0_210] : memref<1312x128xf32, #tpu.memory_space<vmem>>, vector<16x1xf32>
    %cst_211 = arith.constant dense<0.000000e+00> : vector<16xf32>
    %529 = vector.multi_reduction <add>, %526, %cst_211 [1] : vector<16x8xf32> to vector<16xf32>
    %530 = vector.shape_cast %529 : vector<16xf32> to vector<16x1xf32>
    %cst_212 = arith.constant 8.000000e+00 : f32
    %531 = vector.broadcast %cst_212 : f32 to vector<16x1xf32>
    %532 = arith.divf %530, %531 : vector<16x1xf32>
    %533 = vector.broadcast %532 : vector<16x1xf32> to vector<16x8xf32>
    %534 = arith.subf %526, %533 : vector<16x8xf32>
    %535 = arith.mulf %534, %534 : vector<16x8xf32>
    %cst_213 = arith.constant dense<0.000000e+00> : vector<16xf32>
    %536 = vector.multi_reduction <add>, %535, %cst_213 [1] : vector<16x8xf32> to vector<16xf32>
    %537 = vector.shape_cast %536 : vector<16xf32> to vector<16x1xf32>
    %cst_214 = arith.constant 8.000000e+00 : f32
    %538 = vector.broadcast %cst_214 : f32 to vector<16x1xf32>
    %539 = arith.divf %537, %538 : vector<16x1xf32>
    %cst_215 = arith.constant 9.99999974E-6 : f32
    %540 = vector.broadcast %cst_215 : f32 to vector<16x1xf32>
    %541 = arith.addf %539, %540 : vector<16x1xf32>
    %542 = math.rsqrt %541 : vector<16x1xf32>
    %543 = arith.mulf %527, %542 : vector<16x1xf32>
    %544 = vector.broadcast %543 : vector<16x1xf32> to vector<16x8xf32>
    %545 = arith.mulf %534, %544 : vector<16x8xf32>
    %546 = vector.broadcast %528 : vector<16x1xf32> to vector<16x8xf32>
    %547 = arith.addf %545, %546 : vector<16x8xf32>
    %548 = arith.addf %518, %547 : vector<16x8xf32>
    %cst_216 = arith.constant 0.000000e+00 : f32
    %549 = vector.broadcast %cst_216 : f32 to vector<16x8xf32>
    %550 = arith.maximumf %548, %549 : vector<16x8xf32>
    %c1136 = arith.constant 1136 : index
    %c0_217 = arith.constant 0 : index
    %551 = vector.load %arg1[%c1136, %c0_217] : memref<1312x128xf32, #tpu.memory_space<vmem>>, vector<48x16xf32>
    %552 = arith.truncf %551 : vector<48x16xf32> to vector<48x16xbf16>
    %553 = arith.truncf %550 : vector<16x8xf32> to vector<16x8xbf16>
    %cst_218 = arith.constant dense<0.000000e+00> : vector<48x8xf32>
    %554 = tpu.matmul %552, %553, %cst_218 {dimension_numbers = #tpu.dot_dimension_numbers<[1], [0], [0], [1], [0, 0, 1, 1], [], []>} : vector<48x16xbf16>, vector<16x8xbf16>, vector<48x8xf32> -> vector<48x8xf32>
    %555 = vector.extract_strided_slice %554 {offsets = [0, 0], sizes = [16, 8], strides = [1, 1]} : vector<48x8xf32> to vector<16x8xf32>
    %556 = arith.truncf %555 : vector<16x8xf32> to vector<16x8xbf16>
    %c968_219 = arith.constant 968 : index
    %c0_220 = arith.constant 0 : index
    %557 = vector.load %arg1[%c968_219, %c0_220] : memref<1312x128xf32, #tpu.memory_space<vmem>>, vector<8x8xf32>
    %558 = arith.truncf %557 : vector<8x8xf32> to vector<8x8xbf16>
    %cst_221 = arith.constant dense<0.000000e+00> : vector<16x8xf32>
    %559 = tpu.matmul %556, %558, %cst_221 {dimension_numbers = #tpu.dot_dimension_numbers<[1], [0], [0], [1], [0, 0, 1, 1], [], []>} : vector<16x8xbf16>, vector<8x8xbf16>, vector<16x8xf32> -> vector<16x8xf32>
    %560 = vector.extract_strided_slice %554 {offsets = [16, 0], sizes = [16, 8], strides = [1, 1]} : vector<48x8xf32> to vector<16x8xf32>
    %561 = arith.truncf %560 : vector<16x8xf32> to vector<16x8xbf16>
    %c976_222 = arith.constant 976 : index
    %c0_223 = arith.constant 0 : index
    %562 = vector.load %arg1[%c976_222, %c0_223] : memref<1312x128xf32, #tpu.memory_space<vmem>>, vector<8x8xf32>
    %563 = arith.truncf %562 : vector<8x8xf32> to vector<8x8xbf16>
    %cst_224 = arith.constant dense<0.000000e+00> : vector<16x8xf32>
    %564 = tpu.matmul %561, %563, %cst_224 {dimension_numbers = #tpu.dot_dimension_numbers<[1], [0], [0], [1], [0, 0, 1, 1], [], []>} : vector<16x8xbf16>, vector<8x8xbf16>, vector<16x8xf32> -> vector<16x8xf32>
    %565 = arith.addf %559, %564 : vector<16x8xf32>
    %566 = vector.extract_strided_slice %554 {offsets = [32, 0], sizes = [16, 8], strides = [1, 1]} : vector<48x8xf32> to vector<16x8xf32>
    %567 = arith.truncf %566 : vector<16x8xf32> to vector<16x8xbf16>
    %c984_225 = arith.constant 984 : index
    %c0_226 = arith.constant 0 : index
    %568 = vector.load %arg1[%c984_225, %c0_226] : memref<1312x128xf32, #tpu.memory_space<vmem>>, vector<8x8xf32>
    %569 = arith.truncf %568 : vector<8x8xf32> to vector<8x8xbf16>
    %cst_227 = arith.constant dense<0.000000e+00> : vector<16x8xf32>
    %570 = tpu.matmul %567, %569, %cst_227 {dimension_numbers = #tpu.dot_dimension_numbers<[1], [0], [0], [1], [0, 0, 1, 1], [], []>} : vector<16x8xbf16>, vector<8x8xbf16>, vector<16x8xf32> -> vector<16x8xf32>
    %571 = arith.addf %565, %570 : vector<16x8xf32>
    %c1184 = arith.constant 1184 : index
    %c0_228 = arith.constant 0 : index
    %572 = vector.load %arg1[%c1184, %c0_228] : memref<1312x128xf32, #tpu.memory_space<vmem>>, vector<16x1xf32>
    %c1200 = arith.constant 1200 : index
    %c0_229 = arith.constant 0 : index
    %573 = vector.load %arg1[%c1200, %c0_229] : memref<1312x128xf32, #tpu.memory_space<vmem>>, vector<16x1xf32>
    %cst_230 = arith.constant dense<0.000000e+00> : vector<16xf32>
    %574 = vector.multi_reduction <add>, %571, %cst_230 [1] : vector<16x8xf32> to vector<16xf32>
    %575 = vector.shape_cast %574 : vector<16xf32> to vector<16x1xf32>
    %cst_231 = arith.constant 8.000000e+00 : f32
    %576 = vector.broadcast %cst_231 : f32 to vector<16x1xf32>
    %577 = arith.divf %575, %576 : vector<16x1xf32>
    %578 = vector.broadcast %577 : vector<16x1xf32> to vector<16x8xf32>
    %579 = arith.subf %571, %578 : vector<16x8xf32>
    %580 = arith.mulf %579, %579 : vector<16x8xf32>
    %cst_232 = arith.constant dense<0.000000e+00> : vector<16xf32>
    %581 = vector.multi_reduction <add>, %580, %cst_232 [1] : vector<16x8xf32> to vector<16xf32>
    %582 = vector.shape_cast %581 : vector<16xf32> to vector<16x1xf32>
    %cst_233 = arith.constant 8.000000e+00 : f32
    %583 = vector.broadcast %cst_233 : f32 to vector<16x1xf32>
    %584 = arith.divf %582, %583 : vector<16x1xf32>
    %cst_234 = arith.constant 9.99999974E-6 : f32
    %585 = vector.broadcast %cst_234 : f32 to vector<16x1xf32>
    %586 = arith.addf %584, %585 : vector<16x1xf32>
    %587 = math.rsqrt %586 : vector<16x1xf32>
    %588 = arith.mulf %572, %587 : vector<16x1xf32>
    %589 = vector.broadcast %588 : vector<16x1xf32> to vector<16x8xf32>
    %590 = arith.mulf %579, %589 : vector<16x8xf32>
    %591 = vector.broadcast %573 : vector<16x1xf32> to vector<16x8xf32>
    %592 = arith.addf %590, %591 : vector<16x8xf32>
    %cst_235 = arith.constant 0.000000e+00 : f32
    %593 = vector.broadcast %cst_235 : f32 to vector<16x8xf32>
    %594 = arith.maximumf %592, %593 : vector<16x8xf32>
    %c1216 = arith.constant 1216 : index
    %c0_236 = arith.constant 0 : index
    %595 = vector.load %arg1[%c1216, %c0_236] : memref<1312x128xf32, #tpu.memory_space<vmem>>, vector<48x16xf32>
    %596 = arith.truncf %595 : vector<48x16xf32> to vector<48x16xbf16>
    %597 = arith.truncf %594 : vector<16x8xf32> to vector<16x8xbf16>
    %cst_237 = arith.constant dense<0.000000e+00> : vector<48x8xf32>
    %598 = tpu.matmul %596, %597, %cst_237 {dimension_numbers = #tpu.dot_dimension_numbers<[1], [0], [0], [1], [0, 0, 1, 1], [], []>} : vector<48x16xbf16>, vector<16x8xbf16>, vector<48x8xf32> -> vector<48x8xf32>
    %599 = vector.extract_strided_slice %598 {offsets = [0, 0], sizes = [16, 8], strides = [1, 1]} : vector<48x8xf32> to vector<16x8xf32>
    %600 = arith.truncf %599 : vector<16x8xf32> to vector<16x8xbf16>
    %c968_238 = arith.constant 968 : index
    %c0_239 = arith.constant 0 : index
    %601 = vector.load %arg1[%c968_238, %c0_239] : memref<1312x128xf32, #tpu.memory_space<vmem>>, vector<8x8xf32>
    %602 = arith.truncf %601 : vector<8x8xf32> to vector<8x8xbf16>
    %cst_240 = arith.constant dense<0.000000e+00> : vector<16x8xf32>
    %603 = tpu.matmul %600, %602, %cst_240 {dimension_numbers = #tpu.dot_dimension_numbers<[1], [0], [0], [1], [0, 0, 1, 1], [], []>} : vector<16x8xbf16>, vector<8x8xbf16>, vector<16x8xf32> -> vector<16x8xf32>
    %604 = vector.extract_strided_slice %598 {offsets = [16, 0], sizes = [16, 8], strides = [1, 1]} : vector<48x8xf32> to vector<16x8xf32>
    %605 = arith.truncf %604 : vector<16x8xf32> to vector<16x8xbf16>
    %c976_241 = arith.constant 976 : index
    %c0_242 = arith.constant 0 : index
    %606 = vector.load %arg1[%c976_241, %c0_242] : memref<1312x128xf32, #tpu.memory_space<vmem>>, vector<8x8xf32>
    %607 = arith.truncf %606 : vector<8x8xf32> to vector<8x8xbf16>
    %cst_243 = arith.constant dense<0.000000e+00> : vector<16x8xf32>
    %608 = tpu.matmul %605, %607, %cst_243 {dimension_numbers = #tpu.dot_dimension_numbers<[1], [0], [0], [1], [0, 0, 1, 1], [], []>} : vector<16x8xbf16>, vector<8x8xbf16>, vector<16x8xf32> -> vector<16x8xf32>
    %609 = arith.addf %603, %608 : vector<16x8xf32>
    %610 = vector.extract_strided_slice %598 {offsets = [32, 0], sizes = [16, 8], strides = [1, 1]} : vector<48x8xf32> to vector<16x8xf32>
    %611 = arith.truncf %610 : vector<16x8xf32> to vector<16x8xbf16>
    %c984_244 = arith.constant 984 : index
    %c0_245 = arith.constant 0 : index
    %612 = vector.load %arg1[%c984_244, %c0_245] : memref<1312x128xf32, #tpu.memory_space<vmem>>, vector<8x8xf32>
    %613 = arith.truncf %612 : vector<8x8xf32> to vector<8x8xbf16>
    %cst_246 = arith.constant dense<0.000000e+00> : vector<16x8xf32>
    %614 = tpu.matmul %611, %613, %cst_246 {dimension_numbers = #tpu.dot_dimension_numbers<[1], [0], [0], [1], [0, 0, 1, 1], [], []>} : vector<16x8xbf16>, vector<8x8xbf16>, vector<16x8xf32> -> vector<16x8xf32>
    %615 = arith.addf %609, %614 : vector<16x8xf32>
    %c1264 = arith.constant 1264 : index
    %c0_247 = arith.constant 0 : index
    %616 = vector.load %arg1[%c1264, %c0_247] : memref<1312x128xf32, #tpu.memory_space<vmem>>, vector<16x1xf32>
    %c1280 = arith.constant 1280 : index
    %c0_248 = arith.constant 0 : index
    %617 = vector.load %arg1[%c1280, %c0_248] : memref<1312x128xf32, #tpu.memory_space<vmem>>, vector<16x1xf32>
    %cst_249 = arith.constant dense<0.000000e+00> : vector<16xf32>
    %618 = vector.multi_reduction <add>, %615, %cst_249 [1] : vector<16x8xf32> to vector<16xf32>
    %619 = vector.shape_cast %618 : vector<16xf32> to vector<16x1xf32>
    %cst_250 = arith.constant 8.000000e+00 : f32
    %620 = vector.broadcast %cst_250 : f32 to vector<16x1xf32>
    %621 = arith.divf %619, %620 : vector<16x1xf32>
    %622 = vector.broadcast %621 : vector<16x1xf32> to vector<16x8xf32>
    %623 = arith.subf %615, %622 : vector<16x8xf32>
    %624 = arith.mulf %623, %623 : vector<16x8xf32>
    %cst_251 = arith.constant dense<0.000000e+00> : vector<16xf32>
    %625 = vector.multi_reduction <add>, %624, %cst_251 [1] : vector<16x8xf32> to vector<16xf32>
    %626 = vector.shape_cast %625 : vector<16xf32> to vector<16x1xf32>
    %cst_252 = arith.constant 8.000000e+00 : f32
    %627 = vector.broadcast %cst_252 : f32 to vector<16x1xf32>
    %628 = arith.divf %626, %627 : vector<16x1xf32>
    %cst_253 = arith.constant 9.99999974E-6 : f32
    %629 = vector.broadcast %cst_253 : f32 to vector<16x1xf32>
    %630 = arith.addf %628, %629 : vector<16x1xf32>
    %631 = math.rsqrt %630 : vector<16x1xf32>
    %632 = arith.mulf %616, %631 : vector<16x1xf32>
    %633 = vector.broadcast %632 : vector<16x1xf32> to vector<16x8xf32>
    %634 = arith.mulf %623, %633 : vector<16x8xf32>
    %635 = vector.broadcast %617 : vector<16x1xf32> to vector<16x8xf32>
    %636 = arith.addf %634, %635 : vector<16x8xf32>
    %637 = arith.addf %636, %550 : vector<16x8xf32>
    %cst_254 = arith.constant 0.000000e+00 : f32
    %638 = vector.broadcast %cst_254 : f32 to vector<16x8xf32>
    %639 = arith.maximumf %637, %638 : vector<16x8xf32>
    %c1304 = arith.constant 1304 : index
    %c0_255 = arith.constant 0 : index
    %640 = vector.load %arg1[%c1304, %c0_255] : memref<1312x128xf32, #tpu.memory_space<vmem>>, vector<1x16xf32>
    %641 = arith.truncf %640 : vector<1x16xf32> to vector<1x16xbf16>
    %642 = arith.truncf %639 : vector<16x8xf32> to vector<16x8xbf16>
    %cst_256 = arith.constant dense<0.000000e+00> : vector<1x8xf32>
    %643 = tpu.matmul %641, %642, %cst_256 {dimension_numbers = #tpu.dot_dimension_numbers<[1], [0], [0], [1], [0, 0, 1, 1], [], []>} : vector<1x16xbf16>, vector<16x8xbf16>, vector<1x8xf32> -> vector<1x8xf32>
    %644 = arith.truncf %643 : vector<1x8xf32> to vector<1x8xbf16>
    %c1296 = arith.constant 1296 : index
    %c0_257 = arith.constant 0 : index
    %645 = vector.load %arg1[%c1296, %c0_257] : memref<1312x128xf32, #tpu.memory_space<vmem>>, vector<8x12xf32>
    %646 = arith.truncf %645 : vector<8x12xf32> to vector<8x12xbf16>
    %cst_258 = arith.constant dense<0.000000e+00> : vector<1x12xf32>
    %647 = tpu.matmul %644, %646, %cst_258 {dimension_numbers = #tpu.dot_dimension_numbers<[1], [0], [0], [1], [0, 0, 1, 1], [], []>} : vector<1x8xbf16>, vector<8x12xbf16>, vector<1x12xf32> -> vector<1x12xf32>
    %cst_259 = arith.constant 0.000000e+00 : f32
    %648 = vector.broadcast %cst_259 : f32 to vector<1x12xf32>
    %649 = arith.cmpf oge, %647, %648 : vector<1x12xf32>
    %cst_260 = arith.constant 0.00999999977 : f32
    %650 = vector.broadcast %cst_260 : f32 to vector<1x12xf32>
    %651 = arith.mulf %650, %647 : vector<1x12xf32>
    %652 = arith.select %649, %647, %651 : vector<1x12xi1>, vector<1x12xf32>
    %c0_261 = arith.constant 0 : index
    %c0_262 = arith.constant 0 : index
    %653 = vector.load %arg3[%c0_261, %c0_262] : memref<1x12xf32, #tpu.memory_space<vmem>>, vector<1x12xf32>
    tpu.vector_store %arg3[%c0_261, %c0_262], %652 {strides = array<i32>} : memref<1x12xf32, #tpu.memory_space<vmem>>, vector<1x12xf32>,
    return
  }
  func.func @transform_0(%arg0: i32) -> (i32, i32) {
    %c0_i32 = arith.constant 0 : i32
    %c0_i32_0 = arith.constant 0 : i32
    %c0_i32_1 = arith.constant 0 : i32
    return %c0_i32, %c0_i32_0 : i32, i32
  }
  func.func @transform_1(%arg0: i32) -> (i32, i32) {
    %c0_i32 = arith.constant 0 : i32
    %c0_i32_0 = arith.constant 0 : i32
    %c0_i32_1 = arith.constant 0 : i32
    return %c0_i32, %c0_i32_0 : i32, i32
  }
  func.func @transform_2(%arg0: i32) -> (i32, i32) {
    %c0_i32 = arith.constant 0 : i32
    %c0_i32_0 = arith.constant 0 : i32
    %c0_i32_1 = arith.constant 0 : i32
    return %c0_i32, %c0_i32_0 : i32, i32
  }
}

</mosaic_0001>

<llo_original>
// kernel: _lambda_.1
$region0: #{_lambda_.1}
  #allocation0 [shape = 'u32[]', space=smem, size = 0x4, offset = 0x4, fixed_abs, tag = 'smem constant byte address 0x4 - core index']
  #allocation1 [shape = 'u32[144,128]{1,0:T(1,128)}', space=vmem, size = 0x12000, scoped, tag = 'internal scratch']
  %s0 = inlined_call_operand.hbm [shape: f32[1312,128], index: 0, kind: input, shape index: {}]
  %s1 = inlined_call_operand.vmem [shape: f32[1,32], index: 1, kind: input, shape index: {}]
  %s2 = inlined_call_operand.vmem [shape: f32[1,12], index: 2, kind: output, shape index: {}]
  %s3 = sld [smem:[#allocation0]]
  $region22: #{_lambda_.1} parent=0
    _
  %s5 = ssub.s32 1, %s3
  %s6 = scalar_select 0, %s5, %s3
  $region1: #{_lambda_.1} parent=0
    #allocation2 [shape = 'u8[671744]{0}', space=vmem, size = 0xa4000, scoped, tag = 'input window, operand 0, single buffered']
    #allocation3 [shape = 's32[1]{0}', space=sflag, size = 0x4, scoped, tag = 'scoped memory for _lambda_.1']
    %7 = vsyncpa [#allocation3], 0
    // Predicated region
    $region2: #{_lambda_.1} parent=1 // pred_check
      _
    $region3: #{_lambda_.1} parent=1 // pred_check_branch
      %9 = sbr.rel (0) target = $region5
    $region4: #{_lambda_.1} parent=1 // pred_region
      %s11 = ssub.s32 20992, 20992
      %12 = vsyncadd [#allocation3], %s11
      %s13 = sshll.u32 [#allocation2], 4
      %s14 = int_to_ptr.vmem [resolvable:$true] %s13
      %19 = dma.hbm_to_vmem [thread:$0]  %s0, 20992, %s14, [#allocation3], 128, 128, 8
    $region5: #{_lambda_.1} parent=1 // pred_fallthru
      _
    // Predicated region
    $region6: #{_lambda_.1} parent=1 // pred_check
      _
    $region7: #{_lambda_.1} parent=1 // pred_check_branch
      %21 = sbr.rel (0) target = $region9
    $region8: #{_lambda_.1} parent=1 // pred_region
      _
    $region9: #{_lambda_.1} parent=1 // pred_fallthru
      _
    // Predicated region
    $region10: #{_lambda_.1} parent=1 // pred_check
      _
    $region11: #{_lambda_.1} parent=1 // pred_check_branch
      %23 = sbr.rel (0) target = $region13
    $region12: #{_lambda_.1} parent=1 // pred_region
      %24 = dma.done [#allocation3], 20992
    $region13: #{_lambda_.1} parent=1 // pred_fallthru
      _
    %v26 = vld [vmem:[%s1] sm:$0x1]
    %v27 = vld [vmem:[#allocation2 + $0x60] sm:$0xff]
    %v28 = vld [vmem:[#allocation2 + $0x68] sm:$0xff]
    %v29 = vld [vmem:[#allocation2 + $0x70] sm:$0xff]
    %31 = vset.pattern.permute.xlu0 0
    %32 = vperm.xlu0 %31, %v27
    %v33 = vpop.permute.xlu0 %32
    %36 = vset.pattern.permute.xlu0 0
    %37 = vperm.xlu0 %36, %v28
    %v38 = vpop.permute.xlu0 %37
    %41 = vset.pattern.permute.xlu0 0
    %42 = vperm.xlu0 %41, %v29
    %v43 = vpop.permute.xlu0 %42
    %v46 = vlaneseq
    %v47 = vshrl.u32 %v46, 7
    %v48 = vsub.s32 0, %v47
    %v49 = vrot.slane %v26, %v48
    %v51 = vmul.f32 %v33, %v49
    %v52 = vmul.f32 %v38, %v49
    %v53 = vmul.f32 %v43, %v49
    %v54 = vpack.c.bf16 %v51, %v51
    %v55 = vld [vmem:[#allocation2] sm:$0xff]
    %v56 = vld [vmem:[#allocation2 + $0x8] sm:$0xff]
    %v57 = vld [vmem:[#allocation2 + $0x10] sm:$0xff]
    %v58 = vld [vmem:[#allocation2 + $0x18] sm:$0xff]
    %v59 = vpack.c.bf16 %v56, %v55
    %v60 = vpack.c.bf16 %v58, %v57
    %v61 = vpack.c.bf16 %v52, %v52
    %v62 = vld [vmem:[#allocation2 + $0x20] sm:$0xff]
    %v63 = vld [vmem:[#allocation2 + $0x28] sm:$0xff]
    %v64 = vld [vmem:[#allocation2 + $0x30] sm:$0xff]
    %v65 = vld [vmem:[#allocation2 + $0x38] sm:$0xff]
    %v66 = vpack.c.bf16 %v63, %v62
    %v67 = vpack.c.bf16 %v65, %v64
    %vm68 = vcmask 261120
    %v70 = vsel %vm68, %v61, 0
    %72 = vmatprep.subr.bf16.mxu0 0
    %73 = vmatpush1.bf16.msra.mxu0 %v66
    %74 = vmatprep.subr.bf16.mxu0 0
    %75 = vmatpush1.bf16.msra.mxu0 %v67
    %76 = vmatprep.subr.bf16.mxu0 0
    %77 = vmatpush1.bf16.msra.mxu0 0
    %78 = vmatprep.subr.bf16.mxu0 0
    %79 = vmatpush1.bf16.msra.mxu0 0
    %80 = vmatprep.subr.bf16.mxu0 0
    %81 = vmatpush1.bf16.msra.mxu0 0
    %82 = vmatprep.subr.bf16.mxu0 0
    %83 = vmatpush1.bf16.msra.mxu0 0
    %84 = vmatprep.subr.bf16.mxu0 0
    %85 = vmatpush1.bf16.msra.mxu0 0
    %86 = vmatprep.subr.bf16.mxu0 0
    %87 = vmatpush1.bf16.msra.mxu0 0
    %88 = vmatprep.subr.bf16.mxu0 0
    %89 = vmatpush1.bf16.msra.mxu0 0
    %90 = vmatprep.subr.bf16.mxu0 0
    %91 = vmatpush1.bf16.msra.mxu0 0
    %92 = vmatprep.subr.bf16.mxu0 0
    %93 = vmatpush1.bf16.msra.mxu0 0
    %94 = vmatprep.subr.bf16.mxu0 0
    %95 = vmatpush1.bf16.msra.mxu0 0
    %96 = vmatprep.subr.bf16.mxu0 0
    %97 = vmatpush1.bf16.msra.mxu0 0
    %98 = vmatprep.subr.bf16.mxu0 0
    %99 = vmatpush1.bf16.msra.mxu0 0
    %100 = vmatprep.subr.bf16.mxu0 0
    %101 = vmatpush1.bf16.msra.mxu0 0
    %102 = vmatprep.subr.bf16.mxu0 0
    %103 = vmatpush1.bf16.msra.mxu0 0
    %104 = vmatprep.mubr.bf16.mxu0 0
    %105 = vmatmul.mubr.bf16.gmra.mrb[0].mxu0 %v70
    %v106 = vpop.f32.mrb[0].mxu0
    %v107 = vadd.f32 0.0, %v106
    %v108 = vpop.f32.mrb[0].mxu0
    %v109 = vpop.f32.mrb[0].mxu0
    %v110 = vpop.f32.mrb[0].mxu0
    %111 = vdwg.mxu0
    %v113 = vsel %vm68, %v54, 0
    %115 = vmatprep.subr.bf16.mxu0 0
    %116 = vmatpush1.bf16.msra.mxu0 %v59
    %117 = vmatprep.subr.bf16.mxu0 0
    %118 = vmatpush1.bf16.msra.mxu0 %v60
    %119 = vmatprep.subr.bf16.mxu0 0
    %120 = vmatpush1.bf16.msra.mxu0 0
    %121 = vmatprep.subr.bf16.mxu0 0
    %122 = vmatpush1.bf16.msra.mxu0 0
    %123 = vmatprep.subr.bf16.mxu0 0
    %124 = vmatpush1.bf16.msra.mxu0 0
    %125 = vmatprep.subr.bf16.mxu0 0
    %126 = vmatpush1.bf16.msra.mxu0 0
    %127 = vmatprep.subr.bf16.mxu0 0
    %128 = vmatpush1.bf16.msra.mxu0 0
    %129 = vmatprep.subr.bf16.mxu0 0
    %130 = vmatpush1.bf16.msra.mxu0 0
    %131 = vmatprep.subr.bf16.mxu0 0
    %132 = vmatpush1.bf16.msra.mxu0 0
    %133 = vmatprep.subr.bf16.mxu0 0
    %134 = vmatpush1.bf16.msra.mxu0 0
    %135 = vmatprep.subr.bf16.mxu0 0
    %136 = vmatpush1.bf16.msra.mxu0 0
    %137 = vmatprep.subr.bf16.mxu0 0
    %138 = vmatpush1.bf16.msra.mxu0 0
    %139 = vmatprep.subr.bf16.mxu0 0
    %140 = vmatpush1.bf16.msra.mxu0 0
    %141 = vmatprep.subr.bf16.mxu0 0
    %142 = vmatpush1.bf16.msra.mxu0 0
    %143 = vmatprep.subr.bf16.mxu0 0
    %144 = vmatpush1.bf16.msra.mxu0 0
    %145 = vmatprep.subr.bf16.mxu0 0
    %146 = vmatpush1.bf16.msra.mxu0 0
    %147 = vmatprep.mubr.bf16.mxu0 0
    %148 = vmatmul.mubr.bf16.gmra.mrb[0].mxu0 %v113
    %v149 = vpop.f32.mrb[0].mxu0
    %v150 = vadd.f32 %v107, %v149
    %v151 = vpop.f32.mrb[0].mxu0
    %v152 = vpop.f32.mrb[0].mxu0
    %v153 = vpop.f32.mrb[0].mxu0
    %154 = vdwg.mxu0
    %v155 = vpack.c.bf16 %v53, %v53
    %v156 = vld [vmem:[#allocation2 + $0x40] sm:$0xff]
    %v157 = vld [vmem:[#allocation2 + $0x48] sm:$0xff]
    %v158 = vld [vmem:[#allocation2 + $0x50] sm:$0xff]
    %v159 = vld [vmem:[#allocation2 + $0x58] sm:$0xff]
    %v160 = vpack.c.bf16 %v157, %v156
    %v161 = vpack.c.bf16 %v159, %v158
    %v163 = vsel %vm68, %v155, 0
    %165 = vmatprep.subr.bf16.mxu0 0
    %166 = vmatpush1.bf16.msra.mxu0 %v160
    %167 = vmatprep.subr.bf16.mxu0 0
    %168 = vmatpush1.bf16.msra.mxu0 %v161
    %169 = vmatprep.subr.bf16.mxu0 0
    %170 = vmatpush1.bf16.msra.mxu0 0
    %171 = vmatprep.subr.bf16.mxu0 0
    %172 = vmatpush1.bf16.msra.mxu0 0
    %173 = vmatprep.subr.bf16.mxu0 0
    %174 = vmatpush1.bf16.msra.mxu0 0
    %175 = vmatprep.subr.bf16.mxu0 0
    %176 = vmatpush1.bf16.msra.mxu0 0
    %177 = vmatprep.subr.bf16.mxu0 0
    %178 = vmatpush1.bf16.msra.mxu0 0
    %179 = vmatprep.subr.bf16.mxu0 0
    %180 = vmatpush1.bf16.msra.mxu0 0
    %181 = vmatprep.subr.bf16.mxu0 0
    %182 = vmatpush1.bf16.msra.mxu0 0
    %183 = vmatprep.subr.bf16.mxu0 0
    %184 = vmatpush1.bf16.msra.mxu0 0
    %185 = vmatprep.subr.bf16.mxu0 0
    %186 = vmatpush1.bf16.msra.mxu0 0
    %187 = vmatprep.subr.bf16.mxu0 0
    %188 = vmatpush1.bf16.msra.mxu0 0
    %189 = vmatprep.subr.bf16.mxu0 0
    %190 = vmatpush1.bf16.msra.mxu0 0
    %191 = vmatprep.subr.bf16.mxu0 0
    %192 = vmatpush1.bf16.msra.mxu0 0
    %193 = vmatprep.subr.bf16.mxu0 0
    %194 = vmatpush1.bf16.msra.mxu0 0
    %195 = vmatprep.subr.bf16.mxu0 0
    %196 = vmatpush1.bf16.msra.mxu0 0
    %197 = vmatprep.mubr.bf16.mxu0 0
    %198 = vmatmul.mubr.bf16.gmra.mrb[0].mxu0 %v163
    %v199 = vpop.f32.mrb[0].mxu0
    %v200 = vadd.f32 0.0, %v199
    %v201 = vpop.f32.mrb[0].mxu0
    %v202 = vpop.f32.mrb[0].mxu0
    %v203 = vpop.f32.mrb[0].mxu0
    %204 = vdwg.mxu0
    %v205 = vadd.f32 %v150, %v200
    %v206 = vld [vmem:[#allocation2 + $0x78] sm:$0xff]
    %v207 = vld [vmem:[#allocation2 + $0x80] sm:$0xff]
    %v208 = vsel %vm68, %v205, 0.0
    %209 = vadd.xlane.f32.xlu0 %v208
    %v210 = vpop.xlane.xlu0 %209
    %v211 = vrcp.pop 32.0
    %v212 = vmul.f32 %v210, %v211
    %v213 = vsub.f32 %v205, %v212
    %v214 = vmul.f32 %v213, %v213
    %v215 = vsel %vm68, %v214, 0.0
    %216 = vadd.xlane.f32.xlu0 %v215
    %v217 = vpop.xlane.xlu0 %216
    %v218 = vmul.f32 %v217, %v211
    %v219 = vadd.f32 %v218, 1e-05
    %v220 = vrsqrt.pop %v219
    %v221 = vmul.f32 %v206, %v220
    %223 = vset.pattern.permute.xlu0 0
    %224 = vperm.xlu0 %223, %v221
    %v225 = vpop.permute.xlu0 %224
    %v227 = vmul.f32 %v213, %v225
    %229 = vset.pattern.permute.xlu0 0
    %230 = vperm.xlu0 %229, %v207
    %v231 = vpop.permute.xlu0 %230
    %v233 = vadd.f32 %v227, %v231
    %vm234 = vcmp.ge.f32.partialorder %v233, 0.0
    %v235 = vmul.f32 %v233, 0.01
    %v236 = vsel %vm234, %v233, %v235
    %v237 = vld [vmem:[#allocation2 + $0x88] sm:$0xff]
    %v238 = vld [vmem:[#allocation2 + $0x90] sm:$0xff]
    %v239 = vld [vmem:[#allocation2 + $0x98] sm:$0xff]
    %v240 = vpack.c.bf16 %v238, %v237
    %v241 = vpack.c.bf16 %v239, %v239
    %v242 = vpack.c.bf16 %v236, %v236
    %vm243 = vcmask 64512
    %v245 = vsel %vm243, %v240, 0
    %v248 = vsel %vm243, %v241, 0
    %vm250 = vcmask 1043456
    %v252 = vsel %vm250, %v242, 0
    %254 = vmatprep.subr.bf16.mxu0 0
    %255 = vmatpush1.bf16.msra.mxu0 %v252
    %256 = vmatprep.subr.bf16.mxu0 0
    %257 = vmatpush1.bf16.msra.mxu0 0
    %258 = vmatprep.subr.bf16.mxu0 0
    %259 = vmatpush1.bf16.msra.mxu0 0
    %260 = vmatprep.subr.bf16.mxu0 0
    %261 = vmatpush1.bf16.msra.mxu0 0
    %262 = vmatprep.subr.bf16.mxu0 0
    %263 = vmatpush1.bf16.msra.mxu0 0
    %264 = vmatprep.subr.bf16.mxu0 0
    %265 = vmatpush1.bf16.msra.mxu0 0
    %266 = vmatprep.subr.bf16.mxu0 0
    %267 = vmatpush1.bf16.msra.mxu0 0
    %268 = vmatprep.subr.bf16.mxu0 0
    %269 = vmatpush1.bf16.msra.mxu0 0
    %270 = vmatprep.subr.bf16.mxu0 0
    %271 = vmatpush1.bf16.msra.mxu0 0
    %272 = vmatprep.subr.bf16.mxu0 0
    %273 = vmatpush1.bf16.msra.mxu0 0
    %274 = vmatprep.subr.bf16.mxu0 0
    %275 = vmatpush1.bf16.msra.mxu0 0
    %276 = vmatprep.subr.bf16.mxu0 0
    %277 = vmatpush1.bf16.msra.mxu0 0
    %278 = vmatprep.subr.bf16.mxu0 0
    %279 = vmatpush1.bf16.msra.mxu0 0
    %280 = vmatprep.subr.bf16.mxu0 0
    %281 = vmatpush1.bf16.msra.mxu0 0
    %282 = vmatprep.subr.bf16.mxu0 0
    %283 = vmatpush1.bf16.msra.mxu0 0
    %284 = vmatprep.subr.bf16.mxu0 0
    %285 = vmatpush1.bf16.msra.mxu0 0
    %286 = vmatprep.mubr.bf16.mxu0 0
    %287 = vmatmul.mubr.bf16.gmra.mrb[0].mxu0 %v245
    %v288 = vpop.f32.mrb[0].mxu0
    %v289 = vadd.f32 0.0, %v288
    %v290 = vpop.f32.mrb[0].mxu0
    %v291 = vpop.f32.mrb[0].mxu0
    %v292 = vadd.f32 0.0, %v291
    %v293 = vpop.f32.mrb[0].mxu0
    %294 = vmatprep.mubr.bf16.mxu0 0
    %295 = vmatmul.mubr.bf16.gmra.mrb[0].mxu0 %v248
    %v296 = vpop.f32.mrb[0].mxu0
    %v297 = vadd.f32 0.0, %v296
    %v298 = vpop.f32.mrb[0].mxu0
    %v299 = vpop.f32.mrb[0].mxu0
    %v300 = vpop.f32.mrb[0].mxu0
    %301 = vdwg.mxu0
    %v302 = vpack.c.bf16 %v289, %v289
    %v303 = vpack.c.bf16 %v292, %v292
    %v305 = vsel %vm68, %v303, 0
    %307 = vmatprep.subr.bf16.mxu0 0
    %308 = vmatpush1.bf16.msra.mxu0 %v66
    %309 = vmatprep.subr.bf16.mxu0 0
    %310 = vmatpush1.bf16.msra.mxu0 %v67
    %311 = vmatprep.subr.bf16.mxu0 0
    %312 = vmatpush1.bf16.msra.mxu0 0
    %313 = vmatprep.subr.bf16.mxu0 0
    %314 = vmatpush1.bf16.msra.mxu0 0
    %315 = vmatprep.subr.bf16.mxu0 0
    %316 = vmatpush1.bf16.msra.mxu0 0
    %317 = vmatprep.subr.bf16.mxu0 0
    %318 = vmatpush1.bf16.msra.mxu0 0
    %319 = vmatprep.subr.bf16.mxu0 0
    %320 = vmatpush1.bf16.msra.mxu0 0
    %321 = vmatprep.subr.bf16.mxu0 0
    %322 = vmatpush1.bf16.msra.mxu0 0
    %323 = vmatprep.subr.bf16.mxu0 0
    %324 = vmatpush1.bf16.msra.mxu0 0
    %325 = vmatprep.subr.bf16.mxu0 0
    %326 = vmatpush1.bf16.msra.mxu0 0
    %327 = vmatprep.subr.bf16.mxu0 0
    %328 = vmatpush1.bf16.msra.mxu0 0
    %329 = vmatprep.subr.bf16.mxu0 0
    %330 = vmatpush1.bf16.msra.mxu0 0
    %331 = vmatprep.subr.bf16.mxu0 0
    %332 = vmatpush1.bf16.msra.mxu0 0
    %333 = vmatprep.subr.bf16.mxu0 0
    %334 = vmatpush1.bf16.msra.mxu0 0
    %335 = vmatprep.subr.bf16.mxu0 0
    %336 = vmatpush1.bf16.msra.mxu0 0
    %337 = vmatprep.subr.bf16.mxu0 0
    %338 = vmatpush1.bf16.msra.mxu0 0
    %339 = vmatprep.mubr.bf16.mxu0 0
    %340 = vmatmul.mubr.bf16.gmra.mrb[0].mxu0 %v305
    %v341 = vpop.f32.mrb[0].mxu0
    %v342 = vadd.f32 0.0, %v341
    %v343 = vpop.f32.mrb[0].mxu0
    %v344 = vpop.f32.mrb[0].mxu0
    %v345 = vpop.f32.mrb[0].mxu0
    %346 = vdwg.mxu0
    %v348 = vsel %vm68, %v302, 0
    %350 = vmatprep.subr.bf16.mxu0 0
    %351 = vmatpush1.bf16.msra.mxu0 %v59
    %352 = vmatprep.subr.bf16.mxu0 0
    %353 = vmatpush1.bf16.msra.mxu0 %v60
    %354 = vmatprep.subr.bf16.mxu0 0
    %355 = vmatpush1.bf16.msra.mxu0 0
    %356 = vmatprep.subr.bf16.mxu0 0
    %357 = vmatpush1.bf16.msra.mxu0 0
    %358 = vmatprep.subr.bf16.mxu0 0
    %359 = vmatpush1.bf16.msra.mxu0 0
    %360 = vmatprep.subr.bf16.mxu0 0
    %361 = vmatpush1.bf16.msra.mxu0 0
    %362 = vmatprep.subr.bf16.mxu0 0
    %363 = vmatpush1.bf16.msra.mxu0 0
    %364 = vmatprep.subr.bf16.mxu0 0
    %365 = vmatpush1.bf16.msra.mxu0 0
    %366 = vmatprep.subr.bf16.mxu0 0
    %367 = vmatpush1.bf16.msra.mxu0 0
    %368 = vmatprep.subr.bf16.mxu0 0
    %369 = vmatpush1.bf16.msra.mxu0 0
    %370 = vmatprep.subr.bf16.mxu0 0
    %371 = vmatpush1.bf16.msra.mxu0 0
    %372 = vmatprep.subr.bf16.mxu0 0
    %373 = vmatpush1.bf16.msra.mxu0 0
    %374 = vmatprep.subr.bf16.mxu0 0
    %375 = vmatpush1.bf16.msra.mxu0 0
    %376 = vmatprep.subr.bf16.mxu0 0
    %377 = vmatpush1.bf16.msra.mxu0 0
    %378 = vmatprep.subr.bf16.mxu0 0
    %379 = vmatpush1.bf16.msra.mxu0 0
    %380 = vmatprep.subr.bf16.mxu0 0
    %381 = vmatpush1.bf16.msra.mxu0 0
    %382 = vmatprep.mubr.bf16.mxu0 0
    %383 = vmatmul.mubr.bf16.gmra.mrb[0].mxu0 %v348
    %v384 = vpop.f32.mrb[0].mxu0
    %v385 = vadd.f32 %v342, %v384
    %v386 = vpop.f32.mrb[0].mxu0
    %v387 = vpop.f32.mrb[0].mxu0
    %v388 = vpop.f32.mrb[0].mxu0
    %389 = vdwg.mxu0
    %v390 = vpack.c.bf16 %v297, %v297
    %v392 = vsel %vm68, %v390, 0
    %394 = vmatprep.subr.bf16.mxu0 0
    %395 = vmatpush1.bf16.msra.mxu0 %v160
    %396 = vmatprep.subr.bf16.mxu0 0
    %397 = vmatpush1.bf16.msra.mxu0 %v161
    %398 = vmatprep.subr.bf16.mxu0 0
    %399 = vmatpush1.bf16.msra.mxu0 0
    %400 = vmatprep.subr.bf16.mxu0 0
    %401 = vmatpush1.bf16.msra.mxu0 0
    %402 = vmatprep.subr.bf16.mxu0 0
    %403 = vmatpush1.bf16.msra.mxu0 0
    %404 = vmatprep.subr.bf16.mxu0 0
    %405 = vmatpush1.bf16.msra.mxu0 0
    %406 = vmatprep.subr.bf16.mxu0 0
    %407 = vmatpush1.bf16.msra.mxu0 0
    %408 = vmatprep.subr.bf16.mxu0 0
    %409 = vmatpush1.bf16.msra.mxu0 0
    %410 = vmatprep.subr.bf16.mxu0 0
    %411 = vmatpush1.bf16.msra.mxu0 0
    %412 = vmatprep.subr.bf16.mxu0 0
    %413 = vmatpush1.bf16.msra.mxu0 0
    %414 = vmatprep.subr.bf16.mxu0 0
    %415 = vmatpush1.bf16.msra.mxu0 0
    %416 = vmatprep.subr.bf16.mxu0 0
    %417 = vmatpush1.bf16.msra.mxu0 0
    %418 = vmatprep.subr.bf16.mxu0 0
    %419 = vmatpush1.bf16.msra.mxu0 0
    %420 = vmatprep.subr.bf16.mxu0 0
    %421 = vmatpush1.bf16.msra.mxu0 0
    %422 = vmatprep.subr.bf16.mxu0 0
    %423 = vmatpush1.bf16.msra.mxu0 0
    %424 = vmatprep.subr.bf16.mxu0 0
    %425 = vmatpush1.bf16.msra.mxu0 0
    %426 = vmatprep.mubr.bf16.mxu0 0
    %427 = vmatmul.mubr.bf16.gmra.mrb[0].mxu0 %v392
    %v428 = vpop.f32.mrb[0].mxu0
    %v429 = vadd.f32 0.0, %v428
    %v430 = vpop.f32.mrb[0].mxu0
    %v431 = vpop.f32.mrb[0].mxu0
    %v432 = vpop.f32.mrb[0].mxu0
    %433 = vdwg.mxu0
    %v434 = vadd.f32 %v385, %v429
    %v435 = vld [vmem:[#allocation2 + $0xa0] sm:$0xff]
    %v436 = vld [vmem:[#allocation2 + $0xa8] sm:$0xff]
    %v437 = vsel %vm68, %v434, 0.0
    %438 = vadd.xlane.f32.xlu0 %v437
    %v439 = vpop.xlane.xlu0 %438
    %v440 = vmul.f32 %v439, %v211
    %v441 = vsub.f32 %v434, %v440
    %v442 = vmul.f32 %v441, %v441
    %v443 = vsel %vm68, %v442, 0.0
    %444 = vadd.xlane.f32.xlu0 %v443
    %v445 = vpop.xlane.xlu0 %444
    %v446 = vmul.f32 %v445, %v211
    %v447 = vadd.f32 %v446, 1e-05
    %v448 = vrsqrt.pop %v447
    %v449 = vmul.f32 %v435, %v448
    %451 = vset.pattern.permute.xlu0 0
    %452 = vperm.xlu0 %451, %v449
    %v453 = vpop.permute.xlu0 %452
    %v455 = vmul.f32 %v441, %v453
    %457 = vset.pattern.permute.xlu0 0
    %458 = vperm.xlu0 %457, %v436
    %v459 = vpop.permute.xlu0 %458
    %v461 = vadd.f32 %v455, %v459
    %v462 = vmax.f32 %v461, 0.0
    %v463 = vld [vmem:[#allocation2 + $0xb0] sm:$0xff]
    %v464 = vld [vmem:[#allocation2 + $0xb8] sm:$0xff]
    %v465 = vld [vmem:[#allocation2 + $0xc0] sm:$0xff]
    %v466 = vpack.c.bf16 %v464, %v463
    %v467 = vpack.c.bf16 %v465, %v465
    %v468 = vpack.c.bf16 %v462, %v462
    %v470 = vsel %vm243, %v466, 0
    %v473 = vsel %vm243, %v467, 0
    %v476 = vsel %vm250, %v468, 0
    %478 = vmatprep.subr.bf16.mxu0 0
    %479 = vmatpush1.bf16.msra.mxu0 %v476
    %480 = vmatprep.subr.bf16.mxu0 0
    %481 = vmatpush1.bf16.msra.mxu0 0
    %482 = vmatprep.subr.bf16.mxu0 0
    %483 = vmatpush1.bf16.msra.mxu0 0
    %484 = vmatprep.subr.bf16.mxu0 0
    %485 = vmatpush1.bf16.msra.mxu0 0
    %486 = vmatprep.subr.bf16.mxu0 0
    %487 = vmatpush1.bf16.msra.mxu0 0
    %488 = vmatprep.subr.bf16.mxu0 0
    %489 = vmatpush1.bf16.msra.mxu0 0
    %490 = vmatprep.subr.bf16.mxu0 0
    %491 = vmatpush1.bf16.msra.mxu0 0
    %492 = vmatprep.subr.bf16.mxu0 0
    %493 = vmatpush1.bf16.msra.mxu0 0
    %494 = vmatprep.subr.bf16.mxu0 0
    %495 = vmatpush1.bf16.msra.mxu0 0
    %496 = vmatprep.subr.bf16.mxu0 0
    %497 = vmatpush1.bf16.msra.mxu0 0
    %498 = vmatprep.subr.bf16.mxu0 0
    %499 = vmatpush1.bf16.msra.mxu0 0
    %500 = vmatprep.subr.bf16.mxu0 0
    %501 = vmatpush1.bf16.msra.mxu0 0
    %502 = vmatprep.subr.bf16.mxu0 0
    %503 = vmatpush1.bf16.msra.mxu0 0
    %504 = vmatprep.subr.bf16.mxu0 0
    %505 = vmatpush1.bf16.msra.mxu0 0
    %506 = vmatprep.subr.bf16.mxu0 0
    %507 = vmatpush1.bf16.msra.mxu0 0
    %508 = vmatprep.subr.bf16.mxu0 0
    %509 = vmatpush1.bf16.msra.mxu0 0
    %510 = vmatprep.mubr.bf16.mxu0 0
    %511 = vmatmul.mubr.bf16.gmra.mrb[0].mxu0 %v470
    %v512 = vpop.f32.mrb[0].mxu0
    %v513 = vadd.f32 0.0, %v512
    %v514 = vpop.f32.mrb[0].mxu0
    %v515 = vpop.f32.mrb[0].mxu0
    %v516 = vadd.f32 0.0, %v515
    %v517 = vpop.f32.mrb[0].mxu0
    %518 = vmatprep.mubr.bf16.mxu0 0
    %519 = vmatmul.mubr.bf16.gmra.mrb[0].mxu0 %v473
    %v520 = vpop.f32.mrb[0].mxu0
    %v521 = vadd.f32 0.0, %v520
    %v522 = vpop.f32.mrb[0].mxu0
    %v523 = vpop.f32.mrb[0].mxu0
    %v524 = vpop.f32.mrb[0].mxu0
    %525 = vdwg.mxu0
    %v526 = vpack.c.bf16 %v513, %v513
    %v527 = vpack.c.bf16 %v516, %v516
    %v529 = vsel %vm68, %v527, 0
    %531 = vmatprep.subr.bf16.mxu0 0
    %532 = vmatpush1.bf16.msra.mxu0 %v66
    %533 = vmatprep.subr.bf16.mxu0 0
    %534 = vmatpush1.bf16.msra.mxu0 %v67
    %535 = vmatprep.subr.bf16.mxu0 0
    %536 = vmatpush1.bf16.msra.mxu0 0
    %537 = vmatprep.subr.bf16.mxu0 0
    %538 = vmatpush1.bf16.msra.mxu0 0
    %539 = vmatprep.subr.bf16.mxu0 0
    %540 = vmatpush1.bf16.msra.mxu0 0
    %541 = vmatprep.subr.bf16.mxu0 0
    %542 = vmatpush1.bf16.msra.mxu0 0
    %543 = vmatprep.subr.bf16.mxu0 0
    %544 = vmatpush1.bf16.msra.mxu0 0
    %545 = vmatprep.subr.bf16.mxu0 0
    %546 = vmatpush1.bf16.msra.mxu0 0
    %547 = vmatprep.subr.bf16.mxu0 0
    %548 = vmatpush1.bf16.msra.mxu0 0
    %549 = vmatprep.subr.bf16.mxu0 0
    %550 = vmatpush1.bf16.msra.mxu0 0
    %551 = vmatprep.subr.bf16.mxu0 0
    %552 = vmatpush1.bf16.msra.mxu0 0
    %553 = vmatprep.subr.bf16.mxu0 0
    %554 = vmatpush1.bf16.msra.mxu0 0
    %555 = vmatprep.subr.bf16.mxu0 0
    %556 = vmatpush1.bf16.msra.mxu0 0
    %557 = vmatprep.subr.bf16.mxu0 0
    %558 = vmatpush1.bf16.msra.mxu0 0
    %559 = vmatprep.subr.bf16.mxu0 0
    %560 = vmatpush1.bf16.msra.mxu0 0
    %561 = vmatprep.subr.bf16.mxu0 0
    %562 = vmatpush1.bf16.msra.mxu0 0
    %563 = vmatprep.mubr.bf16.mxu0 0
    %564 = vmatmul.mubr.bf16.gmra.mrb[0].mxu0 %v529
    %v565 = vpop.f32.mrb[0].mxu0
    %v566 = vadd.f32 0.0, %v565
    %v567 = vpop.f32.mrb[0].mxu0
    %v568 = vpop.f32.mrb[0].mxu0
    %v569 = vpop.f32.mrb[0].mxu0
    %570 = vdwg.mxu0
    %v572 = vsel %vm68, %v526, 0
    %574 = vmatprep.subr.bf16.mxu0 0
    %575 = vmatpush1.bf16.msra.mxu0 %v59
    %576 = vmatprep.subr.bf16.mxu0 0
    %577 = vmatpush1.bf16.msra.mxu0 %v60
    %578 = vmatprep.subr.bf16.mxu0 0
    %579 = vmatpush1.bf16.msra.mxu0 0
    %580 = vmatprep.subr.bf16.mxu0 0
    %581 = vmatpush1.bf16.msra.mxu0 0
    %582 = vmatprep.subr.bf16.mxu0 0
    %583 = vmatpush1.bf16.msra.mxu0 0
    %584 = vmatprep.subr.bf16.mxu0 0
    %585 = vmatpush1.bf16.msra.mxu0 0
    %586 = vmatprep.subr.bf16.mxu0 0
    %587 = vmatpush1.bf16.msra.mxu0 0
    %588 = vmatprep.subr.bf16.mxu0 0
    %589 = vmatpush1.bf16.msra.mxu0 0
    %590 = vmatprep.subr.bf16.mxu0 0
    %591 = vmatpush1.bf16.msra.mxu0 0
    %592 = vmatprep.subr.bf16.mxu0 0
    %593 = vmatpush1.bf16.msra.mxu0 0
    %594 = vmatprep.subr.bf16.mxu0 0
    %595 = vmatpush1.bf16.msra.mxu0 0
    %596 = vmatprep.subr.bf16.mxu0 0
    %597 = vmatpush1.bf16.msra.mxu0 0
    %598 = vmatprep.subr.bf16.mxu0 0
    %599 = vmatpush1.bf16.msra.mxu0 0
    %600 = vmatprep.subr.bf16.mxu0 0
    %601 = vmatpush1.bf16.msra.mxu0 0
    %602 = vmatprep.subr.bf16.mxu0 0
    %603 = vmatpush1.bf16.msra.mxu0 0
    %604 = vmatprep.subr.bf16.mxu0 0
    %605 = vmatpush1.bf16.msra.mxu0 0
    %606 = vmatprep.mubr.bf16.mxu0 0
    %607 = vmatmul.mubr.bf16.gmra.mrb[0].mxu0 %v572
    %v608 = vpop.f32.mrb[0].mxu0
    %v609 = vadd.f32 %v566, %v608
    %v610 = vpop.f32.mrb[0].mxu0
    %v611 = vpop.f32.mrb[0].mxu0
    %v612 = vpop.f32.mrb[0].mxu0
    %613 = vdwg.mxu0
    %v614 = vpack.c.bf16 %v521, %v521
    %v616 = vsel %vm68, %v614, 0
    %618 = vmatprep.subr.bf16.mxu0 0
    %619 = vmatpush1.bf16.msra.mxu0 %v160
    %620 = vmatprep.subr.bf16.mxu0 0
    %621 = vmatpush1.bf16.msra.mxu0 %v161
    %622 = vmatprep.subr.bf16.mxu0 0
    %623 = vmatpush1.bf16.msra.mxu0 0
    %624 = vmatprep.subr.bf16.mxu0 0
    %625 = vmatpush1.bf16.msra.mxu0 0
    %626 = vmatprep.subr.bf16.mxu0 0
    %627 = vmatpush1.bf16.msra.mxu0 0
    %628 = vmatprep.subr.bf16.mxu0 0
    %629 = vmatpush1.bf16.msra.mxu0 0
    %630 = vmatprep.subr.bf16.mxu0 0
    %631 = vmatpush1.bf16.msra.mxu0 0
    %632 = vmatprep.subr.bf16.mxu0 0
    %633 = vmatpush1.bf16.msra.mxu0 0
    %634 = vmatprep.subr.bf16.mxu0 0
    %635 = vmatpush1.bf16.msra.mxu0 0
    %636 = vmatprep.subr.bf16.mxu0 0
    %637 = vmatpush1.bf16.msra.mxu0 0
    %638 = vmatprep.subr.bf16.mxu0 0
    %639 = vmatpush1.bf16.msra.mxu0 0
    %640 = vmatprep.subr.bf16.mxu0 0
    %641 = vmatpush1.bf16.msra.mxu0 0
    %642 = vmatprep.subr.bf16.mxu0 0
    %643 = vmatpush1.bf16.msra.mxu0 0
    %644 = vmatprep.subr.bf16.mxu0 0
    %645 = vmatpush1.bf16.msra.mxu0 0
    %646 = vmatprep.subr.bf16.mxu0 0
    %647 = vmatpush1.bf16.msra.mxu0 0
    %648 = vmatprep.subr.bf16.mxu0 0
    %649 = vmatpush1.bf16.msra.mxu0 0
    %650 = vmatprep.mubr.bf16.mxu0 0
    %651 = vmatmul.mubr.bf16.gmra.mrb[0].mxu0 %v616
    %v652 = vpop.f32.mrb[0].mxu0
    %v653 = vadd.f32 0.0, %v652
    %v654 = vpop.f32.mrb[0].mxu0
    %v655 = vpop.f32.mrb[0].mxu0
    %v656 = vpop.f32.mrb[0].mxu0
    %657 = vdwg.mxu0
    %v658 = vadd.f32 %v609, %v653
    %v659 = vld [vmem:[#allocation2 + $0xc8] sm:$0xff]
    %v660 = vld [vmem:[#allocation2 + $0xd0] sm:$0xff]
    %v661 = vsel %vm68, %v658, 0.0
    %662 = vadd.xlane.f32.xlu0 %v661
    %v663 = vpop.xlane.xlu0 %662
    %v664 = vmul.f32 %v663, %v211
    %v665 = vsub.f32 %v658, %v664
    %v666 = vmul.f32 %v665, %v665
    %v667 = vsel %vm68, %v666, 0.0
    %668 = vadd.xlane.f32.xlu0 %v667
    %v669 = vpop.xlane.xlu0 %668
    %v670 = vmul.f32 %v669, %v211
    %v671 = vadd.f32 %v670, 1e-05
    %v672 = vrsqrt.pop %v671
    %v673 = vmul.f32 %v659, %v672
    %675 = vset.pattern.permute.xlu0 0
    %676 = vperm.xlu0 %675, %v673
    %v677 = vpop.permute.xlu0 %676
    %v679 = vmul.f32 %v665, %v677
    %681 = vset.pattern.permute.xlu0 0
    %682 = vperm.xlu0 %681, %v660
    %v683 = vpop.permute.xlu0 %682
    %v685 = vadd.f32 %v679, %v683
    %v686 = vadd.f32 %v685, %v236
    %v687 = vmax.f32 %v686, 0.0
    %v688 = vld [vmem:[#allocation2 + $0xd8] sm:$0xff]
    %v689 = vld [vmem:[#allocation2 + $0xe0] sm:$0xff]
    %v690 = vld [vmem:[#allocation2 + $0xe8] sm:$0xff]
    %v691 = vpack.c.bf16 %v689, %v688
    %v692 = vpack.c.bf16 %v690, %v690
    %v693 = vpack.c.bf16 %v687, %v687
    %v695 = vsel %vm243, %v691, 0
    %v698 = vsel %vm243, %v692, 0
    %v701 = vsel %vm250, %v693, 0
    %703 = vmatprep.subr.bf16.mxu0 0
    %704 = vmatpush1.bf16.msra.mxu0 %v701
    %705 = vmatprep.subr.bf16.mxu0 0
    %706 = vmatpush1.bf16.msra.mxu0 0
    %707 = vmatprep.subr.bf16.mxu0 0
    %708 = vmatpush1.bf16.msra.mxu0 0
    %709 = vmatprep.subr.bf16.mxu0 0
    %710 = vmatpush1.bf16.msra.mxu0 0
    %711 = vmatprep.subr.bf16.mxu0 0
    %712 = vmatpush1.bf16.msra.mxu0 0
    %713 = vmatprep.subr.bf16.mxu0 0
    %714 = vmatpush1.bf16.msra.mxu0 0
    %715 = vmatprep.subr.bf16.mxu0 0
    %716 = vmatpush1.bf16.msra.mxu0 0
    %717 = vmatprep.subr.bf16.mxu0 0
    %718 = vmatpush1.bf16.msra.mxu0 0
    %719 = vmatprep.subr.bf16.mxu0 0
    %720 = vmatpush1.bf16.msra.mxu0 0
    %721 = vmatprep.subr.bf16.mxu0 0
    %722 = vmatpush1.bf16.msra.mxu0 0
    %723 = vmatprep.subr.bf16.mxu0 0
    %724 = vmatpush1.bf16.msra.mxu0 0
    %725 = vmatprep.subr.bf16.mxu0 0
    %726 = vmatpush1.bf16.msra.mxu0 0
    %727 = vmatprep.subr.bf16.mxu0 0
    %728 = vmatpush1.bf16.msra.mxu0 0
    %729 = vmatprep.subr.bf16.mxu0 0
    %730 = vmatpush1.bf16.msra.mxu0 0
    %731 = vmatprep.subr.bf16.mxu0 0
    %732 = vmatpush1.bf16.msra.mxu0 0
    %733 = vmatprep.subr.bf16.mxu0 0
    %734 = vmatpush1.bf16.msra.mxu0 0
    %735 = vmatprep.mubr.bf16.mxu0 0
    %736 = vmatmul.mubr.bf16.gmra.mrb[0].mxu0 %v695
    %v737 = vpop.f32.mrb[0].mxu0
    %v738 = vadd.f32 0.0, %v737
    %v739 = vpop.f32.mrb[0].mxu0
    %v740 = vpop.f32.mrb[0].mxu0
    %v741 = vadd.f32 0.0, %v740
    %v742 = vpop.f32.mrb[0].mxu0
    %743 = vmatprep.mubr.bf16.mxu0 0
    %744 = vmatmul.mubr.bf16.gmra.mrb[0].mxu0 %v698
    %v745 = vpop.f32.mrb[0].mxu0
    %v746 = vadd.f32 0.0, %v745
    %v747 = vpop.f32.mrb[0].mxu0
    %v748 = vpop.f32.mrb[0].mxu0
    %v749 = vpop.f32.mrb[0].mxu0
    %750 = vdwg.mxu0
    %v751 = vpack.c.bf16 %v738, %v738
    %v752 = vpack.c.bf16 %v741, %v741
    %v754 = vsel %vm68, %v752, 0
    %756 = vmatprep.subr.bf16.mxu0 0
    %757 = vmatpush1.bf16.msra.mxu0 %v66
    %758 = vmatprep.subr.bf16.mxu0 0
    %759 = vmatpush1.bf16.msra.mxu0 %v67
    %760 = vmatprep.subr.bf16.mxu0 0
    %761 = vmatpush1.bf16.msra.mxu0 0
    %762 = vmatprep.subr.bf16.mxu0 0
    %763 = vmatpush1.bf16.msra.mxu0 0
    %764 = vmatprep.subr.bf16.mxu0 0
    %765 = vmatpush1.bf16.msra.mxu0 0
    %766 = vmatprep.subr.bf16.mxu0 0
    %767 = vmatpush1.bf16.msra.mxu0 0
    %768 = vmatprep.subr.bf16.mxu0 0
    %769 = vmatpush1.bf16.msra.mxu0 0
    %770 = vmatprep.subr.bf16.mxu0 0
    %771 = vmatpush1.bf16.msra.mxu0 0
    %772 = vmatprep.subr.bf16.mxu0 0
    %773 = vmatpush1.bf16.msra.mxu0 0
    %774 = vmatprep.subr.bf16.mxu0 0
    %775 = vmatpush1.bf16.msra.mxu0 0
    %776 = vmatprep.subr.bf16.mxu0 0
    %777 = vmatpush1.bf16.msra.mxu0 0
    %778 = vmatprep.subr.bf16.mxu0 0
    %779 = vmatpush1.bf16.msra.mxu0 0
    %780 = vmatprep.subr.bf16.mxu0 0
    %781 = vmatpush1.bf16.msra.mxu0 0
    %782 = vmatprep.subr.bf16.mxu0 0
    %783 = vmatpush1.bf16.msra.mxu0 0
    %784 = vmatprep.subr.bf16.mxu0 0
    %785 = vmatpush1.bf16.msra.mxu0 0
    %786 = vmatprep.subr.bf16.mxu0 0
    %787 = vmatpush1.bf16.msra.mxu0 0
    %788 = vmatprep.mubr.bf16.mxu0 0
    %789 = vmatmul.mubr.bf16.gmra.mrb[0].mxu0 %v754
    %v790 = vpop.f32.mrb[0].mxu0
    %v791 = vadd.f32 0.0, %v790
    %v792 = vpop.f32.mrb[0].mxu0
    %v793 = vpop.f32.mrb[0].mxu0
    %v794 = vpop.f32.mrb[0].mxu0
    %795 = vdwg.mxu0
    %v797 = vsel %vm68, %v751, 0
    %799 = vmatprep.subr.bf16.mxu0 0
    %800 = vmatpush1.bf16.msra.mxu0 %v59
    %801 = vmatprep.subr.bf16.mxu0 0
    %802 = vmatpush1.bf16.msra.mxu0 %v60
    %803 = vmatprep.subr.bf16.mxu0 0
    %804 = vmatpush1.bf16.msra.mxu0 0
    %805 = vmatprep.subr.bf16.mxu0 0
    %806 = vmatpush1.bf16.msra.mxu0 0
    %807 = vmatprep.subr.bf16.mxu0 0
    %808 = vmatpush1.bf16.msra.mxu0 0
    %809 = vmatprep.subr.bf16.mxu0 0
    %810 = vmatpush1.bf16.msra.mxu0 0
    %811 = vmatprep.subr.bf16.mxu0 0
    %812 = vmatpush1.bf16.msra.mxu0 0
    %813 = vmatprep.subr.bf16.mxu0 0
    %814 = vmatpush1.bf16.msra.mxu0 0
    %815 = vmatprep.subr.bf16.mxu0 0
    %816 = vmatpush1.bf16.msra.mxu0 0
    %817 = vmatprep.subr.bf16.mxu0 0
    %818 = vmatpush1.bf16.msra.mxu0 0
    %819 = vmatprep.subr.bf16.mxu0 0
    %820 = vmatpush1.bf16.msra.mxu0 0
    %821 = vmatprep.subr.bf16.mxu0 0
    %822 = vmatpush1.bf16.msra.mxu0 0
    %823 = vmatprep.subr.bf16.mxu0 0
    %824 = vmatpush1.bf16.msra.mxu0 0
    %825 = vmatprep.subr.bf16.mxu0 0
    %826 = vmatpush1.bf16.msra.mxu0 0
    %827 = vmatprep.subr.bf16.mxu0 0
    %828 = vmatpush1.bf16.msra.mxu0 0
    %829 = vmatprep.subr.bf16.mxu0 0
    %830 = vmatpush1.bf16.msra.mxu0 0
    %831 = vmatprep.mubr.bf16.mxu0 0
    %832 = vmatmul.mubr.bf16.gmra.mrb[0].mxu0 %v797
    %v833 = vpop.f32.mrb[0].mxu0
    %v834 = vadd.f32 %v791, %v833
    %v835 = vpop.f32.mrb[0].mxu0
    %v836 = vpop.f32.mrb[0].mxu0
    %v837 = vpop.f32.mrb[0].mxu0
    %838 = vdwg.mxu0
    %v839 = vpack.c.bf16 %v746, %v746
    %v841 = vsel %vm68, %v839, 0
    %843 = vmatprep.subr.bf16.mxu0 0
    %844 = vmatpush1.bf16.msra.mxu0 %v160
    %845 = vmatprep.subr.bf16.mxu0 0
    %846 = vmatpush1.bf16.msra.mxu0 %v161
    %847 = vmatprep.subr.bf16.mxu0 0
    %848 = vmatpush1.bf16.msra.mxu0 0
    %849 = vmatprep.subr.bf16.mxu0 0
    %850 = vmatpush1.bf16.msra.mxu0 0
    %851 = vmatprep.subr.bf16.mxu0 0
    %852 = vmatpush1.bf16.msra.mxu0 0
    %853 = vmatprep.subr.bf16.mxu0 0
    %854 = vmatpush1.bf16.msra.mxu0 0
    %855 = vmatprep.subr.bf16.mxu0 0
    %856 = vmatpush1.bf16.msra.mxu0 0
    %857 = vmatprep.subr.bf16.mxu0 0
    %858 = vmatpush1.bf16.msra.mxu0 0
    %859 = vmatprep.subr.bf16.mxu0 0
    %860 = vmatpush1.bf16.msra.mxu0 0
    %861 = vmatprep.subr.bf16.mxu0 0
    %862 = vmatpush1.bf16.msra.mxu0 0
    %863 = vmatprep.subr.bf16.mxu0 0
    %864 = vmatpush1.bf16.msra.mxu0 0
    %865 = vmatprep.subr.bf16.mxu0 0
    %866 = vmatpush1.bf16.msra.mxu0 0
    %867 = vmatprep.subr.bf16.mxu0 0
    %868 = vmatpush1.bf16.msra.mxu0 0
    %869 = vmatprep.subr.bf16.mxu0 0
    %870 = vmatpush1.bf16.msra.mxu0 0
    %871 = vmatprep.subr.bf16.mxu0 0
    %872 = vmatpush1.bf16.msra.mxu0 0
    %873 = vmatprep.subr.bf16.mxu0 0
    %874 = vmatpush1.bf16.msra.mxu0 0
    %875 = vmatprep.mubr.bf16.mxu0 0
    %876 = vmatmul.mubr.bf16.gmra.mrb[0].mxu0 %v841
    %v877 = vpop.f32.mrb[0].mxu0
    %v878 = vadd.f32 0.0, %v877
    %v879 = vpop.f32.mrb[0].mxu0
    %v880 = vpop.f32.mrb[0].mxu0
    %v881 = vpop.f32.mrb[0].mxu0
    %882 = vdwg.mxu0
    %v883 = vadd.f32 %v834, %v878
    %v884 = vld [vmem:[#allocation2 + $0xf0] sm:$0xff]
    %v885 = vld [vmem:[#allocation2 + $0xf8] sm:$0xff]
    %v886 = vsel %vm68, %v883, 0.0
    %887 = vadd.xlane.f32.xlu0 %v886
    %v888 = vpop.xlane.xlu0 %887
    %v889 = vmul.f32 %v888, %v211
    %v890 = vsub.f32 %v883, %v889
    %v891 = vmul.f32 %v890, %v890
    %v892 = vsel %vm68, %v891, 0.0
    %893 = vadd.xlane.f32.xlu0 %v892
    %v894 = vpop.xlane.xlu0 %893
    %v895 = vmul.f32 %v894, %v211
    %v896 = vadd.f32 %v895, 1e-05
    %v897 = vrsqrt.pop %v896
    %v898 = vmul.f32 %v884, %v897
    %900 = vset.pattern.permute.xlu0 0
    %901 = vperm.xlu0 %900, %v898
    %v902 = vpop.permute.xlu0 %901
    %v904 = vmul.f32 %v890, %v902
    %906 = vset.pattern.permute.xlu0 0
    %907 = vperm.xlu0 %906, %v885
    %v908 = vpop.permute.xlu0 %907
    %v910 = vadd.f32 %v904, %v908
    %v911 = vmax.f32 %v910, 0.0
    %v912 = vld [vmem:[#allocation2 + $0x100] sm:$0xff]
    %v913 = vld [vmem:[#allocation2 + $0x108] sm:$0xff]
    %v914 = vld [vmem:[#allocation2 + $0x110] sm:$0xff]
    %v915 = vpack.c.bf16 %v913, %v912
    %v916 = vpack.c.bf16 %v914, %v914
    %v917 = vpack.c.bf16 %v911, %v911
    %v919 = vsel %vm243, %v915, 0
    %v922 = vsel %vm243, %v916, 0
    %v925 = vsel %vm250, %v917, 0
    %927 = vmatprep.subr.bf16.mxu0 0
    %928 = vmatpush1.bf16.msra.mxu0 %v925
    %929 = vmatprep.subr.bf16.mxu0 0
    %930 = vmatpush1.bf16.msra.mxu0 0
    %931 = vmatprep.subr.bf16.mxu0 0
    %932 = vmatpush1.bf16.msra.mxu0 0
    %933 = vmatprep.subr.bf16.mxu0 0
    %934 = vmatpush1.bf16.msra.mxu0 0
    %935 = vmatprep.subr.bf16.mxu0 0
    %936 = vmatpush1.bf16.msra.mxu0 0
    %937 = vmatprep.subr.bf16.mxu0 0
    %938 = vmatpush1.bf16.msra.mxu0 0
    %939 = vmatprep.subr.bf16.mxu0 0
    %940 = vmatpush1.bf16.msra.mxu0 0
    %941 = vmatprep.subr.bf16.mxu0 0
    %942 = vmatpush1.bf16.msra.mxu0 0
    %943 = vmatprep.subr.bf16.mxu0 0
    %944 = vmatpush1.bf16.msra.mxu0 0
    %945 = vmatprep.subr.bf16.mxu0 0
    %946 = vmatpush1.bf16.msra.mxu0 0
    %947 = vmatprep.subr.bf16.mxu0 0
    %948 = vmatpush1.bf16.msra.mxu0 0
    %949 = vmatprep.subr.bf16.mxu0 0
    %950 = vmatpush1.bf16.msra.mxu0 0
    %951 = vmatprep.subr.bf16.mxu0 0
    %952 = vmatpush1.bf16.msra.mxu0 0
    %953 = vmatprep.subr.bf16.mxu0 0
    %954 = vmatpush1.bf16.msra.mxu0 0
    %955 = vmatprep.subr.bf16.mxu0 0
    %956 = vmatpush1.bf16.msra.mxu0 0
    %957 = vmatprep.subr.bf16.mxu0 0
    %958 = vmatpush1.bf16.msra.mxu0 0
    %959 = vmatprep.mubr.bf16.mxu0 0
    %960 = vmatmul.mubr.bf16.gmra.mrb[0].mxu0 %v919
    %v961 = vpop.f32.mrb[0].mxu0
    %v962 = vadd.f32 0.0, %v961
    %v963 = vpop.f32.mrb[0].mxu0
    %v964 = vpop.f32.mrb[0].mxu0
    %v965 = vadd.f32 0.0, %v964
    %v966 = vpop.f32.mrb[0].mxu0
    %967 = vmatprep.mubr.bf16.mxu0 0
    %968 = vmatmul.mubr.bf16.gmra.mrb[0].mxu0 %v922
    %v969 = vpop.f32.mrb[0].mxu0
    %v970 = vadd.f32 0.0, %v969
    %v971 = vpop.f32.mrb[0].mxu0
    %v972 = vpop.f32.mrb[0].mxu0
    %v973 = vpop.f32.mrb[0].mxu0
    %974 = vdwg.mxu0
    %v975 = vpack.c.bf16 %v962, %v962
    %v976 = vpack.c.bf16 %v965, %v965
    %v978 = vsel %vm68, %v976, 0
    %980 = vmatprep.subr.bf16.mxu0 0
    %981 = vmatpush1.bf16.msra.mxu0 %v66
    %982 = vmatprep.subr.bf16.mxu0 0
    %983 = vmatpush1.bf16.msra.mxu0 %v67
    %984 = vmatprep.subr.bf16.mxu0 0
    %985 = vmatpush1.bf16.msra.mxu0 0
    %986 = vmatprep.subr.bf16.mxu0 0
    %987 = vmatpush1.bf16.msra.mxu0 0
    %988 = vmatprep.subr.bf16.mxu0 0
    %989 = vmatpush1.bf16.msra.mxu0 0
    %990 = vmatprep.subr.bf16.mxu0 0
    %991 = vmatpush1.bf16.msra.mxu0 0
    %992 = vmatprep.subr.bf16.mxu0 0
    %993 = vmatpush1.bf16.msra.mxu0 0
    %994 = vmatprep.subr.bf16.mxu0 0
    %995 = vmatpush1.bf16.msra.mxu0 0
    %996 = vmatprep.subr.bf16.mxu0 0
    %997 = vmatpush1.bf16.msra.mxu0 0
    %998 = vmatprep.subr.bf16.mxu0 0
    %999 = vmatpush1.bf16.msra.mxu0 0
    %1000 = vmatprep.subr.bf16.mxu0 0
    %1001 = vmatpush1.bf16.msra.mxu0 0
    %1002 = vmatprep.subr.bf16.mxu0 0
    %1003 = vmatpush1.bf16.msra.mxu0 0
    %1004 = vmatprep.subr.bf16.mxu0 0
    %1005 = vmatpush1.bf16.msra.mxu0 0
    %1006 = vmatprep.subr.bf16.mxu0 0
    %1007 = vmatpush1.bf16.msra.mxu0 0
    %1008 = vmatprep.subr.bf16.mxu0 0
    %1009 = vmatpush1.bf16.msra.mxu0 0
    %1010 = vmatprep.subr.bf16.mxu0 0
    %1011 = vmatpush1.bf16.msra.mxu0 0
    %1012 = vmatprep.mubr.bf16.mxu0 0
    %1013 = vmatmul.mubr.bf16.gmra.mrb[0].mxu0 %v978
    %v1014 = vpop.f32.mrb[0].mxu0
    %v1015 = vadd.f32 0.0, %v1014
    %v1016 = vpop.f32.mrb[0].mxu0
    %v1017 = vpop.f32.mrb[0].mxu0
    %v1018 = vpop.f32.mrb[0].mxu0
    %1019 = vdwg.mxu0
    %v1021 = vsel %vm68, %v975, 0
    %1023 = vmatprep.subr.bf16.mxu0 0
    %1024 = vmatpush1.bf16.msra.mxu0 %v59
    %1025 = vmatprep.subr.bf16.mxu0 0
    %1026 = vmatpush1.bf16.msra.mxu0 %v60
    %1027 = vmatprep.subr.bf16.mxu0 0
    %1028 = vmatpush1.bf16.msra.mxu0 0
    %1029 = vmatprep.subr.bf16.mxu0 0
    %1030 = vmatpush1.bf16.msra.mxu0 0
    %1031 = vmatprep.subr.bf16.mxu0 0
    %1032 = vmatpush1.bf16.msra.mxu0 0
    %1033 = vmatprep.subr.bf16.mxu0 0
    %1034 = vmatpush1.bf16.msra.mxu0 0
    %1035 = vmatprep.subr.bf16.mxu0 0
    %1036 = vmatpush1.bf16.msra.mxu0 0
    %1037 = vmatprep.subr.bf16.mxu0 0
    %1038 = vmatpush1.bf16.msra.mxu0 0
    %1039 = vmatprep.subr.bf16.mxu0 0
    %1040 = vmatpush1.bf16.msra.mxu0 0
    %1041 = vmatprep.subr.bf16.mxu0 0
    %1042 = vmatpush1.bf16.msra.mxu0 0
    %1043 = vmatprep.subr.bf16.mxu0 0
    %1044 = vmatpush1.bf16.msra.mxu0 0
    %1045 = vmatprep.subr.bf16.mxu0 0
    %1046 = vmatpush1.bf16.msra.mxu0 0
    %1047 = vmatprep.subr.bf16.mxu0 0
    %1048 = vmatpush1.bf16.msra.mxu0 0
    %1049 = vmatprep.subr.bf16.mxu0 0
    %1050 = vmatpush1.bf16.msra.mxu0 0
    %1051 = vmatprep.subr.bf16.mxu0 0
    %1052 = vmatpush1.bf16.msra.mxu0 0
    %1053 = vmatprep.subr.bf16.mxu0 0
    %1054 = vmatpush1.bf16.msra.mxu0 0
    %1055 = vmatprep.mubr.bf16.mxu0 0
    %1056 = vmatmul.mubr.bf16.gmra.mrb[0].mxu0 %v1021
    %v1057 = vpop.f32.mrb[0].mxu0
    %v1058 = vadd.f32 %v1015, %v1057
    %v1059 = vpop.f32.mrb[0].mxu0
    %v1060 = vpop.f32.mrb[0].mxu0
    %v1061 = vpop.f32.mrb[0].mxu0
    %1062 = vdwg.mxu0
    %v1063 = vpack.c.bf16 %v970, %v970
    %v1065 = vsel %vm68, %v1063, 0
    %1067 = vmatprep.subr.bf16.mxu0 0
    %1068 = vmatpush1.bf16.msra.mxu0 %v160
    %1069 = vmatprep.subr.bf16.mxu0 0
    %1070 = vmatpush1.bf16.msra.mxu0 %v161
    %1071 = vmatprep.subr.bf16.mxu0 0
    %1072 = vmatpush1.bf16.msra.mxu0 0
    %1073 = vmatprep.subr.bf16.mxu0 0
    %1074 = vmatpush1.bf16.msra.mxu0 0
    %1075 = vmatprep.subr.bf16.mxu0 0
    %1076 = vmatpush1.bf16.msra.mxu0 0
    %1077 = vmatprep.subr.bf16.mxu0 0
    %1078 = vmatpush1.bf16.msra.mxu0 0
    %1079 = vmatprep.subr.bf16.mxu0 0
    %1080 = vmatpush1.bf16.msra.mxu0 0
    %1081 = vmatprep.subr.bf16.mxu0 0
    %1082 = vmatpush1.bf16.msra.mxu0 0
    %1083 = vmatprep.subr.bf16.mxu0 0
    %1084 = vmatpush1.bf16.msra.mxu0 0
    %1085 = vmatprep.subr.bf16.mxu0 0
    %1086 = vmatpush1.bf16.msra.mxu0 0
    %1087 = vmatprep.subr.bf16.mxu0 0
    %1088 = vmatpush1.bf16.msra.mxu0 0
    %1089 = vmatprep.subr.bf16.mxu0 0
    %1090 = vmatpush1.bf16.msra.mxu0 0
    %1091 = vmatprep.subr.bf16.mxu0 0
    %1092 = vmatpush1.bf16.msra.mxu0 0
    %1093 = vmatprep.subr.bf16.mxu0 0
    %1094 = vmatpush1.bf16.msra.mxu0 0
    %1095 = vmatprep.subr.bf16.mxu0 0
    %1096 = vmatpush1.bf16.msra.mxu0 0
    %1097 = vmatprep.subr.bf16.mxu0 0
    %1098 = vmatpush1.bf16.msra.mxu0 0
    %1099 = vmatprep.mubr.bf16.mxu0 0
    %1100 = vmatmul.mubr.bf16.gmra.mrb[0].mxu0 %v1065
    %v1101 = vpop.f32.mrb[0].mxu0
    %v1102 = vadd.f32 0.0, %v1101
    %v1103 = vpop.f32.mrb[0].mxu0
    %v1104 = vpop.f32.mrb[0].mxu0
    %v1105 = vpop.f32.mrb[0].mxu0
    %1106 = vdwg.mxu0
    %v1107 = vadd.f32 %v1058, %v1102
    %v1108 = vld [vmem:[#allocation2 + $0x118] sm:$0xff]
    %v1109 = vld [vmem:[#allocation2 + $0x120] sm:$0xff]
    %v1110 = vsel %vm68, %v1107, 0.0
    %1111 = vadd.xlane.f32.xlu0 %v1110
    %v1112 = vpop.xlane.xlu0 %1111
    %v1113 = vmul.f32 %v1112, %v211
    %v1114 = vsub.f32 %v1107, %v1113
    %v1115 = vmul.f32 %v1114, %v1114
    %v1116 = vsel %vm68, %v1115, 0.0
    %1117 = vadd.xlane.f32.xlu0 %v1116
    %v1118 = vpop.xlane.xlu0 %1117
    %v1119 = vmul.f32 %v1118, %v211
    %v1120 = vadd.f32 %v1119, 1e-05
    %v1121 = vrsqrt.pop %v1120
    %v1122 = vmul.f32 %v1108, %v1121
    %1124 = vset.pattern.permute.xlu0 0
    %1125 = vperm.xlu0 %1124, %v1122
    %v1126 = vpop.permute.xlu0 %1125
    %v1128 = vmul.f32 %v1114, %v1126
    %1130 = vset.pattern.permute.xlu0 0
    %1131 = vperm.xlu0 %1130, %v1109
    %v1132 = vpop.permute.xlu0 %1131
    %v1134 = vadd.f32 %v1128, %v1132
    %v1135 = vadd.f32 %v1134, %v687
    %v1136 = vmax.f32 %v1135, 0.0
    %v1137 = vld [vmem:[#allocation2 + $0x188] sm:$0xff]
    %v1138 = vld [vmem:[#allocation2 + $0x190] sm:$0xff]
    %v1139 = vld [vmem:[#allocation2 + $0x198] sm:$0xff]
    %v1140 = vld [vmem:[#allocation2 + $0x1a0] sm:$0xff]
    %v1141 = vld [vmem:[#allocation2 + $0x1a8] sm:$0xff]
    %v1142 = vld [vmem:[#allocation2 + $0x1b0] sm:$0xff]
    %v1143 = vpack.c.bf16 %v1138, %v1137
    %v1144 = vpack.c.bf16 %v1140, %v1139
    %v1145 = vpack.c.bf16 %v1142, %v1141
    %v1146 = vpack.c.bf16 %v1136, %v1136
    %v1148 = vsel %vm243, %v1143, 0
    %v1151 = vsel %vm243, %v1144, 0
    %v1154 = vsel %vm243, %v1145, 0
    %v1157 = vsel %vm250, %v1146, 0
    %1159 = vmatprep.subr.bf16.mxu0 0
    %1160 = vmatpush1.bf16.msra.mxu0 %v1157
    %1161 = vmatprep.subr.bf16.mxu0 0
    %1162 = vmatpush1.bf16.msra.mxu0 0
    %1163 = vmatprep.subr.bf16.mxu0 0
    %1164 = vmatpush1.bf16.msra.mxu0 0
    %1165 = vmatprep.subr.bf16.mxu0 0
    %1166 = vmatpush1.bf16.msra.mxu0 0
    %1167 = vmatprep.subr.bf16.mxu0 0
    %1168 = vmatpush1.bf16.msra.mxu0 0
    %1169 = vmatprep.subr.bf16.mxu0 0
    %1170 = vmatpush1.bf16.msra.mxu0 0
    %1171 = vmatprep.subr.bf16.mxu0 0
    %1172 = vmatpush1.bf16.msra.mxu0 0
    %1173 = vmatprep.subr.bf16.mxu0 0
    %1174 = vmatpush1.bf16.msra.mxu0 0
    %1175 = vmatprep.subr.bf16.mxu0 0
    %1176 = vmatpush1.bf16.msra.mxu0 0
    %1177 = vmatprep.subr.bf16.mxu0 0
    %1178 = vmatpush1.bf16.msra.mxu0 0
    %1179 = vmatprep.subr.bf16.mxu0 0
    %1180 = vmatpush1.bf16.msra.mxu0 0
    %1181 = vmatprep.subr.bf16.mxu0 0
    %1182 = vmatpush1.bf16.msra.mxu0 0
    %1183 = vmatprep.subr.bf16.mxu0 0
    %1184 = vmatpush1.bf16.msra.mxu0 0
    %1185 = vmatprep.subr.bf16.mxu0 0
    %1186 = vmatpush1.bf16.msra.mxu0 0
    %1187 = vmatprep.subr.bf16.mxu0 0
    %1188 = vmatpush1.bf16.msra.mxu0 0
    %1189 = vmatprep.subr.bf16.mxu0 0
    %1190 = vmatpush1.bf16.msra.mxu0 0
    %1191 = vmatprep.mubr.bf16.mxu0 0
    %1192 = vmatmul.mubr.bf16.gmra.mrb[0].mxu0 %v1148
    %v1193 = vpop.f32.mrb[0].mxu0
    %v1194 = vadd.f32 0.0, %v1193
    %v1195 = vpop.f32.mrb[0].mxu0
    %v1196 = vpop.f32.mrb[0].mxu0
    %v1197 = vadd.f32 0.0, %v1196
    %v1198 = vpop.f32.mrb[0].mxu0
    %1199 = vmatprep.mubr.bf16.mxu0 0
    %1200 = vmatmul.mubr.bf16.gmra.mrb[0].mxu0 %v1151
    %v1201 = vpop.f32.mrb[0].mxu0
    %v1202 = vadd.f32 0.0, %v1201
    %v1203 = vpop.f32.mrb[0].mxu0
    %v1204 = vpop.f32.mrb[0].mxu0
    %v1205 = vadd.f32 0.0, %v1204
    %v1206 = vpop.f32.mrb[0].mxu0
    %1207 = vmatprep.mubr.bf16.mxu0 0
    %1208 = vmatmul.mubr.bf16.gmra.mrb[0].mxu0 %v1154
    %v1209 = vpop.f32.mrb[0].mxu0
    %v1210 = vadd.f32 0.0, %v1209
    %v1211 = vpop.f32.mrb[0].mxu0
    %v1212 = vpop.f32.mrb[0].mxu0
    %v1213 = vadd.f32 0.0, %v1212
    %v1214 = vpop.f32.mrb[0].mxu0
    %1215 = vdwg.mxu0
    %v1216 = vpack.c.bf16 %v1197, %v1194
    %v1217 = vld [vmem:[#allocation2 + $0x128] sm:$0xff]
    %v1218 = vld [vmem:[#allocation2 + $0x130] sm:$0xff]
    %v1219 = vld [vmem:[#allocation2 + $0x138] sm:$0xff]
    %v1220 = vld [vmem:[#allocation2 + $0x140] sm:$0xff]
    %v1221 = vpack.c.bf16 %v1218, %v1217
    %v1222 = vpack.c.bf16 %v1220, %v1219
    %v1223 = vpack.c.bf16 %v1205, %v1202
    %v1224 = vld [vmem:[#allocation2 + $0x148] sm:$0xff]
    %v1225 = vld [vmem:[#allocation2 + $0x150] sm:$0xff]
    %v1226 = vld [vmem:[#allocation2 + $0x158] sm:$0xff]
    %v1227 = vld [vmem:[#allocation2 + $0x160] sm:$0xff]
    %v1228 = vpack.c.bf16 %v1225, %v1224
    %v1229 = vpack.c.bf16 %v1227, %v1226
    %v1231 = vsel %vm68, %v1223, 0
    %1233 = vmatprep.subr.bf16.mxu0 0
    %1234 = vmatpush1.bf16.msra.mxu0 %v1228
    %1235 = vmatprep.subr.bf16.mxu0 0
    %1236 = vmatpush1.bf16.msra.mxu0 %v1229
    %1237 = vmatprep.subr.bf16.mxu0 0
    %1238 = vmatpush1.bf16.msra.mxu0 0
    %1239 = vmatprep.subr.bf16.mxu0 0
    %1240 = vmatpush1.bf16.msra.mxu0 0
    %1241 = vmatprep.subr.bf16.mxu0 0
    %1242 = vmatpush1.bf16.msra.mxu0 0
    %1243 = vmatprep.subr.bf16.mxu0 0
    %1244 = vmatpush1.bf16.msra.mxu0 0
    %1245 = vmatprep.subr.bf16.mxu0 0
    %1246 = vmatpush1.bf16.msra.mxu0 0
    %1247 = vmatprep.subr.bf16.mxu0 0
    %1248 = vmatpush1.bf16.msra.mxu0 0
    %1249 = vmatprep.subr.bf16.mxu0 0
    %1250 = vmatpush1.bf16.msra.mxu0 0
    %1251 = vmatprep.subr.bf16.mxu0 0
    %1252 = vmatpush1.bf16.msra.mxu0 0
    %1253 = vmatprep.subr.bf16.mxu0 0
    %1254 = vmatpush1.bf16.msra.mxu0 0
    %1255 = vmatprep.subr.bf16.mxu0 0
    %1256 = vmatpush1.bf16.msra.mxu0 0
    %1257 = vmatprep.subr.bf16.mxu0 0
    %1258 = vmatpush1.bf16.msra.mxu0 0
    %1259 = vmatprep.subr.bf16.mxu0 0
    %1260 = vmatpush1.bf16.msra.mxu0 0
    %1261 = vmatprep.subr.bf16.mxu0 0
    %1262 = vmatpush1.bf16.msra.mxu0 0
    %1263 = vmatprep.subr.bf16.mxu0 0
    %1264 = vmatpush1.bf16.msra.mxu0 0
    %1265 = vmatprep.mubr.bf16.mxu0 0
    %1266 = vmatmul.mubr.bf16.gmra.mrb[0].mxu0 %v1231
    %v1267 = vpop.f32.mrb[0].mxu0
    %v1268 = vadd.f32 0.0, %v1267
    %v1269 = vpop.f32.mrb[0].mxu0
    %v1270 = vpop.f32.mrb[0].mxu0
    %v1271 = vadd.f32 0.0, %v1270
    %v1272 = vpop.f32.mrb[0].mxu0
    %1273 = vdwg.mxu0
    %v1275 = vsel %vm68, %v1216, 0
    %1277 = vmatprep.subr.bf16.mxu0 0
    %1278 = vmatpush1.bf16.msra.mxu0 %v1221
    %1279 = vmatprep.subr.bf16.mxu0 0
    %1280 = vmatpush1.bf16.msra.mxu0 %v1222
    %1281 = vmatprep.subr.bf16.mxu0 0
    %1282 = vmatpush1.bf16.msra.mxu0 0
    %1283 = vmatprep.subr.bf16.mxu0 0
    %1284 = vmatpush1.bf16.msra.mxu0 0
    %1285 = vmatprep.subr.bf16.mxu0 0
    %1286 = vmatpush1.bf16.msra.mxu0 0
    %1287 = vmatprep.subr.bf16.mxu0 0
    %1288 = vmatpush1.bf16.msra.mxu0 0
    %1289 = vmatprep.subr.bf16.mxu0 0
    %1290 = vmatpush1.bf16.msra.mxu0 0
    %1291 = vmatprep.subr.bf16.mxu0 0
    %1292 = vmatpush1.bf16.msra.mxu0 0
    %1293 = vmatprep.subr.bf16.mxu0 0
    %1294 = vmatpush1.bf16.msra.mxu0 0
    %1295 = vmatprep.subr.bf16.mxu0 0
    %1296 = vmatpush1.bf16.msra.mxu0 0
    %1297 = vmatprep.subr.bf16.mxu0 0
    %1298 = vmatpush1.bf16.msra.mxu0 0
    %1299 = vmatprep.subr.bf16.mxu0 0
    %1300 = vmatpush1.bf16.msra.mxu0 0
    %1301 = vmatprep.subr.bf16.mxu0 0
    %1302 = vmatpush1.bf16.msra.mxu0 0
    %1303 = vmatprep.subr.bf16.mxu0 0
    %1304 = vmatpush1.bf16.msra.mxu0 0
    %1305 = vmatprep.subr.bf16.mxu0 0
    %1306 = vmatpush1.bf16.msra.mxu0 0
    %1307 = vmatprep.subr.bf16.mxu0 0
    %1308 = vmatpush1.bf16.msra.mxu0 0
    %1309 = vmatprep.mubr.bf16.mxu0 0
    %1310 = vmatmul.mubr.bf16.gmra.mrb[0].mxu0 %v1275
    %v1311 = vpop.f32.mrb[0].mxu0
    %v1312 = vadd.f32 %v1268, %v1311
    %v1313 = vpop.f32.mrb[0].mxu0
    %v1314 = vpop.f32.mrb[0].mxu0
    %v1315 = vadd.f32 %v1271, %v1314
    %v1316 = vpop.f32.mrb[0].mxu0
    %1317 = vdwg.mxu0
    %v1318 = vpack.c.bf16 %v1213, %v1210
    %v1319 = vld [vmem:[#allocation2 + $0x168] sm:$0xff]
    %v1320 = vld [vmem:[#allocation2 + $0x170] sm:$0xff]
    %v1321 = vld [vmem:[#allocation2 + $0x178] sm:$0xff]
    %v1322 = vld [vmem:[#allocation2 + $0x180] sm:$0xff]
    %v1323 = vpack.c.bf16 %v1320, %v1319
    %v1324 = vpack.c.bf16 %v1322, %v1321
    %v1326 = vsel %vm68, %v1318, 0
    %1328 = vmatprep.subr.bf16.mxu0 0
    %1329 = vmatpush1.bf16.msra.mxu0 %v1323
    %1330 = vmatprep.subr.bf16.mxu0 0
    %1331 = vmatpush1.bf16.msra.mxu0 %v1324
    %1332 = vmatprep.subr.bf16.mxu0 0
    %1333 = vmatpush1.bf16.msra.mxu0 0
    %1334 = vmatprep.subr.bf16.mxu0 0
    %1335 = vmatpush1.bf16.msra.mxu0 0
    %1336 = vmatprep.subr.bf16.mxu0 0
    %1337 = vmatpush1.bf16.msra.mxu0 0
    %1338 = vmatprep.subr.bf16.mxu0 0
    %1339 = vmatpush1.bf16.msra.mxu0 0
    %1340 = vmatprep.subr.bf16.mxu0 0
    %1341 = vmatpush1.bf16.msra.mxu0 0
    %1342 = vmatprep.subr.bf16.mxu0 0
    %1343 = vmatpush1.bf16.msra.mxu0 0
    %1344 = vmatprep.subr.bf16.mxu0 0
    %1345 = vmatpush1.bf16.msra.mxu0 0
    %1346 = vmatprep.subr.bf16.mxu0 0
    %1347 = vmatpush1.bf16.msra.mxu0 0
    %1348 = vmatprep.subr.bf16.mxu0 0
    %1349 = vmatpush1.bf16.msra.mxu0 0
    %1350 = vmatprep.subr.bf16.mxu0 0
    %1351 = vmatpush1.bf16.msra.mxu0 0
    %1352 = vmatprep.subr.bf16.mxu0 0
    %1353 = vmatpush1.bf16.msra.mxu0 0
    %1354 = vmatprep.subr.bf16.mxu0 0
    %1355 = vmatpush1.bf16.msra.mxu0 0
    %1356 = vmatprep.subr.bf16.mxu0 0
    %1357 = vmatpush1.bf16.msra.mxu0 0
    %1358 = vmatprep.subr.bf16.mxu0 0
    %1359 = vmatpush1.bf16.msra.mxu0 0
    %1360 = vmatprep.mubr.bf16.mxu0 0
    %1361 = vmatmul.mubr.bf16.gmra.mrb[0].mxu0 %v1326
    %v1362 = vpop.f32.mrb[0].mxu0
    %v1363 = vadd.f32 0.0, %v1362
    %v1364 = vpop.f32.mrb[0].mxu0
    %v1365 = vpop.f32.mrb[0].mxu0
    %v1366 = vadd.f32 0.0, %v1365
    %v1367 = vpop.f32.mrb[0].mxu0
    %1368 = vdwg.mxu0
    %v1369 = vadd.f32 %v1312, %v1363
    %v1370 = vadd.f32 %v1315, %v1366
    %v1371 = vld [vmem:[#allocation2 + $0x1b8] sm:$0xff]
    %v1372 = vld [vmem:[#allocation2 + $0x1c0] sm:$0xff]
    %v1373 = vld [vmem:[#allocation2 + $0x1c8] sm:$0xff]
    %v1374 = vld [vmem:[#allocation2 + $0x1d0] sm:$0xff]
    %vm1375 = vcmask 130048
    %v1376 = vsel %vm1375, %v1369, 0.0
    %1377 = vadd.xlane.f32.xlu0 %v1376
    %v1378 = vpop.xlane.xlu0 %1377
    %v1379 = vsel %vm1375, %v1370, 0.0
    %1380 = vadd.xlane.f32.xlu0 %v1379
    %v1381 = vpop.xlane.xlu0 %1380
    %v1382 = vrcp.pop 16.0
    %v1383 = vmul.f32 %v1378, %v1382
    %v1384 = vmul.f32 %v1381, %v1382
    %v1385 = vsub.f32 %v1369, %v1383
    %v1386 = vsub.f32 %v1370, %v1384
    %v1387 = vmul.f32 %v1385, %v1385
    %v1388 = vmul.f32 %v1386, %v1386
    %v1389 = vsel %vm1375, %v1387, 0.0
    %1390 = vadd.xlane.f32.xlu0 %v1389
    %v1391 = vpop.xlane.xlu0 %1390
    %v1392 = vsel %vm1375, %v1388, 0.0
    %1393 = vadd.xlane.f32.xlu0 %v1392
    %v1394 = vpop.xlane.xlu0 %1393
    %v1395 = vmul.f32 %v1391, %v1382
    %v1396 = vmul.f32 %v1394, %v1382
    %v1397 = vadd.f32 %v1395, 1e-05
    %v1398 = vadd.f32 %v1396, 1e-05
    %v1399 = vrsqrt.pop %v1397
    %v1400 = vrsqrt.pop %v1398
    %v1401 = vmul.f32 %v1371, %v1399
    %v1402 = vmul.f32 %v1372, %v1400
    %1404 = vset.pattern.permute.xlu0 0
    %1405 = vperm.xlu0 %1404, %v1401
    %v1406 = vpop.permute.xlu0 %1405
    %1409 = vset.pattern.permute.xlu0 0
    %1410 = vperm.xlu0 %1409, %v1402
    %v1411 = vpop.permute.xlu0 %1410
    %v1413 = vmul.f32 %v1385, %v1406
    %v1414 = vmul.f32 %v1386, %v1411
    %1416 = vset.pattern.permute.xlu0 0
    %1417 = vperm.xlu0 %1416, %v1373
    %v1418 = vpop.permute.xlu0 %1417
    %1421 = vset.pattern.permute.xlu0 0
    %1422 = vperm.xlu0 %1421, %v1374
    %v1423 = vpop.permute.xlu0 %1422
    %v1425 = vadd.f32 %v1413, %v1418
    %v1426 = vadd.f32 %v1414, %v1423
    %v1427 = vmax.f32 %v1425, 0.0
    %v1428 = vmax.f32 %v1426, 0.0
    %v1429 = vld [vmem:[#allocation2 + $0x208] sm:$0xff]
    %v1430 = vld [vmem:[#allocation2 + $0x210] sm:$0xff]
    %v1431 = vld [vmem:[#allocation2 + $0x218] sm:$0xff]
    %v1432 = vld [vmem:[#allocation2 + $0x220] sm:$0xff]
    %v1433 = vld [vmem:[#allocation2 + $0x228] sm:$0xff]
    %v1434 = vld [vmem:[#allocation2 + $0x230] sm:$0xff]
    %v1435 = vpack.c.bf16 %v1430, %v1429
    %v1436 = vpack.c.bf16 %v1432, %v1431
    %v1437 = vpack.c.bf16 %v1434, %v1433
    %v1438 = vpack.c.bf16 %v1428, %v1427
    %v1440 = vsel %vm1375, %v1435, 0
    %v1443 = vsel %vm1375, %v1436, 0
    %v1446 = vsel %vm1375, %v1437, 0
    %1448 = vmatprep.subr.bf16.mxu0 0
    %1449 = vmatpush1.bf16.msra.mxu0 %v1438
    %1450 = vmatprep.subr.bf16.mxu0 0
    %1451 = vmatpush1.bf16.msra.mxu0 0
    %1452 = vmatprep.subr.bf16.mxu0 0
    %1453 = vmatpush1.bf16.msra.mxu0 0
    %1454 = vmatprep.subr.bf16.mxu0 0
    %1455 = vmatpush1.bf16.msra.mxu0 0
    %1456 = vmatprep.subr.bf16.mxu0 0
    %1457 = vmatpush1.bf16.msra.mxu0 0
    %1458 = vmatprep.subr.bf16.mxu0 0
    %1459 = vmatpush1.bf16.msra.mxu0 0
    %1460 = vmatprep.subr.bf16.mxu0 0
    %1461 = vmatpush1.bf16.msra.mxu0 0
    %1462 = vmatprep.subr.bf16.mxu0 0
    %1463 = vmatpush1.bf16.msra.mxu0 0
    %1464 = vmatprep.subr.bf16.mxu0 0
    %1465 = vmatpush1.bf16.msra.mxu0 0
    %1466 = vmatprep.subr.bf16.mxu0 0
    %1467 = vmatpush1.bf16.msra.mxu0 0
    %1468 = vmatprep.subr.bf16.mxu0 0
    %1469 = vmatpush1.bf16.msra.mxu0 0
    %1470 = vmatprep.subr.bf16.mxu0 0
    %1471 = vmatpush1.bf16.msra.mxu0 0
    %1472 = vmatprep.subr.bf16.mxu0 0
    %1473 = vmatpush1.bf16.msra.mxu0 0
    %1474 = vmatprep.subr.bf16.mxu0 0
    %1475 = vmatpush1.bf16.msra.mxu0 0
    %1476 = vmatprep.subr.bf16.mxu0 0
    %1477 = vmatpush1.bf16.msra.mxu0 0
    %1478 = vmatprep.subr.bf16.mxu0 0
    %1479 = vmatpush1.bf16.msra.mxu0 0
    %1480 = vmatprep.mubr.bf16.mxu0 0
    %1481 = vmatmul.mubr.bf16.gmra.mrb[0].mxu0 %v1440
    %v1482 = vpop.f32.mrb[0].mxu0
    %v1483 = vadd.f32 0.0, %v1482
    %v1484 = vpop.f32.mrb[0].mxu0
    %v1485 = vpop.f32.mrb[0].mxu0
    %v1486 = vadd.f32 0.0, %v1485
    %v1487 = vpop.f32.mrb[0].mxu0
    %1488 = vmatprep.mubr.bf16.mxu0 0
    %1489 = vmatmul.mubr.bf16.gmra.mrb[0].mxu0 %v1443
    %v1490 = vpop.f32.mrb[0].mxu0
    %v1491 = vadd.f32 0.0, %v1490
    %v1492 = vpop.f32.mrb[0].mxu0
    %v1493 = vpop.f32.mrb[0].mxu0
    %v1494 = vadd.f32 0.0, %v1493
    %v1495 = vpop.f32.mrb[0].mxu0
    %1496 = vmatprep.mubr.bf16.mxu0 0
    %1497 = vmatmul.mubr.bf16.gmra.mrb[0].mxu0 %v1446
    %v1498 = vpop.f32.mrb[0].mxu0
    %v1499 = vadd.f32 0.0, %v1498
    %v1500 = vpop.f32.mrb[0].mxu0
    %v1501 = vpop.f32.mrb[0].mxu0
    %v1502 = vadd.f32 0.0, %v1501
    %v1503 = vpop.f32.mrb[0].mxu0
    %1504 = vdwg.mxu0
    %v1505 = vpack.c.bf16 %v1486, %v1483
    %v1506 = vld [vmem:[#allocation2 + $0x1d8] sm:$0xff]
    %v1507 = vld [vmem:[#allocation2 + $0x1e0] sm:$0xff]
    %v1508 = vpack.c.bf16 %v1507, %v1506
    %v1509 = vpack.c.bf16 %v1494, %v1491
    %v1510 = vld [vmem:[#allocation2 + $0x1e8] sm:$0xff]
    %v1511 = vld [vmem:[#allocation2 + $0x1f0] sm:$0xff]
    %v1512 = vpack.c.bf16 %v1511, %v1510
    %v1514 = vsel %vm1375, %v1509, 0
    %1516 = vmatprep.subr.bf16.mxu0 0
    %1517 = vmatpush1.bf16.msra.mxu0 %v1512
    %1518 = vmatprep.subr.bf16.mxu0 0
    %1519 = vmatpush1.bf16.msra.mxu0 0
    %1520 = vmatprep.subr.bf16.mxu0 0
    %1521 = vmatpush1.bf16.msra.mxu0 0
    %1522 = vmatprep.subr.bf16.mxu0 0
    %1523 = vmatpush1.bf16.msra.mxu0 0
    %1524 = vmatprep.subr.bf16.mxu0 0
    %1525 = vmatpush1.bf16.msra.mxu0 0
    %1526 = vmatprep.subr.bf16.mxu0 0
    %1527 = vmatpush1.bf16.msra.mxu0 0
    %1528 = vmatprep.subr.bf16.mxu0 0
    %1529 = vmatpush1.bf16.msra.mxu0 0
    %1530 = vmatprep.subr.bf16.mxu0 0
    %1531 = vmatpush1.bf16.msra.mxu0 0
    %1532 = vmatprep.subr.bf16.mxu0 0
    %1533 = vmatpush1.bf16.msra.mxu0 0
    %1534 = vmatprep.subr.bf16.mxu0 0
    %1535 = vmatpush1.bf16.msra.mxu0 0
    %1536 = vmatprep.subr.bf16.mxu0 0
    %1537 = vmatpush1.bf16.msra.mxu0 0
    %1538 = vmatprep.subr.bf16.mxu0 0
    %1539 = vmatpush1.bf16.msra.mxu0 0
    %1540 = vmatprep.subr.bf16.mxu0 0
    %1541 = vmatpush1.bf16.msra.mxu0 0
    %1542 = vmatprep.subr.bf16.mxu0 0
    %1543 = vmatpush1.bf16.msra.mxu0 0
    %1544 = vmatprep.subr.bf16.mxu0 0
    %1545 = vmatpush1.bf16.msra.mxu0 0
    %1546 = vmatprep.subr.bf16.mxu0 0
    %1547 = vmatpush1.bf16.msra.mxu0 0
    %1548 = vmatprep.mubr.bf16.mxu0 0
    %1549 = vmatmul.mubr.bf16.gmra.mrb[0].mxu0 %v1514
    %v1550 = vpop.f32.mrb[0].mxu0
    %v1551 = vadd.f32 0.0, %v1550
    %v1552 = vpop.f32.mrb[0].mxu0
    %v1553 = vpop.f32.mrb[0].mxu0
    %v1554 = vadd.f32 0.0, %v1553
    %v1555 = vpop.f32.mrb[0].mxu0
    %1556 = vdwg.mxu0
    %v1558 = vsel %vm1375, %v1505, 0
    %1560 = vmatprep.subr.bf16.mxu0 0
    %1561 = vmatpush1.bf16.msra.mxu0 %v1508
    %1562 = vmatprep.subr.bf16.mxu0 0
    %1563 = vmatpush1.bf16.msra.mxu0 0
    %1564 = vmatprep.subr.bf16.mxu0 0
    %1565 = vmatpush1.bf16.msra.mxu0 0
    %1566 = vmatprep.subr.bf16.mxu0 0
    %1567 = vmatpush1.bf16.msra.mxu0 0
    %1568 = vmatprep.subr.bf16.mxu0 0
    %1569 = vmatpush1.bf16.msra.mxu0 0
    %1570 = vmatprep.subr.bf16.mxu0 0
    %1571 = vmatpush1.bf16.msra.mxu0 0
    %1572 = vmatprep.subr.bf16.mxu0 0
    %1573 = vmatpush1.bf16.msra.mxu0 0
    %1574 = vmatprep.subr.bf16.mxu0 0
    %1575 = vmatpush1.bf16.msra.mxu0 0
    %1576 = vmatprep.subr.bf16.mxu0 0
    %1577 = vmatpush1.bf16.msra.mxu0 0
    %1578 = vmatprep.subr.bf16.mxu0 0
    %1579 = vmatpush1.bf16.msra.mxu0 0
    %1580 = vmatprep.subr.bf16.mxu0 0
    %1581 = vmatpush1.bf16.msra.mxu0 0
    %1582 = vmatprep.subr.bf16.mxu0 0
    %1583 = vmatpush1.bf16.msra.mxu0 0
    %1584 = vmatprep.subr.bf16.mxu0 0
    %1585 = vmatpush1.bf16.msra.mxu0 0
    %1586 = vmatprep.subr.bf16.mxu0 0
    %1587 = vmatpush1.bf16.msra.mxu0 0
    %1588 = vmatprep.subr.bf16.mxu0 0
    %1589 = vmatpush1.bf16.msra.mxu0 0
    %1590 = vmatprep.subr.bf16.mxu0 0
    %1591 = vmatpush1.bf16.msra.mxu0 0
    %1592 = vmatprep.mubr.bf16.mxu0 0
    %1593 = vmatmul.mubr.bf16.gmra.mrb[0].mxu0 %v1558
    %v1594 = vpop.f32.mrb[0].mxu0
    %v1595 = vadd.f32 %v1551, %v1594
    %v1596 = vpop.f32.mrb[0].mxu0
    %v1597 = vpop.f32.mrb[0].mxu0
    %v1598 = vadd.f32 %v1554, %v1597
    %v1599 = vpop.f32.mrb[0].mxu0
    %1600 = vdwg.mxu0
    %v1601 = vpack.c.bf16 %v1502, %v1499
    %v1602 = vld [vmem:[#allocation2 + $0x1f8] sm:$0xff]
    %v1603 = vld [vmem:[#allocation2 + $0x200] sm:$0xff]
    %v1604 = vpack.c.bf16 %v1603, %v1602
    %v1606 = vsel %vm1375, %v1601, 0
    %1608 = vmatprep.subr.bf16.mxu0 0
    %1609 = vmatpush1.bf16.msra.mxu0 %v1604
    %1610 = vmatprep.subr.bf16.mxu0 0
    %1611 = vmatpush1.bf16.msra.mxu0 0
    %1612 = vmatprep.subr.bf16.mxu0 0
    %1613 = vmatpush1.bf16.msra.mxu0 0
    %1614 = vmatprep.subr.bf16.mxu0 0
    %1615 = vmatpush1.bf16.msra.mxu0 0
    %1616 = vmatprep.subr.bf16.mxu0 0
    %1617 = vmatpush1.bf16.msra.mxu0 0
    %1618 = vmatprep.subr.bf16.mxu0 0
    %1619 = vmatpush1.bf16.msra.mxu0 0
    %1620 = vmatprep.subr.bf16.mxu0 0
    %1621 = vmatpush1.bf16.msra.mxu0 0
    %1622 = vmatprep.subr.bf16.mxu0 0
    %1623 = vmatpush1.bf16.msra.mxu0 0
    %1624 = vmatprep.subr.bf16.mxu0 0
    %1625 = vmatpush1.bf16.msra.mxu0 0
    %1626 = vmatprep.subr.bf16.mxu0 0
    %1627 = vmatpush1.bf16.msra.mxu0 0
    %1628 = vmatprep.subr.bf16.mxu0 0
    %1629 = vmatpush1.bf16.msra.mxu0 0
    %1630 = vmatprep.subr.bf16.mxu0 0
    %1631 = vmatpush1.bf16.msra.mxu0 0
    %1632 = vmatprep.subr.bf16.mxu0 0
    %1633 = vmatpush1.bf16.msra.mxu0 0
    %1634 = vmatprep.subr.bf16.mxu0 0
    %1635 = vmatpush1.bf16.msra.mxu0 0
    %1636 = vmatprep.subr.bf16.mxu0 0
    %1637 = vmatpush1.bf16.msra.mxu0 0
    %1638 = vmatprep.subr.bf16.mxu0 0
    %1639 = vmatpush1.bf16.msra.mxu0 0
    %1640 = vmatprep.mubr.bf16.mxu0 0
    %1641 = vmatmul.mubr.bf16.gmra.mrb[0].mxu0 %v1606
    %v1642 = vpop.f32.mrb[0].mxu0
    %v1643 = vadd.f32 0.0, %v1642
    %v1644 = vpop.f32.mrb[0].mxu0
    %v1645 = vpop.f32.mrb[0].mxu0
    %v1646 = vadd.f32 0.0, %v1645
    %v1647 = vpop.f32.mrb[0].mxu0
    %1648 = vdwg.mxu0
    %v1649 = vadd.f32 %v1595, %v1643
    %v1650 = vadd.f32 %v1598, %v1646
    %v1651 = vld [vmem:[#allocation2 + $0x238] sm:$0xff]
    %v1652 = vld [vmem:[#allocation2 + $0x240] sm:$0xff]
    %v1653 = vld [vmem:[#allocation2 + $0x248] sm:$0xff]
    %v1654 = vld [vmem:[#allocation2 + $0x250] sm:$0xff]
    %v1655 = vsel %vm1375, %v1649, 0.0
    %1656 = vadd.xlane.f32.xlu0 %v1655
    %v1657 = vpop.xlane.xlu0 %1656
    %v1658 = vsel %vm1375, %v1650, 0.0
    %1659 = vadd.xlane.f32.xlu0 %v1658
    %v1660 = vpop.xlane.xlu0 %1659
    %v1661 = vmul.f32 %v1657, %v1382
    %v1662 = vmul.f32 %v1660, %v1382
    %v1663 = vsub.f32 %v1649, %v1661
    %v1664 = vsub.f32 %v1650, %v1662
    %v1665 = vmul.f32 %v1663, %v1663
    %v1666 = vmul.f32 %v1664, %v1664
    %v1667 = vsel %vm1375, %v1665, 0.0
    %1668 = vadd.xlane.f32.xlu0 %v1667
    %v1669 = vpop.xlane.xlu0 %1668
    %v1670 = vsel %vm1375, %v1666, 0.0
    %1671 = vadd.xlane.f32.xlu0 %v1670
    %v1672 = vpop.xlane.xlu0 %1671
    %v1673 = vmul.f32 %v1669, %v1382
    %v1674 = vmul.f32 %v1672, %v1382
    %v1675 = vadd.f32 %v1673, 1e-05
    %v1676 = vadd.f32 %v1674, 1e-05
    %v1677 = vrsqrt.pop %v1675
    %v1678 = vrsqrt.pop %v1676
    %v1679 = vmul.f32 %v1651, %v1677
    %v1680 = vmul.f32 %v1652, %v1678
    %1682 = vset.pattern.permute.xlu0 0
    %1683 = vperm.xlu0 %1682, %v1679
    %v1684 = vpop.permute.xlu0 %1683
    %1687 = vset.pattern.permute.xlu0 0
    %1688 = vperm.xlu0 %1687, %v1680
    %v1689 = vpop.permute.xlu0 %1688
    %v1691 = vmul.f32 %v1663, %v1684
    %v1692 = vmul.f32 %v1664, %v1689
    %1694 = vset.pattern.permute.xlu0 0
    %1695 = vperm.xlu0 %1694, %v1653
    %v1696 = vpop.permute.xlu0 %1695
    %1699 = vset.pattern.permute.xlu0 0
    %1700 = vperm.xlu0 %1699, %v1654
    %v1701 = vpop.permute.xlu0 %1700
    %v1703 = vadd.f32 %v1691, %v1696
    %v1704 = vadd.f32 %v1692, %v1701
    %v1705 = vld [vmem:[#allocation2 + $0x278] sm:$0xff]
    %v1706 = vld [vmem:[#allocation2 + $0x280] sm:$0xff]
    %v1707 = vpack.c.bf16 %v1706, %v1705
    %v1709 = vsel %vm243, %v1707, 0
    %1711 = vmatprep.subr.bf16.mxu0 0
    %1712 = vmatpush1.bf16.msra.mxu0 %v1157
    %1713 = vmatprep.subr.bf16.mxu0 0
    %1714 = vmatpush1.bf16.msra.mxu0 0
    %1715 = vmatprep.subr.bf16.mxu0 0
    %1716 = vmatpush1.bf16.msra.mxu0 0
    %1717 = vmatprep.subr.bf16.mxu0 0
    %1718 = vmatpush1.bf16.msra.mxu0 0
    %1719 = vmatprep.subr.bf16.mxu0 0
    %1720 = vmatpush1.bf16.msra.mxu0 0
    %1721 = vmatprep.subr.bf16.mxu0 0
    %1722 = vmatpush1.bf16.msra.mxu0 0
    %1723 = vmatprep.subr.bf16.mxu0 0
    %1724 = vmatpush1.bf16.msra.mxu0 0
    %1725 = vmatprep.subr.bf16.mxu0 0
    %1726 = vmatpush1.bf16.msra.mxu0 0
    %1727 = vmatprep.subr.bf16.mxu0 0
    %1728 = vmatpush1.bf16.msra.mxu0 0
    %1729 = vmatprep.subr.bf16.mxu0 0
    %1730 = vmatpush1.bf16.msra.mxu0 0
    %1731 = vmatprep.subr.bf16.mxu0 0
    %1732 = vmatpush1.bf16.msra.mxu0 0
    %1733 = vmatprep.subr.bf16.mxu0 0
    %1734 = vmatpush1.bf16.msra.mxu0 0
    %1735 = vmatprep.subr.bf16.mxu0 0
    %1736 = vmatpush1.bf16.msra.mxu0 0
    %1737 = vmatprep.subr.bf16.mxu0 0
    %1738 = vmatpush1.bf16.msra.mxu0 0
    %1739 = vmatprep.subr.bf16.mxu0 0
    %1740 = vmatpush1.bf16.msra.mxu0 0
    %1741 = vmatprep.subr.bf16.mxu0 0
    %1742 = vmatpush1.bf16.msra.mxu0 0
    %1743 = vmatprep.mubr.bf16.mxu0 0
    %1744 = vmatmul.mubr.bf16.gmra.mrb[0].mxu0 %v1709
    %v1745 = vpop.f32.mrb[0].mxu0
    %v1746 = vadd.f32 0.0, %v1745
    %v1747 = vpop.f32.mrb[0].mxu0
    %v1748 = vpop.f32.mrb[0].mxu0
    %v1749 = vadd.f32 0.0, %v1748
    %v1750 = vpop.f32.mrb[0].mxu0
    %1751 = vdwg.mxu0
    %v1752 = vpack.c.bf16 %v1749, %v1746
    %v1753 = vld [vmem:[#allocation2 + $0x258] sm:$0xff]
    %v1754 = vld [vmem:[#allocation2 + $0x260] sm:$0xff]
    %v1755 = vld [vmem:[#allocation2 + $0x268] sm:$0xff]
    %v1756 = vld [vmem:[#allocation2 + $0x270] sm:$0xff]
    %v1757 = vpack.c.bf16 %v1754, %v1753
    %v1758 = vpack.c.bf16 %v1756, %v1755
    %v1760 = vsel %vm68, %v1752, 0
    %1762 = vmatprep.subr.bf16.mxu0 0
    %1763 = vmatpush1.bf16.msra.mxu0 %v1757
    %1764 = vmatprep.subr.bf16.mxu0 0
    %1765 = vmatpush1.bf16.msra.mxu0 %v1758
    %1766 = vmatprep.subr.bf16.mxu0 0
    %1767 = vmatpush1.bf16.msra.mxu0 0
    %1768 = vmatprep.subr.bf16.mxu0 0
    %1769 = vmatpush1.bf16.msra.mxu0 0
    %1770 = vmatprep.subr.bf16.mxu0 0
    %1771 = vmatpush1.bf16.msra.mxu0 0
    %1772 = vmatprep.subr.bf16.mxu0 0
    %1773 = vmatpush1.bf16.msra.mxu0 0
    %1774 = vmatprep.subr.bf16.mxu0 0
    %1775 = vmatpush1.bf16.msra.mxu0 0
    %1776 = vmatprep.subr.bf16.mxu0 0
    %1777 = vmatpush1.bf16.msra.mxu0 0
    %1778 = vmatprep.subr.bf16.mxu0 0
    %1779 = vmatpush1.bf16.msra.mxu0 0
    %1780 = vmatprep.subr.bf16.mxu0 0
    %1781 = vmatpush1.bf16.msra.mxu0 0
    %1782 = vmatprep.subr.bf16.mxu0 0
    %1783 = vmatpush1.bf16.msra.mxu0 0
    %1784 = vmatprep.subr.bf16.mxu0 0
    %1785 = vmatpush1.bf16.msra.mxu0 0
    %1786 = vmatprep.subr.bf16.mxu0 0
    %1787 = vmatpush1.bf16.msra.mxu0 0
    %1788 = vmatprep.subr.bf16.mxu0 0
    %1789 = vmatpush1.bf16.msra.mxu0 0
    %1790 = vmatprep.subr.bf16.mxu0 0
    %1791 = vmatpush1.bf16.msra.mxu0 0
    %1792 = vmatprep.subr.bf16.mxu0 0
    %1793 = vmatpush1.bf16.msra.mxu0 0
    %1794 = vmatprep.mubr.bf16.mxu0 0
    %1795 = vmatmul.mubr.bf16.gmra.mrb[0].mxu0 %v1760
    %v1796 = vpop.f32.mrb[0].mxu0
    %v1797 = vadd.f32 0.0, %v1796
    %v1798 = vpop.f32.mrb[0].mxu0
    %v1799 = vpop.f32.mrb[0].mxu0
    %v1800 = vadd.f32 0.0, %v1799
    %v1801 = vpop.f32.mrb[0].mxu0
    %1802 = vdwg.mxu0
    %v1803 = vld [vmem:[#allocation2 + $0x288] sm:$0xff]
    %v1804 = vld [vmem:[#allocation2 + $0x290] sm:$0xff]
    %v1805 = vld [vmem:[#allocation2 + $0x298] sm:$0xff]
    %v1806 = vld [vmem:[#allocation2 + $0x2a0] sm:$0xff]
    %v1807 = vsel %vm1375, %v1797, 0.0
    %1808 = vadd.xlane.f32.xlu0 %v1807
    %v1809 = vpop.xlane.xlu0 %1808
    %v1810 = vsel %vm1375, %v1800, 0.0
    %1811 = vadd.xlane.f32.xlu0 %v1810
    %v1812 = vpop.xlane.xlu0 %1811
    %v1813 = vmul.f32 %v1809, %v1382
    %v1814 = vmul.f32 %v1812, %v1382
    %v1815 = vsub.f32 %v1797, %v1813
    %v1816 = vsub.f32 %v1800, %v1814
    %v1817 = vmul.f32 %v1815, %v1815
    %v1818 = vmul.f32 %v1816, %v1816
    %v1819 = vsel %vm1375, %v1817, 0.0
    %1820 = vadd.xlane.f32.xlu0 %v1819
    %v1821 = vpop.xlane.xlu0 %1820
    %v1822 = vsel %vm1375, %v1818, 0.0
    %1823 = vadd.xlane.f32.xlu0 %v1822
    %v1824 = vpop.xlane.xlu0 %1823
    %v1825 = vmul.f32 %v1821, %v1382
    %v1826 = vmul.f32 %v1824, %v1382
    %v1827 = vadd.f32 %v1825, 1e-05
    %v1828 = vadd.f32 %v1826, 1e-05
    %v1829 = vrsqrt.pop %v1827
    %v1830 = vrsqrt.pop %v1828
    %v1831 = vmul.f32 %v1803, %v1829
    %v1832 = vmul.f32 %v1804, %v1830
    %1834 = vset.pattern.permute.xlu0 0
    %1835 = vperm.xlu0 %1834, %v1831
    %v1836 = vpop.permute.xlu0 %1835
    %1839 = vset.pattern.permute.xlu0 0
    %1840 = vperm.xlu0 %1839, %v1832
    %v1841 = vpop.permute.xlu0 %1840
    %v1843 = vmul.f32 %v1815, %v1836
    %v1844 = vmul.f32 %v1816, %v1841
    %1846 = vset.pattern.permute.xlu0 0
    %1847 = vperm.xlu0 %1846, %v1805
    %v1848 = vpop.permute.xlu0 %1847
    %1851 = vset.pattern.permute.xlu0 0
    %1852 = vperm.xlu0 %1851, %v1806
    %v1853 = vpop.permute.xlu0 %1852
    %v1855 = vadd.f32 %v1843, %v1848
    %v1856 = vadd.f32 %v1844, %v1853
    %v1857 = vadd.f32 %v1703, %v1855
    %v1858 = vadd.f32 %v1704, %v1856
    %v1859 = vmax.f32 %v1857, 0.0
    %v1860 = vmax.f32 %v1858, 0.0
    %v1861 = vld [vmem:[#allocation2 + $0x2a8] sm:$0xff]
    %v1862 = vld [vmem:[#allocation2 + $0x2b0] sm:$0xff]
    %v1863 = vld [vmem:[#allocation2 + $0x2b8] sm:$0xff]
    %v1864 = vld [vmem:[#allocation2 + $0x2c0] sm:$0xff]
    %v1865 = vld [vmem:[#allocation2 + $0x2c8] sm:$0xff]
    %v1866 = vld [vmem:[#allocation2 + $0x2d0] sm:$0xff]
    %v1867 = vpack.c.bf16 %v1862, %v1861
    %v1868 = vpack.c.bf16 %v1864, %v1863
    %v1869 = vpack.c.bf16 %v1866, %v1865
    %v1870 = vpack.c.bf16 %v1860, %v1859
    %v1872 = vsel %vm1375, %v1867, 0
    %v1875 = vsel %vm1375, %v1868, 0
    %v1878 = vsel %vm1375, %v1869, 0
    %1880 = vmatprep.subr.bf16.mxu0 0
    %1881 = vmatpush1.bf16.msra.mxu0 %v1870
    %1882 = vmatprep.subr.bf16.mxu0 0
    %1883 = vmatpush1.bf16.msra.mxu0 0
    %1884 = vmatprep.subr.bf16.mxu0 0
    %1885 = vmatpush1.bf16.msra.mxu0 0
    %1886 = vmatprep.subr.bf16.mxu0 0
    %1887 = vmatpush1.bf16.msra.mxu0 0
    %1888 = vmatprep.subr.bf16.mxu0 0
    %1889 = vmatpush1.bf16.msra.mxu0 0
    %1890 = vmatprep.subr.bf16.mxu0 0
    %1891 = vmatpush1.bf16.msra.mxu0 0
    %1892 = vmatprep.subr.bf16.mxu0 0
    %1893 = vmatpush1.bf16.msra.mxu0 0
    %1894 = vmatprep.subr.bf16.mxu0 0
    %1895 = vmatpush1.bf16.msra.mxu0 0
    %1896 = vmatprep.subr.bf16.mxu0 0
    %1897 = vmatpush1.bf16.msra.mxu0 0
    %1898 = vmatprep.subr.bf16.mxu0 0
    %1899 = vmatpush1.bf16.msra.mxu0 0
    %1900 = vmatprep.subr.bf16.mxu0 0
    %1901 = vmatpush1.bf16.msra.mxu0 0
    %1902 = vmatprep.subr.bf16.mxu0 0
    %1903 = vmatpush1.bf16.msra.mxu0 0
    %1904 = vmatprep.subr.bf16.mxu0 0
    %1905 = vmatpush1.bf16.msra.mxu0 0
    %1906 = vmatprep.subr.bf16.mxu0 0
    %1907 = vmatpush1.bf16.msra.mxu0 0
    %1908 = vmatprep.subr.bf16.mxu0 0
    %1909 = vmatpush1.bf16.msra.mxu0 0
    %1910 = vmatprep.subr.bf16.mxu0 0
    %1911 = vmatpush1.bf16.msra.mxu0 0
    %1912 = vmatprep.mubr.bf16.mxu0 0
    %1913 = vmatmul.mubr.bf16.gmra.mrb[0].mxu0 %v1872
    %v1914 = vpop.f32.mrb[0].mxu0
    %v1915 = vadd.f32 0.0, %v1914
    %v1916 = vpop.f32.mrb[0].mxu0
    %v1917 = vpop.f32.mrb[0].mxu0
    %v1918 = vadd.f32 0.0, %v1917
    %v1919 = vpop.f32.mrb[0].mxu0
    %1920 = vmatprep.mubr.bf16.mxu0 0
    %1921 = vmatmul.mubr.bf16.gmra.mrb[0].mxu0 %v1875
    %v1922 = vpop.f32.mrb[0].mxu0
    %v1923 = vadd.f32 0.0, %v1922
    %v1924 = vpop.f32.mrb[0].mxu0
    %v1925 = vpop.f32.mrb[0].mxu0
    %v1926 = vadd.f32 0.0, %v1925
    %v1927 = vpop.f32.mrb[0].mxu0
    %1928 = vmatprep.mubr.bf16.mxu0 0
    %1929 = vmatmul.mubr.bf16.gmra.mrb[0].mxu0 %v1878
    %v1930 = vpop.f32.mrb[0].mxu0
    %v1931 = vadd.f32 0.0, %v1930
    %v1932 = vpop.f32.mrb[0].mxu0
    %v1933 = vpop.f32.mrb[0].mxu0
    %v1934 = vadd.f32 0.0, %v1933
    %v1935 = vpop.f32.mrb[0].mxu0
    %1936 = vdwg.mxu0
    %v1937 = vpack.c.bf16 %v1918, %v1915
    %v1938 = vpack.c.bf16 %v1926, %v1923
    %v1940 = vsel %vm1375, %v1938, 0
    %1942 = vmatprep.subr.bf16.mxu0 0
    %1943 = vmatpush1.bf16.msra.mxu0 %v1512
    %1944 = vmatprep.subr.bf16.mxu0 0
    %1945 = vmatpush1.bf16.msra.mxu0 0
    %1946 = vmatprep.subr.bf16.mxu0 0
    %1947 = vmatpush1.bf16.msra.mxu0 0
    %1948 = vmatprep.subr.bf16.mxu0 0
    %1949 = vmatpush1.bf16.msra.mxu0 0
    %1950 = vmatprep.subr.bf16.mxu0 0
    %1951 = vmatpush1.bf16.msra.mxu0 0
    %1952 = vmatprep.subr.bf16.mxu0 0
    %1953 = vmatpush1.bf16.msra.mxu0 0
    %1954 = vmatprep.subr.bf16.mxu0 0
    %1955 = vmatpush1.bf16.msra.mxu0 0
    %1956 = vmatprep.subr.bf16.mxu0 0
    %1957 = vmatpush1.bf16.msra.mxu0 0
    %1958 = vmatprep.subr.bf16.mxu0 0
    %1959 = vmatpush1.bf16.msra.mxu0 0
    %1960 = vmatprep.subr.bf16.mxu0 0
    %1961 = vmatpush1.bf16.msra.mxu0 0
    %1962 = vmatprep.subr.bf16.mxu0 0
    %1963 = vmatpush1.bf16.msra.mxu0 0
    %1964 = vmatprep.subr.bf16.mxu0 0
    %1965 = vmatpush1.bf16.msra.mxu0 0
    %1966 = vmatprep.subr.bf16.mxu0 0
    %1967 = vmatpush1.bf16.msra.mxu0 0
    %1968 = vmatprep.subr.bf16.mxu0 0
    %1969 = vmatpush1.bf16.msra.mxu0 0
    %1970 = vmatprep.subr.bf16.mxu0 0
    %1971 = vmatpush1.bf16.msra.mxu0 0
    %1972 = vmatprep.subr.bf16.mxu0 0
    %1973 = vmatpush1.bf16.msra.mxu0 0
    %1974 = vmatprep.mubr.bf16.mxu0 0
    %1975 = vmatmul.mubr.bf16.gmra.mrb[0].mxu0 %v1940
    %v1976 = vpop.f32.mrb[0].mxu0
    %v1977 = vadd.f32 0.0, %v1976
    %v1978 = vpop.f32.mrb[0].mxu0
    %v1979 = vpop.f32.mrb[0].mxu0
    %v1980 = vadd.f32 0.0, %v1979
    %v1981 = vpop.f32.mrb[0].mxu0
    %1982 = vdwg.mxu0
    %v1984 = vsel %vm1375, %v1937, 0
    %1986 = vmatprep.subr.bf16.mxu0 0
    %1987 = vmatpush1.bf16.msra.mxu0 %v1508
    %1988 = vmatprep.subr.bf16.mxu0 0
    %1989 = vmatpush1.bf16.msra.mxu0 0
    %1990 = vmatprep.subr.bf16.mxu0 0
    %1991 = vmatpush1.bf16.msra.mxu0 0
    %1992 = vmatprep.subr.bf16.mxu0 0
    %1993 = vmatpush1.bf16.msra.mxu0 0
    %1994 = vmatprep.subr.bf16.mxu0 0
    %1995 = vmatpush1.bf16.msra.mxu0 0
    %1996 = vmatprep.subr.bf16.mxu0 0
    %1997 = vmatpush1.bf16.msra.mxu0 0
    %1998 = vmatprep.subr.bf16.mxu0 0
    %1999 = vmatpush1.bf16.msra.mxu0 0
    %2000 = vmatprep.subr.bf16.mxu0 0
    %2001 = vmatpush1.bf16.msra.mxu0 0
    %2002 = vmatprep.subr.bf16.mxu0 0
    %2003 = vmatpush1.bf16.msra.mxu0 0
    %2004 = vmatprep.subr.bf16.mxu0 0
    %2005 = vmatpush1.bf16.msra.mxu0 0
    %2006 = vmatprep.subr.bf16.mxu0 0
    %2007 = vmatpush1.bf16.msra.mxu0 0
    %2008 = vmatprep.subr.bf16.mxu0 0
    %2009 = vmatpush1.bf16.msra.mxu0 0
    %2010 = vmatprep.subr.bf16.mxu0 0
    %2011 = vmatpush1.bf16.msra.mxu0 0
    %2012 = vmatprep.subr.bf16.mxu0 0
    %2013 = vmatpush1.bf16.msra.mxu0 0
    %2014 = vmatprep.subr.bf16.mxu0 0
    %2015 = vmatpush1.bf16.msra.mxu0 0
    %2016 = vmatprep.subr.bf16.mxu0 0
    %2017 = vmatpush1.bf16.msra.mxu0 0
    %2018 = vmatprep.mubr.bf16.mxu0 0
    %2019 = vmatmul.mubr.bf16.gmra.mrb[0].mxu0 %v1984
    %v2020 = vpop.f32.mrb[0].mxu0
    %v2021 = vadd.f32 %v1977, %v2020
    %v2022 = vpop.f32.mrb[0].mxu0
    %v2023 = vpop.f32.mrb[0].mxu0
    %v2024 = vadd.f32 %v1980, %v2023
    %v2025 = vpop.f32.mrb[0].mxu0
    %2026 = vdwg.mxu0
    %v2027 = vpack.c.bf16 %v1934, %v1931
    %v2029 = vsel %vm1375, %v2027, 0
    %2031 = vmatprep.subr.bf16.mxu0 0
    %2032 = vmatpush1.bf16.msra.mxu0 %v1604
    %2033 = vmatprep.subr.bf16.mxu0 0
    %2034 = vmatpush1.bf16.msra.mxu0 0
    %2035 = vmatprep.subr.bf16.mxu0 0
    %2036 = vmatpush1.bf16.msra.mxu0 0
    %2037 = vmatprep.subr.bf16.mxu0 0
    %2038 = vmatpush1.bf16.msra.mxu0 0
    %2039 = vmatprep.subr.bf16.mxu0 0
    %2040 = vmatpush1.bf16.msra.mxu0 0
    %2041 = vmatprep.subr.bf16.mxu0 0
    %2042 = vmatpush1.bf16.msra.mxu0 0
    %2043 = vmatprep.subr.bf16.mxu0 0
    %2044 = vmatpush1.bf16.msra.mxu0 0
    %2045 = vmatprep.subr.bf16.mxu0 0
    %2046 = vmatpush1.bf16.msra.mxu0 0
    %2047 = vmatprep.subr.bf16.mxu0 0
    %2048 = vmatpush1.bf16.msra.mxu0 0
    %2049 = vmatprep.subr.bf16.mxu0 0
    %2050 = vmatpush1.bf16.msra.mxu0 0
    %2051 = vmatprep.subr.bf16.mxu0 0
    %2052 = vmatpush1.bf16.msra.mxu0 0
    %2053 = vmatprep.subr.bf16.mxu0 0
    %2054 = vmatpush1.bf16.msra.mxu0 0
    %2055 = vmatprep.subr.bf16.mxu0 0
    %2056 = vmatpush1.bf16.msra.mxu0 0
    %2057 = vmatprep.subr.bf16.mxu0 0
    %2058 = vmatpush1.bf16.msra.mxu0 0
    %2059 = vmatprep.subr.bf16.mxu0 0
    %2060 = vmatpush1.bf16.msra.mxu0 0
    %2061 = vmatprep.subr.bf16.mxu0 0
    %2062 = vmatpush1.bf16.msra.mxu0 0
    %2063 = vmatprep.mubr.bf16.mxu0 0
    %2064 = vmatmul.mubr.bf16.gmra.mrb[0].mxu0 %v2029
    %v2065 = vpop.f32.mrb[0].mxu0
    %v2066 = vadd.f32 0.0, %v2065
    %v2067 = vpop.f32.mrb[0].mxu0
    %v2068 = vpop.f32.mrb[0].mxu0
    %v2069 = vadd.f32 0.0, %v2068
    %v2070 = vpop.f32.mrb[0].mxu0
    %2071 = vdwg.mxu0
    %v2072 = vadd.f32 %v2021, %v2066
    %v2073 = vadd.f32 %v2024, %v2069
    %v2074 = vld [vmem:[#allocation2 + $0x2d8] sm:$0xff]
    %v2075 = vld [vmem:[#allocation2 + $0x2e0] sm:$0xff]
    %v2076 = vld [vmem:[#allocation2 + $0x2e8] sm:$0xff]
    %v2077 = vld [vmem:[#allocation2 + $0x2f0] sm:$0xff]
    %v2078 = vsel %vm1375, %v2072, 0.0
    %2079 = vadd.xlane.f32.xlu0 %v2078
    %v2080 = vpop.xlane.xlu0 %2079
    %v2081 = vsel %vm1375, %v2073, 0.0
    %2082 = vadd.xlane.f32.xlu0 %v2081
    %v2083 = vpop.xlane.xlu0 %2082
    %v2084 = vmul.f32 %v2080, %v1382
    %v2085 = vmul.f32 %v2083, %v1382
    %v2086 = vsub.f32 %v2072, %v2084
    %v2087 = vsub.f32 %v2073, %v2085
    %v2088 = vmul.f32 %v2086, %v2086
    %v2089 = vmul.f32 %v2087, %v2087
    %v2090 = vsel %vm1375, %v2088, 0.0
    %2091 = vadd.xlane.f32.xlu0 %v2090
    %v2092 = vpop.xlane.xlu0 %2091
    %v2093 = vsel %vm1375, %v2089, 0.0
    %2094 = vadd.xlane.f32.xlu0 %v2093
    %v2095 = vpop.xlane.xlu0 %2094
    %v2096 = vmul.f32 %v2092, %v1382
    %v2097 = vmul.f32 %v2095, %v1382
    %v2098 = vadd.f32 %v2096, 1e-05
    %v2099 = vadd.f32 %v2097, 1e-05
    %v2100 = vrsqrt.pop %v2098
    %v2101 = vrsqrt.pop %v2099
    %v2102 = vmul.f32 %v2074, %v2100
    %v2103 = vmul.f32 %v2075, %v2101
    %2105 = vset.pattern.permute.xlu0 0
    %2106 = vperm.xlu0 %2105, %v2102
    %v2107 = vpop.permute.xlu0 %2106
    %2110 = vset.pattern.permute.xlu0 0
    %2111 = vperm.xlu0 %2110, %v2103
    %v2112 = vpop.permute.xlu0 %2111
    %v2114 = vmul.f32 %v2086, %v2107
    %v2115 = vmul.f32 %v2087, %v2112
    %2117 = vset.pattern.permute.xlu0 0
    %2118 = vperm.xlu0 %2117, %v2076
    %v2119 = vpop.permute.xlu0 %2118
    %2122 = vset.pattern.permute.xlu0 0
    %2123 = vperm.xlu0 %2122, %v2077
    %v2124 = vpop.permute.xlu0 %2123
    %v2126 = vadd.f32 %v2114, %v2119
    %v2127 = vadd.f32 %v2115, %v2124
    %v2128 = vmax.f32 %v2126, 0.0
    %v2129 = vmax.f32 %v2127, 0.0
    %v2130 = vld [vmem:[#allocation2 + $0x2f8] sm:$0xff]
    %v2131 = vld [vmem:[#allocation2 + $0x300] sm:$0xff]
    %v2132 = vld [vmem:[#allocation2 + $0x308] sm:$0xff]
    %v2133 = vld [vmem:[#allocation2 + $0x310] sm:$0xff]
    %v2134 = vld [vmem:[#allocation2 + $0x318] sm:$0xff]
    %v2135 = vld [vmem:[#allocation2 + $0x320] sm:$0xff]
    %v2136 = vpack.c.bf16 %v2131, %v2130
    %v2137 = vpack.c.bf16 %v2133, %v2132
    %v2138 = vpack.c.bf16 %v2135, %v2134
    %v2139 = vpack.c.bf16 %v2129, %v2128
    %v2141 = vsel %vm1375, %v2136, 0
    %v2144 = vsel %vm1375, %v2137, 0
    %v2147 = vsel %vm1375, %v2138, 0
    %2149 = vmatprep.subr.bf16.mxu0 0
    %2150 = vmatpush1.bf16.msra.mxu0 %v2139
    %2151 = vmatprep.subr.bf16.mxu0 0
    %2152 = vmatpush1.bf16.msra.mxu0 0
    %2153 = vmatprep.subr.bf16.mxu0 0
    %2154 = vmatpush1.bf16.msra.mxu0 0
    %2155 = vmatprep.subr.bf16.mxu0 0
    %2156 = vmatpush1.bf16.msra.mxu0 0
    %2157 = vmatprep.subr.bf16.mxu0 0
    %2158 = vmatpush1.bf16.msra.mxu0 0
    %2159 = vmatprep.subr.bf16.mxu0 0
    %2160 = vmatpush1.bf16.msra.mxu0 0
    %2161 = vmatprep.subr.bf16.mxu0 0
    %2162 = vmatpush1.bf16.msra.mxu0 0
    %2163 = vmatprep.subr.bf16.mxu0 0
    %2164 = vmatpush1.bf16.msra.mxu0 0
    %2165 = vmatprep.subr.bf16.mxu0 0
    %2166 = vmatpush1.bf16.msra.mxu0 0
    %2167 = vmatprep.subr.bf16.mxu0 0
    %2168 = vmatpush1.bf16.msra.mxu0 0
    %2169 = vmatprep.subr.bf16.mxu0 0
    %2170 = vmatpush1.bf16.msra.mxu0 0
    %2171 = vmatprep.subr.bf16.mxu0 0
    %2172 = vmatpush1.bf16.msra.mxu0 0
    %2173 = vmatprep.subr.bf16.mxu0 0
    %2174 = vmatpush1.bf16.msra.mxu0 0
    %2175 = vmatprep.subr.bf16.mxu0 0
    %2176 = vmatpush1.bf16.msra.mxu0 0
    %2177 = vmatprep.subr.bf16.mxu0 0
    %2178 = vmatpush1.bf16.msra.mxu0 0
    %2179 = vmatprep.subr.bf16.mxu0 0
    %2180 = vmatpush1.bf16.msra.mxu0 0
    %2181 = vmatprep.mubr.bf16.mxu0 0
    %2182 = vmatmul.mubr.bf16.gmra.mrb[0].mxu0 %v2141
    %v2183 = vpop.f32.mrb[0].mxu0
    %v2184 = vadd.f32 0.0, %v2183
    %v2185 = vpop.f32.mrb[0].mxu0
    %v2186 = vpop.f32.mrb[0].mxu0
    %v2187 = vadd.f32 0.0, %v2186
    %v2188 = vpop.f32.mrb[0].mxu0
    %2189 = vmatprep.mubr.bf16.mxu0 0
    %2190 = vmatmul.mubr.bf16.gmra.mrb[0].mxu0 %v2144
    %v2191 = vpop.f32.mrb[0].mxu0
    %v2192 = vadd.f32 0.0, %v2191
    %v2193 = vpop.f32.mrb[0].mxu0
    %v2194 = vpop.f32.mrb[0].mxu0
    %v2195 = vadd.f32 0.0, %v2194
    %v2196 = vpop.f32.mrb[0].mxu0
    %2197 = vmatprep.mubr.bf16.mxu0 0
    %2198 = vmatmul.mubr.bf16.gmra.mrb[0].mxu0 %v2147
    %v2199 = vpop.f32.mrb[0].mxu0
    %v2200 = vadd.f32 0.0, %v2199
    %v2201 = vpop.f32.mrb[0].mxu0
    %v2202 = vpop.f32.mrb[0].mxu0
    %v2203 = vadd.f32 0.0, %v2202
    %v2204 = vpop.f32.mrb[0].mxu0
    %2205 = vdwg.mxu0
    %v2206 = vpack.c.bf16 %v2187, %v2184
    %v2207 = vpack.c.bf16 %v2195, %v2192
    %v2209 = vsel %vm1375, %v2207, 0
    %2211 = vmatprep.subr.bf16.mxu0 0
    %2212 = vmatpush1.bf16.msra.mxu0 %v1512
    %2213 = vmatprep.subr.bf16.mxu0 0
    %2214 = vmatpush1.bf16.msra.mxu0 0
    %2215 = vmatprep.subr.bf16.mxu0 0
    %2216 = vmatpush1.bf16.msra.mxu0 0
    %2217 = vmatprep.subr.bf16.mxu0 0
    %2218 = vmatpush1.bf16.msra.mxu0 0
    %2219 = vmatprep.subr.bf16.mxu0 0
    %2220 = vmatpush1.bf16.msra.mxu0 0
    %2221 = vmatprep.subr.bf16.mxu0 0
    %2222 = vmatpush1.bf16.msra.mxu0 0
    %2223 = vmatprep.subr.bf16.mxu0 0
    %2224 = vmatpush1.bf16.msra.mxu0 0
    %2225 = vmatprep.subr.bf16.mxu0 0
    %2226 = vmatpush1.bf16.msra.mxu0 0
    %2227 = vmatprep.subr.bf16.mxu0 0
    %2228 = vmatpush1.bf16.msra.mxu0 0
    %2229 = vmatprep.subr.bf16.mxu0 0
    %2230 = vmatpush1.bf16.msra.mxu0 0
    %2231 = vmatprep.subr.bf16.mxu0 0
    %2232 = vmatpush1.bf16.msra.mxu0 0
    %2233 = vmatprep.subr.bf16.mxu0 0
    %2234 = vmatpush1.bf16.msra.mxu0 0
    %2235 = vmatprep.subr.bf16.mxu0 0
    %2236 = vmatpush1.bf16.msra.mxu0 0
    %2237 = vmatprep.subr.bf16.mxu0 0
    %2238 = vmatpush1.bf16.msra.mxu0 0
    %2239 = vmatprep.subr.bf16.mxu0 0
    %2240 = vmatpush1.bf16.msra.mxu0 0
    %2241 = vmatprep.subr.bf16.mxu0 0
    %2242 = vmatpush1.bf16.msra.mxu0 0
    %2243 = vmatprep.mubr.bf16.mxu0 0
    %2244 = vmatmul.mubr.bf16.gmra.mrb[0].mxu0 %v2209
    %v2245 = vpop.f32.mrb[0].mxu0
    %v2246 = vadd.f32 0.0, %v2245
    %v2247 = vpop.f32.mrb[0].mxu0
    %v2248 = vpop.f32.mrb[0].mxu0
    %v2249 = vadd.f32 0.0, %v2248
    %v2250 = vpop.f32.mrb[0].mxu0
    %2251 = vdwg.mxu0
    %v2253 = vsel %vm1375, %v2206, 0
    %2255 = vmatprep.subr.bf16.mxu0 0
    %2256 = vmatpush1.bf16.msra.mxu0 %v1508
    %2257 = vmatprep.subr.bf16.mxu0 0
    %2258 = vmatpush1.bf16.msra.mxu0 0
    %2259 = vmatprep.subr.bf16.mxu0 0
    %2260 = vmatpush1.bf16.msra.mxu0 0
    %2261 = vmatprep.subr.bf16.mxu0 0
    %2262 = vmatpush1.bf16.msra.mxu0 0
    %2263 = vmatprep.subr.bf16.mxu0 0
    %2264 = vmatpush1.bf16.msra.mxu0 0
    %2265 = vmatprep.subr.bf16.mxu0 0
    %2266 = vmatpush1.bf16.msra.mxu0 0
    %2267 = vmatprep.subr.bf16.mxu0 0
    %2268 = vmatpush1.bf16.msra.mxu0 0
    %2269 = vmatprep.subr.bf16.mxu0 0
    %2270 = vmatpush1.bf16.msra.mxu0 0
    %2271 = vmatprep.subr.bf16.mxu0 0
    %2272 = vmatpush1.bf16.msra.mxu0 0
    %2273 = vmatprep.subr.bf16.mxu0 0
    %2274 = vmatpush1.bf16.msra.mxu0 0
    %2275 = vmatprep.subr.bf16.mxu0 0
    %2276 = vmatpush1.bf16.msra.mxu0 0
    %2277 = vmatprep.subr.bf16.mxu0 0
    %2278 = vmatpush1.bf16.msra.mxu0 0
    %2279 = vmatprep.subr.bf16.mxu0 0
    %2280 = vmatpush1.bf16.msra.mxu0 0
    %2281 = vmatprep.subr.bf16.mxu0 0
    %2282 = vmatpush1.bf16.msra.mxu0 0
    %2283 = vmatprep.subr.bf16.mxu0 0
    %2284 = vmatpush1.bf16.msra.mxu0 0
    %2285 = vmatprep.subr.bf16.mxu0 0
    %2286 = vmatpush1.bf16.msra.mxu0 0
    %2287 = vmatprep.mubr.bf16.mxu0 0
    %2288 = vmatmul.mubr.bf16.gmra.mrb[0].mxu0 %v2253
    %v2289 = vpop.f32.mrb[0].mxu0
    %v2290 = vadd.f32 %v2246, %v2289
    %v2291 = vpop.f32.mrb[0].mxu0
    %v2292 = vpop.f32.mrb[0].mxu0
    %v2293 = vadd.f32 %v2249, %v2292
    %v2294 = vpop.f32.mrb[0].mxu0
    %2295 = vdwg.mxu0
    %v2296 = vpack.c.bf16 %v2203, %v2200
    %v2298 = vsel %vm1375, %v2296, 0
    %2300 = vmatprep.subr.bf16.mxu0 0
    %2301 = vmatpush1.bf16.msra.mxu0 %v1604
    %2302 = vmatprep.subr.bf16.mxu0 0
    %2303 = vmatpush1.bf16.msra.mxu0 0
    %2304 = vmatprep.subr.bf16.mxu0 0
    %2305 = vmatpush1.bf16.msra.mxu0 0
    %2306 = vmatprep.subr.bf16.mxu0 0
    %2307 = vmatpush1.bf16.msra.mxu0 0
    %2308 = vmatprep.subr.bf16.mxu0 0
    %2309 = vmatpush1.bf16.msra.mxu0 0
    %2310 = vmatprep.subr.bf16.mxu0 0
    %2311 = vmatpush1.bf16.msra.mxu0 0
    %2312 = vmatprep.subr.bf16.mxu0 0
    %2313 = vmatpush1.bf16.msra.mxu0 0
    %2314 = vmatprep.subr.bf16.mxu0 0
    %2315 = vmatpush1.bf16.msra.mxu0 0
    %2316 = vmatprep.subr.bf16.mxu0 0
    %2317 = vmatpush1.bf16.msra.mxu0 0
    %2318 = vmatprep.subr.bf16.mxu0 0
    %2319 = vmatpush1.bf16.msra.mxu0 0
    %2320 = vmatprep.subr.bf16.mxu0 0
    %2321 = vmatpush1.bf16.msra.mxu0 0
    %2322 = vmatprep.subr.bf16.mxu0 0
    %2323 = vmatpush1.bf16.msra.mxu0 0
    %2324 = vmatprep.subr.bf16.mxu0 0
    %2325 = vmatpush1.bf16.msra.mxu0 0
    %2326 = vmatprep.subr.bf16.mxu0 0
    %2327 = vmatpush1.bf16.msra.mxu0 0
    %2328 = vmatprep.subr.bf16.mxu0 0
    %2329 = vmatpush1.bf16.msra.mxu0 0
    %2330 = vmatprep.subr.bf16.mxu0 0
    %2331 = vmatpush1.bf16.msra.mxu0 0
    %2332 = vmatprep.mubr.bf16.mxu0 0
    %2333 = vmatmul.mubr.bf16.gmra.mrb[0].mxu0 %v2298
    %v2334 = vpop.f32.mrb[0].mxu0
    %v2335 = vadd.f32 0.0, %v2334
    %v2336 = vpop.f32.mrb[0].mxu0
    %v2337 = vpop.f32.mrb[0].mxu0
    %v2338 = vadd.f32 0.0, %v2337
    %v2339 = vpop.f32.mrb[0].mxu0
    %2340 = vdwg.mxu0
    %v2341 = vadd.f32 %v2290, %v2335
    %v2342 = vadd.f32 %v2293, %v2338
    %v2343 = vld [vmem:[#allocation2 + $0x328] sm:$0xff]
    %v2344 = vld [vmem:[#allocation2 + $0x330] sm:$0xff]
    %v2345 = vld [vmem:[#allocation2 + $0x338] sm:$0xff]
    %v2346 = vld [vmem:[#allocation2 + $0x340] sm:$0xff]
    %v2347 = vsel %vm1375, %v2341, 0.0
    %2348 = vadd.xlane.f32.xlu0 %v2347
    %v2349 = vpop.xlane.xlu0 %2348
    %v2350 = vsel %vm1375, %v2342, 0.0
    %2351 = vadd.xlane.f32.xlu0 %v2350
    %v2352 = vpop.xlane.xlu0 %2351
    %v2353 = vmul.f32 %v2349, %v1382
    %v2354 = vmul.f32 %v2352, %v1382
    %v2355 = vsub.f32 %v2341, %v2353
    %v2356 = vsub.f32 %v2342, %v2354
    %v2357 = vmul.f32 %v2355, %v2355
    %v2358 = vmul.f32 %v2356, %v2356
    %v2359 = vsel %vm1375, %v2357, 0.0
    %2360 = vadd.xlane.f32.xlu0 %v2359
    %v2361 = vpop.xlane.xlu0 %2360
    %v2362 = vsel %vm1375, %v2358, 0.0
    %2363 = vadd.xlane.f32.xlu0 %v2362
    %v2364 = vpop.xlane.xlu0 %2363
    %v2365 = vmul.f32 %v2361, %v1382
    %v2366 = vmul.f32 %v2364, %v1382
    %v2367 = vadd.f32 %v2365, 1e-05
    %v2368 = vadd.f32 %v2366, 1e-05
    %v2369 = vrsqrt.pop %v2367
    %v2370 = vrsqrt.pop %v2368
    %v2371 = vmul.f32 %v2343, %v2369
    %v2372 = vmul.f32 %v2344, %v2370
    %2374 = vset.pattern.permute.xlu0 0
    %2375 = vperm.xlu0 %2374, %v2371
    %v2376 = vpop.permute.xlu0 %2375
    %2379 = vset.pattern.permute.xlu0 0
    %2380 = vperm.xlu0 %2379, %v2372
    %v2381 = vpop.permute.xlu0 %2380
    %v2383 = vmul.f32 %v2355, %v2376
    %v2384 = vmul.f32 %v2356, %v2381
    %2386 = vset.pattern.permute.xlu0 0
    %2387 = vperm.xlu0 %2386, %v2345
    %v2388 = vpop.permute.xlu0 %2387
    %2391 = vset.pattern.permute.xlu0 0
    %2392 = vperm.xlu0 %2391, %v2346
    %v2393 = vpop.permute.xlu0 %2392
    %v2395 = vadd.f32 %v2383, %v2388
    %v2396 = vadd.f32 %v2384, %v2393
    %v2397 = vadd.f32 %v2395, %v1859
    %v2398 = vadd.f32 %v2396, %v1860
    %v2399 = vmax.f32 %v2397, 0.0
    %v2400 = vmax.f32 %v2398, 0.0
    %v2401 = vld [vmem:[#allocation2 + $0x378] sm:$0xff]
    %v2402 = vld [vmem:[#allocation2 + $0x380] sm:$0xff]
    %v2403 = vld [vmem:[#allocation2 + $0x388] sm:$0xff]
    %v2404 = vld [vmem:[#allocation2 + $0x390] sm:$0xff]
    %v2405 = vld [vmem:[#allocation2 + $0x398] sm:$0xff]
    %v2406 = vld [vmem:[#allocation2 + $0x3a0] sm:$0xff]
    %v2407 = vpack.c.bf16 %v2402, %v2401
    %v2408 = vpack.c.bf16 %v2404, %v2403
    %v2409 = vpack.c.bf16 %v2406, %v2405
    %v2410 = vpack.c.bf16 %v2400, %v2399
    %v2412 = vsel %vm1375, %v2407, 0
    %v2415 = vsel %vm1375, %v2408, 0
    %v2418 = vsel %vm1375, %v2409, 0
    %2420 = vmatprep.subr.bf16.mxu0 0
    %2421 = vmatpush1.bf16.msra.mxu0 %v2410
    %2422 = vmatprep.subr.bf16.mxu0 0
    %2423 = vmatpush1.bf16.msra.mxu0 0
    %2424 = vmatprep.subr.bf16.mxu0 0
    %2425 = vmatpush1.bf16.msra.mxu0 0
    %2426 = vmatprep.subr.bf16.mxu0 0
    %2427 = vmatpush1.bf16.msra.mxu0 0
    %2428 = vmatprep.subr.bf16.mxu0 0
    %2429 = vmatpush1.bf16.msra.mxu0 0
    %2430 = vmatprep.subr.bf16.mxu0 0
    %2431 = vmatpush1.bf16.msra.mxu0 0
    %2432 = vmatprep.subr.bf16.mxu0 0
    %2433 = vmatpush1.bf16.msra.mxu0 0
    %2434 = vmatprep.subr.bf16.mxu0 0
    %2435 = vmatpush1.bf16.msra.mxu0 0
    %2436 = vmatprep.subr.bf16.mxu0 0
    %2437 = vmatpush1.bf16.msra.mxu0 0
    %2438 = vmatprep.subr.bf16.mxu0 0
    %2439 = vmatpush1.bf16.msra.mxu0 0
    %2440 = vmatprep.subr.bf16.mxu0 0
    %2441 = vmatpush1.bf16.msra.mxu0 0
    %2442 = vmatprep.subr.bf16.mxu0 0
    %2443 = vmatpush1.bf16.msra.mxu0 0
    %2444 = vmatprep.subr.bf16.mxu0 0
    %2445 = vmatpush1.bf16.msra.mxu0 0
    %2446 = vmatprep.subr.bf16.mxu0 0
    %2447 = vmatpush1.bf16.msra.mxu0 0
    %2448 = vmatprep.subr.bf16.mxu0 0
    %2449 = vmatpush1.bf16.msra.mxu0 0
    %2450 = vmatprep.subr.bf16.mxu0 0
    %2451 = vmatpush1.bf16.msra.mxu0 0
    %2452 = vmatprep.mubr.bf16.mxu0 0
    %2453 = vmatmul.mubr.bf16.gmra.mrb[0].mxu0 %v2412
    %v2454 = vpop.f32.mrb[0].mxu0
    %v2455 = vadd.f32 0.0, %v2454
    %v2456 = vpop.f32.mrb[0].mxu0
    %v2457 = vpop.f32.mrb[0].mxu0
    %v2458 = vadd.f32 0.0, %v2457
    %v2459 = vpop.f32.mrb[0].mxu0
    %2460 = vmatprep.mubr.bf16.mxu0 0
    %2461 = vmatmul.mubr.bf16.gmra.mrb[0].mxu0 %v2415
    %v2462 = vpop.f32.mrb[0].mxu0
    %v2463 = vadd.f32 0.0, %v2462
    %v2464 = vpop.f32.mrb[0].mxu0
    %v2465 = vpop.f32.mrb[0].mxu0
    %v2466 = vadd.f32 0.0, %v2465
    %v2467 = vpop.f32.mrb[0].mxu0
    %2468 = vmatprep.mubr.bf16.mxu0 0
    %2469 = vmatmul.mubr.bf16.gmra.mrb[0].mxu0 %v2418
    %v2470 = vpop.f32.mrb[0].mxu0
    %v2471 = vadd.f32 0.0, %v2470
    %v2472 = vpop.f32.mrb[0].mxu0
    %v2473 = vpop.f32.mrb[0].mxu0
    %v2474 = vadd.f32 0.0, %v2473
    %v2475 = vpop.f32.mrb[0].mxu0
    %2476 = vdwg.mxu0
    %v2477 = vpack.c.bf16 %v2458, %v2455
    %v2478 = vld [vmem:[#allocation2 + $0x348] sm:$0xff]
    %v2479 = vld [vmem:[#allocation2 + $0x350] sm:$0xff]
    %v2480 = vpack.c.bf16 %v2479, %v2478
    %v2481 = vpack.c.bf16 %v2466, %v2463
    %v2482 = vld [vmem:[#allocation2 + $0x358] sm:$0xff]
    %v2483 = vld [vmem:[#allocation2 + $0x360] sm:$0xff]
    %v2484 = vpack.c.bf16 %v2483, %v2482
    %v2486 = vsel %vm1375, %v2481, 0
    %2488 = vmatprep.subr.bf16.mxu0 0
    %2489 = vmatpush1.bf16.msra.mxu0 %v2484
    %2490 = vmatprep.subr.bf16.mxu0 0
    %2491 = vmatpush1.bf16.msra.mxu0 0
    %2492 = vmatprep.subr.bf16.mxu0 0
    %2493 = vmatpush1.bf16.msra.mxu0 0
    %2494 = vmatprep.subr.bf16.mxu0 0
    %2495 = vmatpush1.bf16.msra.mxu0 0
    %2496 = vmatprep.subr.bf16.mxu0 0
    %2497 = vmatpush1.bf16.msra.mxu0 0
    %2498 = vmatprep.subr.bf16.mxu0 0
    %2499 = vmatpush1.bf16.msra.mxu0 0
    %2500 = vmatprep.subr.bf16.mxu0 0
    %2501 = vmatpush1.bf16.msra.mxu0 0
    %2502 = vmatprep.subr.bf16.mxu0 0
    %2503 = vmatpush1.bf16.msra.mxu0 0
    %2504 = vmatprep.subr.bf16.mxu0 0
    %2505 = vmatpush1.bf16.msra.mxu0 0
    %2506 = vmatprep.subr.bf16.mxu0 0
    %2507 = vmatpush1.bf16.msra.mxu0 0
    %2508 = vmatprep.subr.bf16.mxu0 0
    %2509 = vmatpush1.bf16.msra.mxu0 0
    %2510 = vmatprep.subr.bf16.mxu0 0
    %2511 = vmatpush1.bf16.msra.mxu0 0
    %2512 = vmatprep.subr.bf16.mxu0 0
    %2513 = vmatpush1.bf16.msra.mxu0 0
    %2514 = vmatprep.subr.bf16.mxu0 0
    %2515 = vmatpush1.bf16.msra.mxu0 0
    %2516 = vmatprep.subr.bf16.mxu0 0
    %2517 = vmatpush1.bf16.msra.mxu0 0
    %2518 = vmatprep.subr.bf16.mxu0 0
    %2519 = vmatpush1.bf16.msra.mxu0 0
    %2520 = vmatprep.mubr.bf16.mxu0 0
    %2521 = vmatmul.mubr.bf16.gmra.mrb[0].mxu0 %v2486
    %v2522 = vpop.f32.mrb[0].mxu0
    %v2523 = vadd.f32 0.0, %v2522
    %v2524 = vpop.f32.mrb[0].mxu0
    %v2525 = vpop.f32.mrb[0].mxu0
    %v2526 = vadd.f32 0.0, %v2525
    %v2527 = vpop.f32.mrb[0].mxu0
    %2528 = vdwg.mxu0
    %v2530 = vsel %vm1375, %v2477, 0
    %2532 = vmatprep.subr.bf16.mxu0 0
    %2533 = vmatpush1.bf16.msra.mxu0 %v2480
    %2534 = vmatprep.subr.bf16.mxu0 0
    %2535 = vmatpush1.bf16.msra.mxu0 0
    %2536 = vmatprep.subr.bf16.mxu0 0
    %2537 = vmatpush1.bf16.msra.mxu0 0
    %2538 = vmatprep.subr.bf16.mxu0 0
    %2539 = vmatpush1.bf16.msra.mxu0 0
    %2540 = vmatprep.subr.bf16.mxu0 0
    %2541 = vmatpush1.bf16.msra.mxu0 0
    %2542 = vmatprep.subr.bf16.mxu0 0
    %2543 = vmatpush1.bf16.msra.mxu0 0
    %2544 = vmatprep.subr.bf16.mxu0 0
    %2545 = vmatpush1.bf16.msra.mxu0 0
    %2546 = vmatprep.subr.bf16.mxu0 0
    %2547 = vmatpush1.bf16.msra.mxu0 0
    %2548 = vmatprep.subr.bf16.mxu0 0
    %2549 = vmatpush1.bf16.msra.mxu0 0
    %2550 = vmatprep.subr.bf16.mxu0 0
    %2551 = vmatpush1.bf16.msra.mxu0 0
    %2552 = vmatprep.subr.bf16.mxu0 0
    %2553 = vmatpush1.bf16.msra.mxu0 0
    %2554 = vmatprep.subr.bf16.mxu0 0
    %2555 = vmatpush1.bf16.msra.mxu0 0
    %2556 = vmatprep.subr.bf16.mxu0 0
    %2557 = vmatpush1.bf16.msra.mxu0 0
    %2558 = vmatprep.subr.bf16.mxu0 0
    %2559 = vmatpush1.bf16.msra.mxu0 0
    %2560 = vmatprep.subr.bf16.mxu0 0
    %2561 = vmatpush1.bf16.msra.mxu0 0
    %2562 = vmatprep.subr.bf16.mxu0 0
    %2563 = vmatpush1.bf16.msra.mxu0 0
    %2564 = vmatprep.mubr.bf16.mxu0 0
    %2565 = vmatmul.mubr.bf16.gmra.mrb[0].mxu0 %v2530
    %v2566 = vpop.f32.mrb[0].mxu0
    %v2567 = vadd.f32 %v2523, %v2566
    %v2568 = vpop.f32.mrb[0].mxu0
    %v2569 = vpop.f32.mrb[0].mxu0
    %v2570 = vadd.f32 %v2526, %v2569
    %v2571 = vpop.f32.mrb[0].mxu0
    %2572 = vdwg.mxu0
    %v2573 = vpack.c.bf16 %v2474, %v2471
    %v2574 = vld [vmem:[#allocation2 + $0x368] sm:$0xff]
    %v2575 = vld [vmem:[#allocation2 + $0x370] sm:$0xff]
    %v2576 = vpack.c.bf16 %v2575, %v2574
    %v2578 = vsel %vm1375, %v2573, 0
    %2580 = vmatprep.subr.bf16.mxu0 0
    %2581 = vmatpush1.bf16.msra.mxu0 %v2576
    %2582 = vmatprep.subr.bf16.mxu0 0
    %2583 = vmatpush1.bf16.msra.mxu0 0
    %2584 = vmatprep.subr.bf16.mxu0 0
    %2585 = vmatpush1.bf16.msra.mxu0 0
    %2586 = vmatprep.subr.bf16.mxu0 0
    %2587 = vmatpush1.bf16.msra.mxu0 0
    %2588 = vmatprep.subr.bf16.mxu0 0
    %2589 = vmatpush1.bf16.msra.mxu0 0
    %2590 = vmatprep.subr.bf16.mxu0 0
    %2591 = vmatpush1.bf16.msra.mxu0 0
    %2592 = vmatprep.subr.bf16.mxu0 0
    %2593 = vmatpush1.bf16.msra.mxu0 0
    %2594 = vmatprep.subr.bf16.mxu0 0
    %2595 = vmatpush1.bf16.msra.mxu0 0
    %2596 = vmatprep.subr.bf16.mxu0 0
    %2597 = vmatpush1.bf16.msra.mxu0 0
    %2598 = vmatprep.subr.bf16.mxu0 0
    %2599 = vmatpush1.bf16.msra.mxu0 0
    %2600 = vmatprep.subr.bf16.mxu0 0
    %2601 = vmatpush1.bf16.msra.mxu0 0
    %2602 = vmatprep.subr.bf16.mxu0 0
    %2603 = vmatpush1.bf16.msra.mxu0 0
    %2604 = vmatprep.subr.bf16.mxu0 0
    %2605 = vmatpush1.bf16.msra.mxu0 0
    %2606 = vmatprep.subr.bf16.mxu0 0
    %2607 = vmatpush1.bf16.msra.mxu0 0
    %2608 = vmatprep.subr.bf16.mxu0 0
    %2609 = vmatpush1.bf16.msra.mxu0 0
    %2610 = vmatprep.subr.bf16.mxu0 0
    %2611 = vmatpush1.bf16.msra.mxu0 0
    %2612 = vmatprep.mubr.bf16.mxu0 0
    %2613 = vmatmul.mubr.bf16.gmra.mrb[0].mxu0 %v2578
    %v2614 = vpop.f32.mrb[0].mxu0
    %v2615 = vadd.f32 0.0, %v2614
    %v2616 = vpop.f32.mrb[0].mxu0
    %v2617 = vpop.f32.mrb[0].mxu0
    %v2618 = vadd.f32 0.0, %v2617
    %v2619 = vpop.f32.mrb[0].mxu0
    %2620 = vdwg.mxu0
    %v2621 = vadd.f32 %v2567, %v2615
    %v2622 = vadd.f32 %v2570, %v2618
    %v2623 = vld [vmem:[#allocation2 + $0x3a8] sm:$0xff]
    %v2624 = vld [vmem:[#allocation2 + $0x3b0] sm:$0xff]
    %v2625 = vld [vmem:[#allocation2 + $0x3b8] sm:$0xff]
    %v2626 = vld [vmem:[#allocation2 + $0x3c0] sm:$0xff]
    %v2627 = vsel %vm243, %v2621, 0.0
    %2628 = vadd.xlane.f32.xlu0 %v2627
    %v2629 = vpop.xlane.xlu0 %2628
    %v2630 = vsel %vm243, %v2622, 0.0
    %2631 = vadd.xlane.f32.xlu0 %v2630
    %v2632 = vpop.xlane.xlu0 %2631
    %v2633 = vrcp.pop 8.0
    %v2634 = vmul.f32 %v2629, %v2633
    %v2635 = vmul.f32 %v2632, %v2633
    %v2636 = vsub.f32 %v2621, %v2634
    %v2637 = vsub.f32 %v2622, %v2635
    %v2638 = vmul.f32 %v2636, %v2636
    %v2639 = vmul.f32 %v2637, %v2637
    %v2640 = vsel %vm243, %v2638, 0.0
    %2641 = vadd.xlane.f32.xlu0 %v2640
    %v2642 = vpop.xlane.xlu0 %2641
    %v2643 = vsel %vm243, %v2639, 0.0
    %2644 = vadd.xlane.f32.xlu0 %v2643
    %v2645 = vpop.xlane.xlu0 %2644
    %v2646 = vmul.f32 %v2642, %v2633
    %v2647 = vmul.f32 %v2645, %v2633
    %v2648 = vadd.f32 %v2646, 1e-05
    %v2649 = vadd.f32 %v2647, 1e-05
    %v2650 = vrsqrt.pop %v2648
    %v2651 = vrsqrt.pop %v2649
    %v2652 = vmul.f32 %v2623, %v2650
    %v2653 = vmul.f32 %v2624, %v2651
    %2655 = vset.pattern.permute.xlu0 0
    %2656 = vperm.xlu0 %2655, %v2652
    %v2657 = vpop.permute.xlu0 %2656
    %2660 = vset.pattern.permute.xlu0 0
    %2661 = vperm.xlu0 %2660, %v2653
    %v2662 = vpop.permute.xlu0 %2661
    %v2664 = vmul.f32 %v2636, %v2657
    %v2665 = vmul.f32 %v2637, %v2662
    %2667 = vset.pattern.permute.xlu0 0
    %2668 = vperm.xlu0 %2667, %v2625
    %v2669 = vpop.permute.xlu0 %2668
    %2672 = vset.pattern.permute.xlu0 0
    %2673 = vperm.xlu0 %2672, %v2626
    %v2674 = vpop.permute.xlu0 %2673
    %v2676 = vadd.f32 %v2664, %v2669
    %v2677 = vadd.f32 %v2665, %v2674
    %v2678 = vmax.f32 %v2676, 0.0
    %v2679 = vmax.f32 %v2677, 0.0
    %v2680 = vld [vmem:[#allocation2 + $0x3e0] sm:$0xff]
    %v2681 = vld [vmem:[#allocation2 + $0x3e8] sm:$0xff]
    %v2682 = vld [vmem:[#allocation2 + $0x3f0] sm:$0xff]
    %v2683 = vld [vmem:[#allocation2 + $0x3f8] sm:$0xff]
    %v2684 = vld [vmem:[#allocation2 + $0x400] sm:$0xff]
    %v2685 = vld [vmem:[#allocation2 + $0x408] sm:$0xff]
    %v2686 = vpack.c.bf16 %v2681, %v2680
    %v2687 = vpack.c.bf16 %v2683, %v2682
    %v2688 = vpack.c.bf16 %v2685, %v2684
    %v2689 = vpack.c.bf16 %v2679, %v2678
    %v2691 = vsel %vm1375, %v2686, 0
    %v2694 = vsel %vm1375, %v2687, 0
    %v2697 = vsel %vm1375, %v2688, 0
    %2699 = vmatprep.subr.bf16.mxu0 0
    %2700 = vmatpush1.bf16.msra.mxu0 %v2689
    %2701 = vmatprep.subr.bf16.mxu0 0
    %2702 = vmatpush1.bf16.msra.mxu0 0
    %2703 = vmatprep.subr.bf16.mxu0 0
    %2704 = vmatpush1.bf16.msra.mxu0 0
    %2705 = vmatprep.subr.bf16.mxu0 0
    %2706 = vmatpush1.bf16.msra.mxu0 0
    %2707 = vmatprep.subr.bf16.mxu0 0
    %2708 = vmatpush1.bf16.msra.mxu0 0
    %2709 = vmatprep.subr.bf16.mxu0 0
    %2710 = vmatpush1.bf16.msra.mxu0 0
    %2711 = vmatprep.subr.bf16.mxu0 0
    %2712 = vmatpush1.bf16.msra.mxu0 0
    %2713 = vmatprep.subr.bf16.mxu0 0
    %2714 = vmatpush1.bf16.msra.mxu0 0
    %2715 = vmatprep.subr.bf16.mxu0 0
    %2716 = vmatpush1.bf16.msra.mxu0 0
    %2717 = vmatprep.subr.bf16.mxu0 0
    %2718 = vmatpush1.bf16.msra.mxu0 0
    %2719 = vmatprep.subr.bf16.mxu0 0
    %2720 = vmatpush1.bf16.msra.mxu0 0
    %2721 = vmatprep.subr.bf16.mxu0 0
    %2722 = vmatpush1.bf16.msra.mxu0 0
    %2723 = vmatprep.subr.bf16.mxu0 0
    %2724 = vmatpush1.bf16.msra.mxu0 0
    %2725 = vmatprep.subr.bf16.mxu0 0
    %2726 = vmatpush1.bf16.msra.mxu0 0
    %2727 = vmatprep.subr.bf16.mxu0 0
    %2728 = vmatpush1.bf16.msra.mxu0 0
    %2729 = vmatprep.subr.bf16.mxu0 0
    %2730 = vmatpush1.bf16.msra.mxu0 0
    %2731 = vmatprep.mubr.bf16.mxu0 0
    %2732 = vmatmul.mubr.bf16.gmra.mrb[0].mxu0 %v2691
    %v2733 = vpop.f32.mrb[0].mxu0
    %v2734 = vadd.f32 0.0, %v2733
    %v2735 = vpop.f32.mrb[0].mxu0
    %v2736 = vpop.f32.mrb[0].mxu0
    %v2737 = vadd.f32 0.0, %v2736
    %v2738 = vpop.f32.mrb[0].mxu0
    %2739 = vmatprep.mubr.bf16.mxu0 0
    %2740 = vmatmul.mubr.bf16.gmra.mrb[0].mxu0 %v2694
    %v2741 = vpop.f32.mrb[0].mxu0
    %v2742 = vadd.f32 0.0, %v2741
    %v2743 = vpop.f32.mrb[0].mxu0
    %v2744 = vpop.f32.mrb[0].mxu0
    %v2745 = vadd.f32 0.0, %v2744
    %v2746 = vpop.f32.mrb[0].mxu0
    %2747 = vmatprep.mubr.bf16.mxu0 0
    %2748 = vmatmul.mubr.bf16.gmra.mrb[0].mxu0 %v2697
    %v2749 = vpop.f32.mrb[0].mxu0
    %v2750 = vadd.f32 0.0, %v2749
    %v2751 = vpop.f32.mrb[0].mxu0
    %v2752 = vpop.f32.mrb[0].mxu0
    %v2753 = vadd.f32 0.0, %v2752
    %v2754 = vpop.f32.mrb[0].mxu0
    %2755 = vdwg.mxu0
    %v2756 = vpack.c.bf16 %v2737, %v2734
    %v2757 = vld [vmem:[#allocation2 + $0x3c8] sm:$0xff]
    %v2758 = vpack.c.bf16 %v2757, %v2757
    %v2759 = vpack.c.bf16 %v2745, %v2742
    %v2760 = vld [vmem:[#allocation2 + $0x3d0] sm:$0xff]
    %v2761 = vpack.c.bf16 %v2760, %v2760
    %v2763 = vsel %vm243, %v2759, 0
    %v2766 = vsel %vm250, %v2761, 0
    %2768 = vmatprep.subr.bf16.mxu0 0
    %2769 = vmatpush1.bf16.msra.mxu0 %v2766
    %2770 = vmatprep.subr.bf16.mxu0 0
    %2771 = vmatpush1.bf16.msra.mxu0 0
    %2772 = vmatprep.subr.bf16.mxu0 0
    %2773 = vmatpush1.bf16.msra.mxu0 0
    %2774 = vmatprep.subr.bf16.mxu0 0
    %2775 = vmatpush1.bf16.msra.mxu0 0
    %2776 = vmatprep.subr.bf16.mxu0 0
    %2777 = vmatpush1.bf16.msra.mxu0 0
    %2778 = vmatprep.subr.bf16.mxu0 0
    %2779 = vmatpush1.bf16.msra.mxu0 0
    %2780 = vmatprep.subr.bf16.mxu0 0
    %2781 = vmatpush1.bf16.msra.mxu0 0
    %2782 = vmatprep.subr.bf16.mxu0 0
    %2783 = vmatpush1.bf16.msra.mxu0 0
    %2784 = vmatprep.subr.bf16.mxu0 0
    %2785 = vmatpush1.bf16.msra.mxu0 0
    %2786 = vmatprep.subr.bf16.mxu0 0
    %2787 = vmatpush1.bf16.msra.mxu0 0
    %2788 = vmatprep.subr.bf16.mxu0 0
    %2789 = vmatpush1.bf16.msra.mxu0 0
    %2790 = vmatprep.subr.bf16.mxu0 0
    %2791 = vmatpush1.bf16.msra.mxu0 0
    %2792 = vmatprep.subr.bf16.mxu0 0
    %2793 = vmatpush1.bf16.msra.mxu0 0
    %2794 = vmatprep.subr.bf16.mxu0 0
    %2795 = vmatpush1.bf16.msra.mxu0 0
    %2796 = vmatprep.subr.bf16.mxu0 0
    %2797 = vmatpush1.bf16.msra.mxu0 0
    %2798 = vmatprep.subr.bf16.mxu0 0
    %2799 = vmatpush1.bf16.msra.mxu0 0
    %2800 = vmatprep.mubr.bf16.mxu0 0
    %2801 = vmatmul.mubr.bf16.gmra.mrb[0].mxu0 %v2763
    %v2802 = vpop.f32.mrb[0].mxu0
    %v2803 = vadd.f32 0.0, %v2802
    %v2804 = vpop.f32.mrb[0].mxu0
    %v2805 = vpop.f32.mrb[0].mxu0
    %v2806 = vadd.f32 0.0, %v2805
    %v2807 = vpop.f32.mrb[0].mxu0
    %2808 = vdwg.mxu0
    %v2810 = vsel %vm243, %v2756, 0
    %v2813 = vsel %vm250, %v2758, 0
    %2815 = vmatprep.subr.bf16.mxu0 0
    %2816 = vmatpush1.bf16.msra.mxu0 %v2813
    %2817 = vmatprep.subr.bf16.mxu0 0
    %2818 = vmatpush1.bf16.msra.mxu0 0
    %2819 = vmatprep.subr.bf16.mxu0 0
    %2820 = vmatpush1.bf16.msra.mxu0 0
    %2821 = vmatprep.subr.bf16.mxu0 0
    %2822 = vmatpush1.bf16.msra.mxu0 0
    %2823 = vmatprep.subr.bf16.mxu0 0
    %2824 = vmatpush1.bf16.msra.mxu0 0
    %2825 = vmatprep.subr.bf16.mxu0 0
    %2826 = vmatpush1.bf16.msra.mxu0 0
    %2827 = vmatprep.subr.bf16.mxu0 0
    %2828 = vmatpush1.bf16.msra.mxu0 0
    %2829 = vmatprep.subr.bf16.mxu0 0
    %2830 = vmatpush1.bf16.msra.mxu0 0
    %2831 = vmatprep.subr.bf16.mxu0 0
    %2832 = vmatpush1.bf16.msra.mxu0 0
    %2833 = vmatprep.subr.bf16.mxu0 0
    %2834 = vmatpush1.bf16.msra.mxu0 0
    %2835 = vmatprep.subr.bf16.mxu0 0
    %2836 = vmatpush1.bf16.msra.mxu0 0
    %2837 = vmatprep.subr.bf16.mxu0 0
    %2838 = vmatpush1.bf16.msra.mxu0 0
    %2839 = vmatprep.subr.bf16.mxu0 0
    %2840 = vmatpush1.bf16.msra.mxu0 0
    %2841 = vmatprep.subr.bf16.mxu0 0
    %2842 = vmatpush1.bf16.msra.mxu0 0
    %2843 = vmatprep.subr.bf16.mxu0 0
    %2844 = vmatpush1.bf16.msra.mxu0 0
    %2845 = vmatprep.subr.bf16.mxu0 0
    %2846 = vmatpush1.bf16.msra.mxu0 0
    %2847 = vmatprep.mubr.bf16.mxu0 0
    %2848 = vmatmul.mubr.bf16.gmra.mrb[0].mxu0 %v2810
    %v2849 = vpop.f32.mrb[0].mxu0
    %v2850 = vadd.f32 %v2803, %v2849
    %v2851 = vpop.f32.mrb[0].mxu0
    %v2852 = vpop.f32.mrb[0].mxu0
    %v2853 = vadd.f32 %v2806, %v2852
    %v2854 = vpop.f32.mrb[0].mxu0
    %2855 = vdwg.mxu0
    %v2856 = vpack.c.bf16 %v2753, %v2750
    %v2857 = vld [vmem:[#allocation2 + $0x3d8] sm:$0xff]
    %v2858 = vpack.c.bf16 %v2857, %v2857
    %v2860 = vsel %vm243, %v2856, 0
    %v2863 = vsel %vm250, %v2858, 0
    %2865 = vmatprep.subr.bf16.mxu0 0
    %2866 = vmatpush1.bf16.msra.mxu0 %v2863
    %2867 = vmatprep.subr.bf16.mxu0 0
    %2868 = vmatpush1.bf16.msra.mxu0 0
    %2869 = vmatprep.subr.bf16.mxu0 0
    %2870 = vmatpush1.bf16.msra.mxu0 0
    %2871 = vmatprep.subr.bf16.mxu0 0
    %2872 = vmatpush1.bf16.msra.mxu0 0
    %2873 = vmatprep.subr.bf16.mxu0 0
    %2874 = vmatpush1.bf16.msra.mxu0 0
    %2875 = vmatprep.subr.bf16.mxu0 0
    %2876 = vmatpush1.bf16.msra.mxu0 0
    %2877 = vmatprep.subr.bf16.mxu0 0
    %2878 = vmatpush1.bf16.msra.mxu0 0
    %2879 = vmatprep.subr.bf16.mxu0 0
    %2880 = vmatpush1.bf16.msra.mxu0 0
    %2881 = vmatprep.subr.bf16.mxu0 0
    %2882 = vmatpush1.bf16.msra.mxu0 0
    %2883 = vmatprep.subr.bf16.mxu0 0
    %2884 = vmatpush1.bf16.msra.mxu0 0
    %2885 = vmatprep.subr.bf16.mxu0 0
    %2886 = vmatpush1.bf16.msra.mxu0 0
    %2887 = vmatprep.subr.bf16.mxu0 0
    %2888 = vmatpush1.bf16.msra.mxu0 0
    %2889 = vmatprep.subr.bf16.mxu0 0
    %2890 = vmatpush1.bf16.msra.mxu0 0
    %2891 = vmatprep.subr.bf16.mxu0 0
    %2892 = vmatpush1.bf16.msra.mxu0 0
    %2893 = vmatprep.subr.bf16.mxu0 0
    %2894 = vmatpush1.bf16.msra.mxu0 0
    %2895 = vmatprep.subr.bf16.mxu0 0
    %2896 = vmatpush1.bf16.msra.mxu0 0
    %2897 = vmatprep.mubr.bf16.mxu0 0
    %2898 = vmatmul.mubr.bf16.gmra.mrb[0].mxu0 %v2860
    %v2899 = vpop.f32.mrb[0].mxu0
    %v2900 = vadd.f32 0.0, %v2899
    %v2901 = vpop.f32.mrb[0].mxu0
    %v2902 = vpop.f32.mrb[0].mxu0
    %v2903 = vadd.f32 0.0, %v2902
    %v2904 = vpop.f32.mrb[0].mxu0
    %2905 = vdwg.mxu0
    %v2906 = vadd.f32 %v2850, %v2900
    %v2907 = vadd.f32 %v2853, %v2903
    %v2908 = vld [vmem:[#allocation2 + $0x410] sm:$0xff]
    %v2909 = vld [vmem:[#allocation2 + $0x418] sm:$0xff]
    %v2910 = vld [vmem:[#allocation2 + $0x420] sm:$0xff]
    %v2911 = vld [vmem:[#allocation2 + $0x428] sm:$0xff]
    %v2912 = vsel %vm243, %v2906, 0.0
    %2913 = vadd.xlane.f32.xlu0 %v2912
    %v2914 = vpop.xlane.xlu0 %2913
    %v2915 = vsel %vm243, %v2907, 0.0
    %2916 = vadd.xlane.f32.xlu0 %v2915
    %v2917 = vpop.xlane.xlu0 %2916
    %v2918 = vmul.f32 %v2914, %v2633
    %v2919 = vmul.f32 %v2917, %v2633
    %v2920 = vsub.f32 %v2906, %v2918
    %v2921 = vsub.f32 %v2907, %v2919
    %v2922 = vmul.f32 %v2920, %v2920
    %v2923 = vmul.f32 %v2921, %v2921
    %v2924 = vsel %vm243, %v2922, 0.0
    %2925 = vadd.xlane.f32.xlu0 %v2924
    %v2926 = vpop.xlane.xlu0 %2925
    %v2927 = vsel %vm243, %v2923, 0.0
    %2928 = vadd.xlane.f32.xlu0 %v2927
    %v2929 = vpop.xlane.xlu0 %2928
    %v2930 = vmul.f32 %v2926, %v2633
    %v2931 = vmul.f32 %v2929, %v2633
    %v2932 = vadd.f32 %v2930, 1e-05
    %v2933 = vadd.f32 %v2931, 1e-05
    %v2934 = vrsqrt.pop %v2932
    %v2935 = vrsqrt.pop %v2933
    %v2936 = vmul.f32 %v2908, %v2934
    %v2937 = vmul.f32 %v2909, %v2935
    %2939 = vset.pattern.permute.xlu0 0
    %2940 = vperm.xlu0 %2939, %v2936
    %v2941 = vpop.permute.xlu0 %2940
    %2944 = vset.pattern.permute.xlu0 0
    %2945 = vperm.xlu0 %2944, %v2937
    %v2946 = vpop.permute.xlu0 %2945
    %v2948 = vmul.f32 %v2920, %v2941
    %v2949 = vmul.f32 %v2921, %v2946
    %2951 = vset.pattern.permute.xlu0 0
    %2952 = vperm.xlu0 %2951, %v2910
    %v2953 = vpop.permute.xlu0 %2952
    %2956 = vset.pattern.permute.xlu0 0
    %2957 = vperm.xlu0 %2956, %v2911
    %v2958 = vpop.permute.xlu0 %2957
    %v2960 = vadd.f32 %v2948, %v2953
    %v2961 = vadd.f32 %v2949, %v2958
    %v2962 = vld [vmem:[#allocation2 + $0x440] sm:$0xff]
    %v2963 = vld [vmem:[#allocation2 + $0x448] sm:$0xff]
    %v2964 = vpack.c.bf16 %v2963, %v2962
    %v2966 = vsel %vm1375, %v2964, 0
    %2968 = vmatprep.subr.bf16.mxu0 0
    %2969 = vmatpush1.bf16.msra.mxu0 %v2410
    %2970 = vmatprep.subr.bf16.mxu0 0
    %2971 = vmatpush1.bf16.msra.mxu0 0
    %2972 = vmatprep.subr.bf16.mxu0 0
    %2973 = vmatpush1.bf16.msra.mxu0 0
    %2974 = vmatprep.subr.bf16.mxu0 0
    %2975 = vmatpush1.bf16.msra.mxu0 0
    %2976 = vmatprep.subr.bf16.mxu0 0
    %2977 = vmatpush1.bf16.msra.mxu0 0
    %2978 = vmatprep.subr.bf16.mxu0 0
    %2979 = vmatpush1.bf16.msra.mxu0 0
    %2980 = vmatprep.subr.bf16.mxu0 0
    %2981 = vmatpush1.bf16.msra.mxu0 0
    %2982 = vmatprep.subr.bf16.mxu0 0
    %2983 = vmatpush1.bf16.msra.mxu0 0
    %2984 = vmatprep.subr.bf16.mxu0 0
    %2985 = vmatpush1.bf16.msra.mxu0 0
    %2986 = vmatprep.subr.bf16.mxu0 0
    %2987 = vmatpush1.bf16.msra.mxu0 0
    %2988 = vmatprep.subr.bf16.mxu0 0
    %2989 = vmatpush1.bf16.msra.mxu0 0
    %2990 = vmatprep.subr.bf16.mxu0 0
    %2991 = vmatpush1.bf16.msra.mxu0 0
    %2992 = vmatprep.subr.bf16.mxu0 0
    %2993 = vmatpush1.bf16.msra.mxu0 0
    %2994 = vmatprep.subr.bf16.mxu0 0
    %2995 = vmatpush1.bf16.msra.mxu0 0
    %2996 = vmatprep.subr.bf16.mxu0 0
    %2997 = vmatpush1.bf16.msra.mxu0 0
    %2998 = vmatprep.subr.bf16.mxu0 0
    %2999 = vmatpush1.bf16.msra.mxu0 0
    %3000 = vmatprep.mubr.bf16.mxu0 0
    %3001 = vmatmul.mubr.bf16.gmra.mrb[0].mxu0 %v2966
    %v3002 = vpop.f32.mrb[0].mxu0
    %v3003 = vadd.f32 0.0, %v3002
    %v3004 = vpop.f32.mrb[0].mxu0
    %v3005 = vpop.f32.mrb[0].mxu0
    %v3006 = vadd.f32 0.0, %v3005
    %v3007 = vpop.f32.mrb[0].mxu0
    %3008 = vdwg.mxu0
    %v3009 = vpack.c.bf16 %v3006, %v3003
    %v3010 = vld [vmem:[#allocation2 + $0x430] sm:$0xff]
    %v3011 = vld [vmem:[#allocation2 + $0x438] sm:$0xff]
    %v3012 = vpack.c.bf16 %v3011, %v3010
    %v3014 = vsel %vm1375, %v3009, 0
    %3016 = vmatprep.subr.bf16.mxu0 0
    %3017 = vmatpush1.bf16.msra.mxu0 %v3012
    %3018 = vmatprep.subr.bf16.mxu0 0
    %3019 = vmatpush1.bf16.msra.mxu0 0
    %3020 = vmatprep.subr.bf16.mxu0 0
    %3021 = vmatpush1.bf16.msra.mxu0 0
    %3022 = vmatprep.subr.bf16.mxu0 0
    %3023 = vmatpush1.bf16.msra.mxu0 0
    %3024 = vmatprep.subr.bf16.mxu0 0
    %3025 = vmatpush1.bf16.msra.mxu0 0
    %3026 = vmatprep.subr.bf16.mxu0 0
    %3027 = vmatpush1.bf16.msra.mxu0 0
    %3028 = vmatprep.subr.bf16.mxu0 0
    %3029 = vmatpush1.bf16.msra.mxu0 0
    %3030 = vmatprep.subr.bf16.mxu0 0
    %3031 = vmatpush1.bf16.msra.mxu0 0
    %3032 = vmatprep.subr.bf16.mxu0 0
    %3033 = vmatpush1.bf16.msra.mxu0 0
    %3034 = vmatprep.subr.bf16.mxu0 0
    %3035 = vmatpush1.bf16.msra.mxu0 0
    %3036 = vmatprep.subr.bf16.mxu0 0
    %3037 = vmatpush1.bf16.msra.mxu0 0
    %3038 = vmatprep.subr.bf16.mxu0 0
    %3039 = vmatpush1.bf16.msra.mxu0 0
    %3040 = vmatprep.subr.bf16.mxu0 0
    %3041 = vmatpush1.bf16.msra.mxu0 0
    %3042 = vmatprep.subr.bf16.mxu0 0
    %3043 = vmatpush1.bf16.msra.mxu0 0
    %3044 = vmatprep.subr.bf16.mxu0 0
    %3045 = vmatpush1.bf16.msra.mxu0 0
    %3046 = vmatprep.subr.bf16.mxu0 0
    %3047 = vmatpush1.bf16.msra.mxu0 0
    %3048 = vmatprep.mubr.bf16.mxu0 0
    %3049 = vmatmul.mubr.bf16.gmra.mrb[0].mxu0 %v3014
    %v3050 = vpop.f32.mrb[0].mxu0
    %v3051 = vadd.f32 0.0, %v3050
    %v3052 = vpop.f32.mrb[0].mxu0
    %v3053 = vpop.f32.mrb[0].mxu0
    %v3054 = vadd.f32 0.0, %v3053
    %v3055 = vpop.f32.mrb[0].mxu0
    %3056 = vdwg.mxu0
    %v3057 = vld [vmem:[#allocation2 + $0x450] sm:$0xff]
    %v3058 = vld [vmem:[#allocation2 + $0x458] sm:$0xff]
    %v3059 = vld [vmem:[#allocation2 + $0x460] sm:$0xff]
    %v3060 = vld [vmem:[#allocation2 + $0x468] sm:$0xff]
    %v3061 = vsel %vm243, %v3051, 0.0
    %3062 = vadd.xlane.f32.xlu0 %v3061
    %v3063 = vpop.xlane.xlu0 %3062
    %v3064 = vsel %vm243, %v3054, 0.0
    %3065 = vadd.xlane.f32.xlu0 %v3064
    %v3066 = vpop.xlane.xlu0 %3065
    %v3067 = vmul.f32 %v3063, %v2633
    %v3068 = vmul.f32 %v3066, %v2633
    %v3069 = vsub.f32 %v3051, %v3067
    %v3070 = vsub.f32 %v3054, %v3068
    %v3071 = vmul.f32 %v3069, %v3069
    %v3072 = vmul.f32 %v3070, %v3070
    %v3073 = vsel %vm243, %v3071, 0.0
    %3074 = vadd.xlane.f32.xlu0 %v3073
    %v3075 = vpop.xlane.xlu0 %3074
    %v3076 = vsel %vm243, %v3072, 0.0
    %3077 = vadd.xlane.f32.xlu0 %v3076
    %v3078 = vpop.xlane.xlu0 %3077
    %v3079 = vmul.f32 %v3075, %v2633
    %v3080 = vmul.f32 %v3078, %v2633
    %v3081 = vadd.f32 %v3079, 1e-05
    %v3082 = vadd.f32 %v3080, 1e-05
    %v3083 = vrsqrt.pop %v3081
    %v3084 = vrsqrt.pop %v3082
    %v3085 = vmul.f32 %v3057, %v3083
    %v3086 = vmul.f32 %v3058, %v3084
    %3088 = vset.pattern.permute.xlu0 0
    %3089 = vperm.xlu0 %3088, %v3085
    %v3090 = vpop.permute.xlu0 %3089
    %3093 = vset.pattern.permute.xlu0 0
    %3094 = vperm.xlu0 %3093, %v3086
    %v3095 = vpop.permute.xlu0 %3094
    %v3097 = vmul.f32 %v3069, %v3090
    %v3098 = vmul.f32 %v3070, %v3095
    %3100 = vset.pattern.permute.xlu0 0
    %3101 = vperm.xlu0 %3100, %v3059
    %v3102 = vpop.permute.xlu0 %3101
    %3105 = vset.pattern.permute.xlu0 0
    %3106 = vperm.xlu0 %3105, %v3060
    %v3107 = vpop.permute.xlu0 %3106
    %v3109 = vadd.f32 %v3097, %v3102
    %v3110 = vadd.f32 %v3098, %v3107
    %v3111 = vadd.f32 %v2960, %v3109
    %v3112 = vadd.f32 %v2961, %v3110
    %v3113 = vmax.f32 %v3111, 0.0
    %v3114 = vmax.f32 %v3112, 0.0
    %v3115 = vld [vmem:[#allocation2 + $0x470] sm:$0xff]
    %v3116 = vld [vmem:[#allocation2 + $0x478] sm:$0xff]
    %v3117 = vld [vmem:[#allocation2 + $0x480] sm:$0xff]
    %v3118 = vld [vmem:[#allocation2 + $0x488] sm:$0xff]
    %v3119 = vld [vmem:[#allocation2 + $0x490] sm:$0xff]
    %v3120 = vld [vmem:[#allocation2 + $0x498] sm:$0xff]
    %v3121 = vpack.c.bf16 %v3116, %v3115
    %v3122 = vpack.c.bf16 %v3118, %v3117
    %v3123 = vpack.c.bf16 %v3120, %v3119
    %v3124 = vpack.c.bf16 %v3114, %v3113
    %v3126 = vsel %vm1375, %v3121, 0
    %v3129 = vsel %vm1375, %v3122, 0
    %v3132 = vsel %vm1375, %v3123, 0
    %3134 = vmatprep.subr.bf16.mxu0 0
    %3135 = vmatpush1.bf16.msra.mxu0 %v3124
    %3136 = vmatprep.subr.bf16.mxu0 0
    %3137 = vmatpush1.bf16.msra.mxu0 0
    %3138 = vmatprep.subr.bf16.mxu0 0
    %3139 = vmatpush1.bf16.msra.mxu0 0
    %3140 = vmatprep.subr.bf16.mxu0 0
    %3141 = vmatpush1.bf16.msra.mxu0 0
    %3142 = vmatprep.subr.bf16.mxu0 0
    %3143 = vmatpush1.bf16.msra.mxu0 0
    %3144 = vmatprep.subr.bf16.mxu0 0
    %3145 = vmatpush1.bf16.msra.mxu0 0
    %3146 = vmatprep.subr.bf16.mxu0 0
    %3147 = vmatpush1.bf16.msra.mxu0 0
    %3148 = vmatprep.subr.bf16.mxu0 0
    %3149 = vmatpush1.bf16.msra.mxu0 0
    %3150 = vmatprep.subr.bf16.mxu0 0
    %3151 = vmatpush1.bf16.msra.mxu0 0
    %3152 = vmatprep.subr.bf16.mxu0 0
    %3153 = vmatpush1.bf16.msra.mxu0 0
    %3154 = vmatprep.subr.bf16.mxu0 0
    %3155 = vmatpush1.bf16.msra.mxu0 0
    %3156 = vmatprep.subr.bf16.mxu0 0
    %3157 = vmatpush1.bf16.msra.mxu0 0
    %3158 = vmatprep.subr.bf16.mxu0 0
    %3159 = vmatpush1.bf16.msra.mxu0 0
    %3160 = vmatprep.subr.bf16.mxu0 0
    %3161 = vmatpush1.bf16.msra.mxu0 0
    %3162 = vmatprep.subr.bf16.mxu0 0
    %3163 = vmatpush1.bf16.msra.mxu0 0
    %3164 = vmatprep.subr.bf16.mxu0 0
    %3165 = vmatpush1.bf16.msra.mxu0 0
    %3166 = vmatprep.mubr.bf16.mxu0 0
    %3167 = vmatmul.mubr.bf16.gmra.mrb[0].mxu0 %v3126
    %v3168 = vpop.f32.mrb[0].mxu0
    %v3169 = vadd.f32 0.0, %v3168
    %v3170 = vpop.f32.mrb[0].mxu0
    %v3171 = vpop.f32.mrb[0].mxu0
    %v3172 = vadd.f32 0.0, %v3171
    %v3173 = vpop.f32.mrb[0].mxu0
    %3174 = vmatprep.mubr.bf16.mxu0 0
    %3175 = vmatmul.mubr.bf16.gmra.mrb[0].mxu0 %v3129
    %v3176 = vpop.f32.mrb[0].mxu0
    %v3177 = vadd.f32 0.0, %v3176
    %v3178 = vpop.f32.mrb[0].mxu0
    %v3179 = vpop.f32.mrb[0].mxu0
    %v3180 = vadd.f32 0.0, %v3179
    %v3181 = vpop.f32.mrb[0].mxu0
    %3182 = vmatprep.mubr.bf16.mxu0 0
    %3183 = vmatmul.mubr.bf16.gmra.mrb[0].mxu0 %v3132
    %v3184 = vpop.f32.mrb[0].mxu0
    %v3185 = vadd.f32 0.0, %v3184
    %v3186 = vpop.f32.mrb[0].mxu0
    %v3187 = vpop.f32.mrb[0].mxu0
    %v3188 = vadd.f32 0.0, %v3187
    %v3189 = vpop.f32.mrb[0].mxu0
    %3190 = vdwg.mxu0
    %v3191 = vpack.c.bf16 %v3172, %v3169
    %v3192 = vpack.c.bf16 %v3180, %v3177
    %v3194 = vsel %vm243, %v3192, 0
    %3196 = vmatprep.subr.bf16.mxu0 0
    %3197 = vmatpush1.bf16.msra.mxu0 %v2766
    %3198 = vmatprep.subr.bf16.mxu0 0
    %3199 = vmatpush1.bf16.msra.mxu0 0
    %3200 = vmatprep.subr.bf16.mxu0 0
    %3201 = vmatpush1.bf16.msra.mxu0 0
    %3202 = vmatprep.subr.bf16.mxu0 0
    %3203 = vmatpush1.bf16.msra.mxu0 0
    %3204 = vmatprep.subr.bf16.mxu0 0
    %3205 = vmatpush1.bf16.msra.mxu0 0
    %3206 = vmatprep.subr.bf16.mxu0 0
    %3207 = vmatpush1.bf16.msra.mxu0 0
    %3208 = vmatprep.subr.bf16.mxu0 0
    %3209 = vmatpush1.bf16.msra.mxu0 0
    %3210 = vmatprep.subr.bf16.mxu0 0
    %3211 = vmatpush1.bf16.msra.mxu0 0
    %3212 = vmatprep.subr.bf16.mxu0 0
    %3213 = vmatpush1.bf16.msra.mxu0 0
    %3214 = vmatprep.subr.bf16.mxu0 0
    %3215 = vmatpush1.bf16.msra.mxu0 0
    %3216 = vmatprep.subr.bf16.mxu0 0
    %3217 = vmatpush1.bf16.msra.mxu0 0
    %3218 = vmatprep.subr.bf16.mxu0 0
    %3219 = vmatpush1.bf16.msra.mxu0 0
    %3220 = vmatprep.subr.bf16.mxu0 0
    %3221 = vmatpush1.bf16.msra.mxu0 0
    %3222 = vmatprep.subr.bf16.mxu0 0
    %3223 = vmatpush1.bf16.msra.mxu0 0
    %3224 = vmatprep.subr.bf16.mxu0 0
    %3225 = vmatpush1.bf16.msra.mxu0 0
    %3226 = vmatprep.subr.bf16.mxu0 0
    %3227 = vmatpush1.bf16.msra.mxu0 0
    %3228 = vmatprep.mubr.bf16.mxu0 0
    %3229 = vmatmul.mubr.bf16.gmra.mrb[0].mxu0 %v3194
    %v3230 = vpop.f32.mrb[0].mxu0
    %v3231 = vadd.f32 0.0, %v3230
    %v3232 = vpop.f32.mrb[0].mxu0
    %v3233 = vpop.f32.mrb[0].mxu0
    %v3234 = vadd.f32 0.0, %v3233
    %v3235 = vpop.f32.mrb[0].mxu0
    %3236 = vdwg.mxu0
    %v3238 = vsel %vm243, %v3191, 0
    %3240 = vmatprep.subr.bf16.mxu0 0
    %3241 = vmatpush1.bf16.msra.mxu0 %v2813
    %3242 = vmatprep.subr.bf16.mxu0 0
    %3243 = vmatpush1.bf16.msra.mxu0 0
    %3244 = vmatprep.subr.bf16.mxu0 0
    %3245 = vmatpush1.bf16.msra.mxu0 0
    %3246 = vmatprep.subr.bf16.mxu0 0
    %3247 = vmatpush1.bf16.msra.mxu0 0
    %3248 = vmatprep.subr.bf16.mxu0 0
    %3249 = vmatpush1.bf16.msra.mxu0 0
    %3250 = vmatprep.subr.bf16.mxu0 0
    %3251 = vmatpush1.bf16.msra.mxu0 0
    %3252 = vmatprep.subr.bf16.mxu0 0
    %3253 = vmatpush1.bf16.msra.mxu0 0
    %3254 = vmatprep.subr.bf16.mxu0 0
    %3255 = vmatpush1.bf16.msra.mxu0 0
    %3256 = vmatprep.subr.bf16.mxu0 0
    %3257 = vmatpush1.bf16.msra.mxu0 0
    %3258 = vmatprep.subr.bf16.mxu0 0
    %3259 = vmatpush1.bf16.msra.mxu0 0
    %3260 = vmatprep.subr.bf16.mxu0 0
    %3261 = vmatpush1.bf16.msra.mxu0 0
    %3262 = vmatprep.subr.bf16.mxu0 0
    %3263 = vmatpush1.bf16.msra.mxu0 0
    %3264 = vmatprep.subr.bf16.mxu0 0
    %3265 = vmatpush1.bf16.msra.mxu0 0
    %3266 = vmatprep.subr.bf16.mxu0 0
    %3267 = vmatpush1.bf16.msra.mxu0 0
    %3268 = vmatprep.subr.bf16.mxu0 0
    %3269 = vmatpush1.bf16.msra.mxu0 0
    %3270 = vmatprep.subr.bf16.mxu0 0
    %3271 = vmatpush1.bf16.msra.mxu0 0
    %3272 = vmatprep.mubr.bf16.mxu0 0
    %3273 = vmatmul.mubr.bf16.gmra.mrb[0].mxu0 %v3238
    %v3274 = vpop.f32.mrb[0].mxu0
    %v3275 = vadd.f32 %v3231, %v3274
    %v3276 = vpop.f32.mrb[0].mxu0
    %v3277 = vpop.f32.mrb[0].mxu0
    %v3278 = vadd.f32 %v3234, %v3277
    %v3279 = vpop.f32.mrb[0].mxu0
    %3280 = vdwg.mxu0
    %v3281 = vpack.c.bf16 %v3188, %v3185
    %v3283 = vsel %vm243, %v3281, 0
    %3285 = vmatprep.subr.bf16.mxu0 0
    %3286 = vmatpush1.bf16.msra.mxu0 %v2863
    %3287 = vmatprep.subr.bf16.mxu0 0
    %3288 = vmatpush1.bf16.msra.mxu0 0
    %3289 = vmatprep.subr.bf16.mxu0 0
    %3290 = vmatpush1.bf16.msra.mxu0 0
    %3291 = vmatprep.subr.bf16.mxu0 0
    %3292 = vmatpush1.bf16.msra.mxu0 0
    %3293 = vmatprep.subr.bf16.mxu0 0
    %3294 = vmatpush1.bf16.msra.mxu0 0
    %3295 = vmatprep.subr.bf16.mxu0 0
    %3296 = vmatpush1.bf16.msra.mxu0 0
    %3297 = vmatprep.subr.bf16.mxu0 0
    %3298 = vmatpush1.bf16.msra.mxu0 0
    %3299 = vmatprep.subr.bf16.mxu0 0
    %3300 = vmatpush1.bf16.msra.mxu0 0
    %3301 = vmatprep.subr.bf16.mxu0 0
    %3302 = vmatpush1.bf16.msra.mxu0 0
    %3303 = vmatprep.subr.bf16.mxu0 0
    %3304 = vmatpush1.bf16.msra.mxu0 0
    %3305 = vmatprep.subr.bf16.mxu0 0
    %3306 = vmatpush1.bf16.msra.mxu0 0
    %3307 = vmatprep.subr.bf16.mxu0 0
    %3308 = vmatpush1.bf16.msra.mxu0 0
    %3309 = vmatprep.subr.bf16.mxu0 0
    %3310 = vmatpush1.bf16.msra.mxu0 0
    %3311 = vmatprep.subr.bf16.mxu0 0
    %3312 = vmatpush1.bf16.msra.mxu0 0
    %3313 = vmatprep.subr.bf16.mxu0 0
    %3314 = vmatpush1.bf16.msra.mxu0 0
    %3315 = vmatprep.subr.bf16.mxu0 0
    %3316 = vmatpush1.bf16.msra.mxu0 0
    %3317 = vmatprep.mubr.bf16.mxu0 0
    %3318 = vmatmul.mubr.bf16.gmra.mrb[0].mxu0 %v3283
    %v3319 = vpop.f32.mrb[0].mxu0
    %v3320 = vadd.f32 0.0, %v3319
    %v3321 = vpop.f32.mrb[0].mxu0
    %v3322 = vpop.f32.mrb[0].mxu0
    %v3323 = vadd.f32 0.0, %v3322
    %v3324 = vpop.f32.mrb[0].mxu0
    %3325 = vdwg.mxu0
    %v3326 = vadd.f32 %v3275, %v3320
    %v3327 = vadd.f32 %v3278, %v3323
    %v3328 = vld [vmem:[#allocation2 + $0x4a0] sm:$0xff]
    %v3329 = vld [vmem:[#allocation2 + $0x4a8] sm:$0xff]
    %v3330 = vld [vmem:[#allocation2 + $0x4b0] sm:$0xff]
    %v3331 = vld [vmem:[#allocation2 + $0x4b8] sm:$0xff]
    %v3332 = vsel %vm243, %v3326, 0.0
    %3333 = vadd.xlane.f32.xlu0 %v3332
    %v3334 = vpop.xlane.xlu0 %3333
    %v3335 = vsel %vm243, %v3327, 0.0
    %3336 = vadd.xlane.f32.xlu0 %v3335
    %v3337 = vpop.xlane.xlu0 %3336
    %v3338 = vmul.f32 %v3334, %v2633
    %v3339 = vmul.f32 %v3337, %v2633
    %v3340 = vsub.f32 %v3326, %v3338
    %v3341 = vsub.f32 %v3327, %v3339
    %v3342 = vmul.f32 %v3340, %v3340
    %v3343 = vmul.f32 %v3341, %v3341
    %v3344 = vsel %vm243, %v3342, 0.0
    %3345 = vadd.xlane.f32.xlu0 %v3344
    %v3346 = vpop.xlane.xlu0 %3345
    %v3347 = vsel %vm243, %v3343, 0.0
    %3348 = vadd.xlane.f32.xlu0 %v3347
    %v3349 = vpop.xlane.xlu0 %3348
    %v3350 = vmul.f32 %v3346, %v2633
    %v3351 = vmul.f32 %v3349, %v2633
    %v3352 = vadd.f32 %v3350, 1e-05
    %v3353 = vadd.f32 %v3351, 1e-05
    %v3354 = vrsqrt.pop %v3352
    %v3355 = vrsqrt.pop %v3353
    %v3356 = vmul.f32 %v3328, %v3354
    %v3357 = vmul.f32 %v3329, %v3355
    %3359 = vset.pattern.permute.xlu0 0
    %3360 = vperm.xlu0 %3359, %v3356
    %v3361 = vpop.permute.xlu0 %3360
    %3364 = vset.pattern.permute.xlu0 0
    %3365 = vperm.xlu0 %3364, %v3357
    %v3366 = vpop.permute.xlu0 %3365
    %v3368 = vmul.f32 %v3340, %v3361
    %v3369 = vmul.f32 %v3341, %v3366
    %3371 = vset.pattern.permute.xlu0 0
    %3372 = vperm.xlu0 %3371, %v3330
    %v3373 = vpop.permute.xlu0 %3372
    %3376 = vset.pattern.permute.xlu0 0
    %3377 = vperm.xlu0 %3376, %v3331
    %v3378 = vpop.permute.xlu0 %3377
    %v3380 = vadd.f32 %v3368, %v3373
    %v3381 = vadd.f32 %v3369, %v3378
    %v3382 = vmax.f32 %v3380, 0.0
    %v3383 = vmax.f32 %v3381, 0.0
    %v3384 = vld [vmem:[#allocation2 + $0x4c0] sm:$0xff]
    %v3385 = vld [vmem:[#allocation2 + $0x4c8] sm:$0xff]
    %v3386 = vld [vmem:[#allocation2 + $0x4d0] sm:$0xff]
    %v3387 = vld [vmem:[#allocation2 + $0x4d8] sm:$0xff]
    %v3388 = vld [vmem:[#allocation2 + $0x4e0] sm:$0xff]
    %v3389 = vld [vmem:[#allocation2 + $0x4e8] sm:$0xff]
    %v3390 = vpack.c.bf16 %v3385, %v3384
    %v3391 = vpack.c.bf16 %v3387, %v3386
    %v3392 = vpack.c.bf16 %v3389, %v3388
    %v3393 = vpack.c.bf16 %v3383, %v3382
    %v3395 = vsel %vm1375, %v3390, 0
    %v3398 = vsel %vm1375, %v3391, 0
    %v3401 = vsel %vm1375, %v3392, 0
    %3403 = vmatprep.subr.bf16.mxu0 0
    %3404 = vmatpush1.bf16.msra.mxu0 %v3393
    %3405 = vmatprep.subr.bf16.mxu0 0
    %3406 = vmatpush1.bf16.msra.mxu0 0
    %3407 = vmatprep.subr.bf16.mxu0 0
    %3408 = vmatpush1.bf16.msra.mxu0 0
    %3409 = vmatprep.subr.bf16.mxu0 0
    %3410 = vmatpush1.bf16.msra.mxu0 0
    %3411 = vmatprep.subr.bf16.mxu0 0
    %3412 = vmatpush1.bf16.msra.mxu0 0
    %3413 = vmatprep.subr.bf16.mxu0 0
    %3414 = vmatpush1.bf16.msra.mxu0 0
    %3415 = vmatprep.subr.bf16.mxu0 0
    %3416 = vmatpush1.bf16.msra.mxu0 0
    %3417 = vmatprep.subr.bf16.mxu0 0
    %3418 = vmatpush1.bf16.msra.mxu0 0
    %3419 = vmatprep.subr.bf16.mxu0 0
    %3420 = vmatpush1.bf16.msra.mxu0 0
    %3421 = vmatprep.subr.bf16.mxu0 0
    %3422 = vmatpush1.bf16.msra.mxu0 0
    %3423 = vmatprep.subr.bf16.mxu0 0
    %3424 = vmatpush1.bf16.msra.mxu0 0
    %3425 = vmatprep.subr.bf16.mxu0 0
    %3426 = vmatpush1.bf16.msra.mxu0 0
    %3427 = vmatprep.subr.bf16.mxu0 0
    %3428 = vmatpush1.bf16.msra.mxu0 0
    %3429 = vmatprep.subr.bf16.mxu0 0
    %3430 = vmatpush1.bf16.msra.mxu0 0
    %3431 = vmatprep.subr.bf16.mxu0 0
    %3432 = vmatpush1.bf16.msra.mxu0 0
    %3433 = vmatprep.subr.bf16.mxu0 0
    %3434 = vmatpush1.bf16.msra.mxu0 0
    %3435 = vmatprep.mubr.bf16.mxu0 0
    %3436 = vmatmul.mubr.bf16.gmra.mrb[0].mxu0 %v3395
    %v3437 = vpop.f32.mrb[0].mxu0
    %v3438 = vadd.f32 0.0, %v3437
    %v3439 = vpop.f32.mrb[0].mxu0
    %v3440 = vpop.f32.mrb[0].mxu0
    %v3441 = vadd.f32 0.0, %v3440
    %v3442 = vpop.f32.mrb[0].mxu0
    %3443 = vmatprep.mubr.bf16.mxu0 0
    %3444 = vmatmul.mubr.bf16.gmra.mrb[0].mxu0 %v3398
    %v3445 = vpop.f32.mrb[0].mxu0
    %v3446 = vadd.f32 0.0, %v3445
    %v3447 = vpop.f32.mrb[0].mxu0
    %v3448 = vpop.f32.mrb[0].mxu0
    %v3449 = vadd.f32 0.0, %v3448
    %v3450 = vpop.f32.mrb[0].mxu0
    %3451 = vmatprep.mubr.bf16.mxu0 0
    %3452 = vmatmul.mubr.bf16.gmra.mrb[0].mxu0 %v3401
    %v3453 = vpop.f32.mrb[0].mxu0
    %v3454 = vadd.f32 0.0, %v3453
    %v3455 = vpop.f32.mrb[0].mxu0
    %v3456 = vpop.f32.mrb[0].mxu0
    %v3457 = vadd.f32 0.0, %v3456
    %v3458 = vpop.f32.mrb[0].mxu0
    %3459 = vdwg.mxu0
    %v3460 = vpack.c.bf16 %v3441, %v3438
    %v3461 = vpack.c.bf16 %v3449, %v3446
    %v3463 = vsel %vm243, %v3461, 0
    %3465 = vmatprep.subr.bf16.mxu0 0
    %3466 = vmatpush1.bf16.msra.mxu0 %v2766
    %3467 = vmatprep.subr.bf16.mxu0 0
    %3468 = vmatpush1.bf16.msra.mxu0 0
    %3469 = vmatprep.subr.bf16.mxu0 0
    %3470 = vmatpush1.bf16.msra.mxu0 0
    %3471 = vmatprep.subr.bf16.mxu0 0
    %3472 = vmatpush1.bf16.msra.mxu0 0
    %3473 = vmatprep.subr.bf16.mxu0 0
    %3474 = vmatpush1.bf16.msra.mxu0 0
    %3475 = vmatprep.subr.bf16.mxu0 0
    %3476 = vmatpush1.bf16.msra.mxu0 0
    %3477 = vmatprep.subr.bf16.mxu0 0
    %3478 = vmatpush1.bf16.msra.mxu0 0
    %3479 = vmatprep.subr.bf16.mxu0 0
    %3480 = vmatpush1.bf16.msra.mxu0 0
    %3481 = vmatprep.subr.bf16.mxu0 0
    %3482 = vmatpush1.bf16.msra.mxu0 0
    %3483 = vmatprep.subr.bf16.mxu0 0
    %3484 = vmatpush1.bf16.msra.mxu0 0
    %3485 = vmatprep.subr.bf16.mxu0 0
    %3486 = vmatpush1.bf16.msra.mxu0 0
    %3487 = vmatprep.subr.bf16.mxu0 0
    %3488 = vmatpush1.bf16.msra.mxu0 0
    %3489 = vmatprep.subr.bf16.mxu0 0
    %3490 = vmatpush1.bf16.msra.mxu0 0
    %3491 = vmatprep.subr.bf16.mxu0 0
    %3492 = vmatpush1.bf16.msra.mxu0 0
    %3493 = vmatprep.subr.bf16.mxu0 0
    %3494 = vmatpush1.bf16.msra.mxu0 0
    %3495 = vmatprep.subr.bf16.mxu0 0
    %3496 = vmatpush1.bf16.msra.mxu0 0
    %3497 = vmatprep.mubr.bf16.mxu0 0
    %3498 = vmatmul.mubr.bf16.gmra.mrb[0].mxu0 %v3463
    %v3499 = vpop.f32.mrb[0].mxu0
    %v3500 = vadd.f32 0.0, %v3499
    %v3501 = vpop.f32.mrb[0].mxu0
    %v3502 = vpop.f32.mrb[0].mxu0
    %v3503 = vadd.f32 0.0, %v3502
    %v3504 = vpop.f32.mrb[0].mxu0
    %3505 = vdwg.mxu0
    %v3507 = vsel %vm243, %v3460, 0
    %3509 = vmatprep.subr.bf16.mxu0 0
    %3510 = vmatpush1.bf16.msra.mxu0 %v2813
    %3511 = vmatprep.subr.bf16.mxu0 0
    %3512 = vmatpush1.bf16.msra.mxu0 0
    %3513 = vmatprep.subr.bf16.mxu0 0
    %3514 = vmatpush1.bf16.msra.mxu0 0
    %3515 = vmatprep.subr.bf16.mxu0 0
    %3516 = vmatpush1.bf16.msra.mxu0 0
    %3517 = vmatprep.subr.bf16.mxu0 0
    %3518 = vmatpush1.bf16.msra.mxu0 0
    %3519 = vmatprep.subr.bf16.mxu0 0
    %3520 = vmatpush1.bf16.msra.mxu0 0
    %3521 = vmatprep.subr.bf16.mxu0 0
    %3522 = vmatpush1.bf16.msra.mxu0 0
    %3523 = vmatprep.subr.bf16.mxu0 0
    %3524 = vmatpush1.bf16.msra.mxu0 0
    %3525 = vmatprep.subr.bf16.mxu0 0
    %3526 = vmatpush1.bf16.msra.mxu0 0
    %3527 = vmatprep.subr.bf16.mxu0 0
    %3528 = vmatpush1.bf16.msra.mxu0 0
    %3529 = vmatprep.subr.bf16.mxu0 0
    %3530 = vmatpush1.bf16.msra.mxu0 0
    %3531 = vmatprep.subr.bf16.mxu0 0
    %3532 = vmatpush1.bf16.msra.mxu0 0
    %3533 = vmatprep.subr.bf16.mxu0 0
    %3534 = vmatpush1.bf16.msra.mxu0 0
    %3535 = vmatprep.subr.bf16.mxu0 0
    %3536 = vmatpush1.bf16.msra.mxu0 0
    %3537 = vmatprep.subr.bf16.mxu0 0
    %3538 = vmatpush1.bf16.msra.mxu0 0
    %3539 = vmatprep.subr.bf16.mxu0 0
    %3540 = vmatpush1.bf16.msra.mxu0 0
    %3541 = vmatprep.mubr.bf16.mxu0 0
    %3542 = vmatmul.mubr.bf16.gmra.mrb[0].mxu0 %v3507
    %v3543 = vpop.f32.mrb[0].mxu0
    %v3544 = vadd.f32 %v3500, %v3543
    %v3545 = vpop.f32.mrb[0].mxu0
    %v3546 = vpop.f32.mrb[0].mxu0
    %v3547 = vadd.f32 %v3503, %v3546
    %v3548 = vpop.f32.mrb[0].mxu0
    %3549 = vdwg.mxu0
    %v3550 = vpack.c.bf16 %v3457, %v3454
    %v3552 = vsel %vm243, %v3550, 0
    %3554 = vmatprep.subr.bf16.mxu0 0
    %3555 = vmatpush1.bf16.msra.mxu0 %v2863
    %3556 = vmatprep.subr.bf16.mxu0 0
    %3557 = vmatpush1.bf16.msra.mxu0 0
    %3558 = vmatprep.subr.bf16.mxu0 0
    %3559 = vmatpush1.bf16.msra.mxu0 0
    %3560 = vmatprep.subr.bf16.mxu0 0
    %3561 = vmatpush1.bf16.msra.mxu0 0
    %3562 = vmatprep.subr.bf16.mxu0 0
    %3563 = vmatpush1.bf16.msra.mxu0 0
    %3564 = vmatprep.subr.bf16.mxu0 0
    %3565 = vmatpush1.bf16.msra.mxu0 0
    %3566 = vmatprep.subr.bf16.mxu0 0
    %3567 = vmatpush1.bf16.msra.mxu0 0
    %3568 = vmatprep.subr.bf16.mxu0 0
    %3569 = vmatpush1.bf16.msra.mxu0 0
    %3570 = vmatprep.subr.bf16.mxu0 0
    %3571 = vmatpush1.bf16.msra.mxu0 0
    %3572 = vmatprep.subr.bf16.mxu0 0
    %3573 = vmatpush1.bf16.msra.mxu0 0
    %3574 = vmatprep.subr.bf16.mxu0 0
    %3575 = vmatpush1.bf16.msra.mxu0 0
    %3576 = vmatprep.subr.bf16.mxu0 0
    %3577 = vmatpush1.bf16.msra.mxu0 0
    %3578 = vmatprep.subr.bf16.mxu0 0
    %3579 = vmatpush1.bf16.msra.mxu0 0
    %3580 = vmatprep.subr.bf16.mxu0 0
    %3581 = vmatpush1.bf16.msra.mxu0 0
    %3582 = vmatprep.subr.bf16.mxu0 0
    %3583 = vmatpush1.bf16.msra.mxu0 0
    %3584 = vmatprep.subr.bf16.mxu0 0
    %3585 = vmatpush1.bf16.msra.mxu0 0
    %3586 = vmatprep.mubr.bf16.mxu0 0
    %3587 = vmatmul.mubr.bf16.gmra.mrb[0].mxu0 %v3552
    %v3588 = vpop.f32.mrb[0].mxu0
    %v3589 = vadd.f32 0.0, %v3588
    %v3590 = vpop.f32.mrb[0].mxu0
    %v3591 = vpop.f32.mrb[0].mxu0
    %v3592 = vadd.f32 0.0, %v3591
    %v3593 = vpop.f32.mrb[0].mxu0
    %3594 = vdwg.mxu0
    %v3595 = vadd.f32 %v3544, %v3589
    %v3596 = vadd.f32 %v3547, %v3592
    %v3597 = vld [vmem:[#allocation2 + $0x4f0] sm:$0xff]
    %v3598 = vld [vmem:[#allocation2 + $0x4f8] sm:$0xff]
    %v3599 = vld [vmem:[#allocation2 + $0x500] sm:$0xff]
    %v3600 = vld [vmem:[#allocation2 + $0x508] sm:$0xff]
    %v3601 = vsel %vm243, %v3595, 0.0
    %3602 = vadd.xlane.f32.xlu0 %v3601
    %v3603 = vpop.xlane.xlu0 %3602
    %v3604 = vsel %vm243, %v3596, 0.0
    %3605 = vadd.xlane.f32.xlu0 %v3604
    %v3606 = vpop.xlane.xlu0 %3605
    %v3607 = vmul.f32 %v3603, %v2633
    %v3608 = vmul.f32 %v3606, %v2633
    %v3609 = vsub.f32 %v3595, %v3607
    %v3610 = vsub.f32 %v3596, %v3608
    %v3611 = vmul.f32 %v3609, %v3609
    %v3612 = vmul.f32 %v3610, %v3610
    %v3613 = vsel %vm243, %v3611, 0.0
    %3614 = vadd.xlane.f32.xlu0 %v3613
    %v3615 = vpop.xlane.xlu0 %3614
    %v3616 = vsel %vm243, %v3612, 0.0
    %3617 = vadd.xlane.f32.xlu0 %v3616
    %v3618 = vpop.xlane.xlu0 %3617
    %v3619 = vmul.f32 %v3615, %v2633
    %v3620 = vmul.f32 %v3618, %v2633
    %v3621 = vadd.f32 %v3619, 1e-05
    %v3622 = vadd.f32 %v3620, 1e-05
    %v3623 = vrsqrt.pop %v3621
    %v3624 = vrsqrt.pop %v3622
    %v3625 = vmul.f32 %v3597, %v3623
    %v3626 = vmul.f32 %v3598, %v3624
    %3628 = vset.pattern.permute.xlu0 0
    %3629 = vperm.xlu0 %3628, %v3625
    %v3630 = vpop.permute.xlu0 %3629
    %3633 = vset.pattern.permute.xlu0 0
    %3634 = vperm.xlu0 %3633, %v3626
    %v3635 = vpop.permute.xlu0 %3634
    %v3637 = vmul.f32 %v3609, %v3630
    %v3638 = vmul.f32 %v3610, %v3635
    %3640 = vset.pattern.permute.xlu0 0
    %3641 = vperm.xlu0 %3640, %v3599
    %v3642 = vpop.permute.xlu0 %3641
    %3645 = vset.pattern.permute.xlu0 0
    %3646 = vperm.xlu0 %3645, %v3600
    %v3647 = vpop.permute.xlu0 %3646
    %v3649 = vadd.f32 %v3637, %v3642
    %v3650 = vadd.f32 %v3638, %v3647
    %v3651 = vadd.f32 %v3649, %v3113
    %v3652 = vadd.f32 %v3650, %v3114
    %v3653 = vmax.f32 %v3651, 0.0
    %v3654 = vmax.f32 %v3652, 0.0
    %v3655 = vld [vmem:[#allocation2 + $0x518] sm:$0x1]
    %v3656 = vpack.c.bf16 %v3655, %v3655
    %v3657 = vpack.c.bf16 %v3654, %v3653
    %v3659 = vsel %vm1375, %v3656, 0
    %3661 = vmatprep.subr.bf16.mxu0 0
    %3662 = vmatpush1.bf16.msra.mxu0 %v3657
    %3663 = vmatprep.subr.bf16.mxu0 0
    %3664 = vmatpush1.bf16.msra.mxu0 0
    %3665 = vmatprep.subr.bf16.mxu0 0
    %3666 = vmatpush1.bf16.msra.mxu0 0
    %3667 = vmatprep.subr.bf16.mxu0 0
    %3668 = vmatpush1.bf16.msra.mxu0 0
    %3669 = vmatprep.subr.bf16.mxu0 0
    %3670 = vmatpush1.bf16.msra.mxu0 0
    %3671 = vmatprep.subr.bf16.mxu0 0
    %3672 = vmatpush1.bf16.msra.mxu0 0
    %3673 = vmatprep.subr.bf16.mxu0 0
    %3674 = vmatpush1.bf16.msra.mxu0 0
    %3675 = vmatprep.subr.bf16.mxu0 0
    %3676 = vmatpush1.bf16.msra.mxu0 0
    %3677 = vmatprep.subr.bf16.mxu0 0
    %3678 = vmatpush1.bf16.msra.mxu0 0
    %3679 = vmatprep.subr.bf16.mxu0 0
    %3680 = vmatpush1.bf16.msra.mxu0 0
    %3681 = vmatprep.subr.bf16.mxu0 0
    %3682 = vmatpush1.bf16.msra.mxu0 0
    %3683 = vmatprep.subr.bf16.mxu0 0
    %3684 = vmatpush1.bf16.msra.mxu0 0
    %3685 = vmatprep.subr.bf16.mxu0 0
    %3686 = vmatpush1.bf16.msra.mxu0 0
    %3687 = vmatprep.subr.bf16.mxu0 0
    %3688 = vmatpush1.bf16.msra.mxu0 0
    %3689 = vmatprep.subr.bf16.mxu0 0
    %3690 = vmatpush1.bf16.msra.mxu0 0
    %3691 = vmatprep.subr.bf16.mxu0 0
    %3692 = vmatpush1.bf16.msra.mxu0 0
    %3693 = vmatprep.mubr.bf16.mxu0 0
    %3694 = vmatmul.mubr.bf16.gmra.mrb[0].mxu0 %v3659
    %v3695 = vpop.f32.mrb[0].mxu0
    %v3696 = vadd.f32 0.0, %v3695
    %v3697 = vpop.f32.mrb[0].mxu0
    %v3698 = vpop.f32.mrb[0].mxu0
    %v3699 = vpop.f32.mrb[0].mxu0
    %3700 = vdwg.mxu0
    %v3701 = vpack.c.bf16 %v3696, %v3696
    %v3702 = vld [vmem:[#allocation2 + $0x510] sm:$0xff]
    %v3703 = vpack.c.bf16 %v3702, %v3702
    %v3705 = vsel %vm243, %v3701, 0
    %v3708 = vsel %vm250, %v3703, 0
    %3710 = vmatprep.subr.bf16.mxu0 0
    %3711 = vmatpush1.bf16.msra.mxu0 %v3708
    %3712 = vmatprep.subr.bf16.mxu0 0
    %3713 = vmatpush1.bf16.msra.mxu0 0
    %3714 = vmatprep.subr.bf16.mxu0 0
    %3715 = vmatpush1.bf16.msra.mxu0 0
    %3716 = vmatprep.subr.bf16.mxu0 0
    %3717 = vmatpush1.bf16.msra.mxu0 0
    %3718 = vmatprep.subr.bf16.mxu0 0
    %3719 = vmatpush1.bf16.msra.mxu0 0
    %3720 = vmatprep.subr.bf16.mxu0 0
    %3721 = vmatpush1.bf16.msra.mxu0 0
    %3722 = vmatprep.subr.bf16.mxu0 0
    %3723 = vmatpush1.bf16.msra.mxu0 0
    %3724 = vmatprep.subr.bf16.mxu0 0
    %3725 = vmatpush1.bf16.msra.mxu0 0
    %3726 = vmatprep.subr.bf16.mxu0 0
    %3727 = vmatpush1.bf16.msra.mxu0 0
    %3728 = vmatprep.subr.bf16.mxu0 0
    %3729 = vmatpush1.bf16.msra.mxu0 0
    %3730 = vmatprep.subr.bf16.mxu0 0
    %3731 = vmatpush1.bf16.msra.mxu0 0
    %3732 = vmatprep.subr.bf16.mxu0 0
    %3733 = vmatpush1.bf16.msra.mxu0 0
    %3734 = vmatprep.subr.bf16.mxu0 0
    %3735 = vmatpush1.bf16.msra.mxu0 0
    %3736 = vmatprep.subr.bf16.mxu0 0
    %3737 = vmatpush1.bf16.msra.mxu0 0
    %3738 = vmatprep.subr.bf16.mxu0 0
    %3739 = vmatpush1.bf16.msra.mxu0 0
    %3740 = vmatprep.subr.bf16.mxu0 0
    %3741 = vmatpush1.bf16.msra.mxu0 0
    %3742 = vmatprep.mubr.bf16.mxu0 0
    %3743 = vmatmul.mubr.bf16.gmra.mrb[0].mxu0 %v3705
    %v3744 = vpop.f32.mrb[0].mxu0
    %v3745 = vadd.f32 0.0, %v3744
    %v3746 = vpop.f32.mrb[0].mxu0
    %v3747 = vpop.f32.mrb[0].mxu0
    %v3748 = vpop.f32.mrb[0].mxu0
    %3749 = vdwg.mxu0
    %vm3750 = vcmp.ge.f32.partialorder %v3745, 0.0
    %v3751 = vmul.f32 %v3745, 0.01
    %v3752 = vsel %vm3750, %v3745, %v3751
    %vm3753 = vcmask 90112
    %3754 = vst.msk [vmem:[%s2] sm:$0x1] %vm3753, %v3752
    // Predicated region
    $region14: #{_lambda_.1} parent=1 // pred_check
      _
    $region15: #{_lambda_.1} parent=1 // pred_check_branch
      %3756 = sbr.rel (0) target = $region17
    $region16: #{_lambda_.1} parent=1 // pred_region
      _
    $region17: #{_lambda_.1} parent=1 // pred_fallthru
      _
    // Predicated region
    $region18: #{_lambda_.1} parent=1 // pred_check
      _
    $region19: #{_lambda_.1} parent=1 // pred_check_branch
      %3758 = sbr.rel (0) target = $region21
    $region20: #{_lambda_.1} parent=1 // pred_region
      _
    $region21: #{_lambda_.1} parent=1 // pred_fallthru
      _
    %3759 = vsyncpa [#allocation3], 1

</llo_original>
